<compile_context>
chip_gen: v7x
topology: tpu7x:2x2x1
jax: 0.10.0
libtpu: 0.0.40
codegen_flags: <defaults>
</compile_context>

<pallas_src>
import numpy as np
import jax
import jax.numpy as jnp
from jax.experimental import pallas as pl
from jax.experimental.pallas import tpu as pltpu


# ----------------------------------------------------------------------------
# Host-side helpers.
# _bilinear_matrix_np matches F.interpolate(mode='bilinear',
# align_corners=False) with source clamping; its rows sum to 1.
# Because mid_x is only globally average-pooled,
#     mean_s(R @ y) = colmean(R) @ y   and
#     colmean(kron(Rh, Rw)) = outer(colmean(Rh), colmean(Rw)),
# so we never materialise the (S2, S1) Kronecker matrix.
# ----------------------------------------------------------------------------
def _bilinear_matrix_np(out_size, in_size):
    if out_size == in_size:
        return np.eye(in_size, dtype=np.float32)
    i = np.arange(out_size, dtype=np.float64)
    src = (i + 0.5) * in_size / out_size - 0.5
    src = np.clip(src, 0.0, in_size - 1)
    i0 = np.floor(src).astype(np.int64)
    i1 = np.minimum(i0 + 1, in_size - 1)
    w1 = (src - i0).astype(np.float32)
    w0 = 1.0 - w1
    R = np.zeros((out_size, in_size), dtype=np.float32)
    R[np.arange(out_size), i0] += w0
    R[np.arange(out_size), i1] += w1
    return R


def _gap_fold_weights(out_hw, in_hw):
    """(1, in_h*in_w) pooling vector: GAP folded through the bilinear resize."""
    wh = _bilinear_matrix_np(out_hw[0], in_hw[0]).mean(axis=0)   # (in_h,)
    ww = _bilinear_matrix_np(out_hw[1], in_hw[1]).mean(axis=0)   # (in_w,)
    return jnp.asarray(np.outer(wh, ww).reshape(1, -1), dtype=jnp.float32)


# ----------------------------------------------------------------------------
# Fused kernel: both GAP classification heads (with the Aux_x path folded away)
# + all 4 StageAttn heads.  One grid step per batch element ("parallel").
# ----------------------------------------------------------------------------
def _tscd_fused_kernel(wp_ref, bp_ref,
                       x1_ref, x2_ref, x3_ref, x4_ref,
                       w1v_ref, w3v_ref,
                       A1_ref, A2_ref, A3_ref, baux_ref, wcf_ref,
                       a0s0, a1s0, a0s1, a1s1, a0s2, a1s2, a0s3, a1s3,
                       fin_ref, aux_ref, o0_ref, o1_ref, o2_ref, o3_ref):
    f32 = jnp.float32

    # ---- classification heads: GAP folded through resize + all 1x1 convs ----
    # pooled_i = (resize-aware spatial mean of x_i)  -> (1, Ci)
    p1 = jnp.dot(w1v_ref[...], x1_ref[0].astype(f32), preferred_element_type=f32)
    p2 = jnp.mean(x2_ref[0].astype(f32), axis=0, keepdims=True)
    p3 = jnp.dot(w3v_ref[...], x3_ref[0].astype(f32), preferred_element_type=f32)
    p4 = jnp.mean(x4_ref[0].astype(f32), axis=0, keepdims=True)

    aux_ref[0] = (jnp.dot(p1, A1_ref[...], preferred_element_type=f32)
                  + jnp.dot(p2, A2_ref[...], preferred_element_type=f32)
                  + jnp.dot(p3, A3_ref[...], preferred_element_type=f32)
                  + baux_ref[...])
    fin_ref[0] = jnp.dot(p4, wcf_ref[...], preferred_element_type=f32)

    # ---- 4 StageAttn heads (per-head mix weights/biases are SMEM scalars) ----
    a_refs = ((a0s0, a1s0), (a0s1, a1s1), (a0s2, a1s2), (a0s3, a1s3))
    o_refs = (o0_ref, o1_ref, o2_ref, o3_ref)
    off = 0
    for i in range(4):
        a0, a1 = a_refs[i]
        nh = a0.shape[1]
        # wp_ref already holds 0.5 * proj_w (mean over the two attention maps)
        acc = (a0[0, 0].astype(f32) + a1[0, 0].astype(f32)) * wp_ref[off]
        for h in range(1, nh):
            acc = acc + (a0[0, h].astype(f32) + a1[0, h].astype(f32)) * wp_ref[off + h]
        out = acc + acc.T + bp_ref[i]
        # sigmoid = 1 / (1 + exp(-x)): exp + approx reciprocal stay on the EUP
        o_refs[i][0] = pl.reciprocal(1.0 + jnp.exp(-out), approx=True)
        off += nh


def tscd_fused_call(x1f, x2f, x3f, x4f, w1v, w3v, A1, A2, A3, b_aux, wcf,
                    attns, w_half, b_packed):
    B, S1, C1 = x1f.shape
    _, S2, C2 = x2f.shape
    _, S3, C3 = x3f.shape
    _, S4, C4 = x4f.shape
    ncls = wcf.shape[1]
    const2 = lambda b: (0, 0)

    in_specs = [
        pl.BlockSpec(memory_space=pltpu.MemorySpace.SMEM),   # w_half (scalars)
        pl.BlockSpec(memory_space=pltpu.MemorySpace.SMEM),   # b_packed (scalars)
        pl.BlockSpec((1, S1, C1), lambda b: (b, 0, 0)),
        pl.BlockSpec((1, S2, C2), lambda b: (b, 0, 0)),
        pl.BlockSpec((1, S3, C3), lambda b: (b, 0, 0)),
        pl.BlockSpec((1, S4, C4), lambda b: (b, 0, 0)),
        pl.BlockSpec((1, S1), const2),
        pl.BlockSpec((1, S3), const2),
        pl.BlockSpec((C1, ncls), const2),
        pl.BlockSpec((C2, ncls), const2),
        pl.BlockSpec((C3, ncls), const2),
        pl.BlockSpec((1, ncls), const2),
        pl.BlockSpec((C4, ncls), const2),
    ]
    out_shapes = [jax.ShapeDtypeStruct((B, 1, ncls), jnp.float32),
                  jax.ShapeDtypeStruct((B, 1, ncls), jnp.float32)]
    out_specs = [pl.BlockSpec((1, 1, ncls), lambda b: (b, 0, 0)),
                 pl.BlockSpec((1, 1, ncls), lambda b: (b, 0, 0))]

    flops = 2 * B * (S1 * C1 + S2 * C2 + S3 * C3 + S4 * C4
                     + (C1 + C2 + C3 + C4) * ncls)
    trans = 0
    for i in range(4):
        _, nh, N, _ = attns[2 * i].shape
        spec = pl.BlockSpec((1, nh, N, N), lambda b: (b, 0, 0, 0))
        in_specs += [spec, spec]
        out_shapes.append(jax.ShapeDtypeStruct((B, N, N), jnp.float32))
        out_specs.append(pl.BlockSpec((1, N, N), lambda b: (b, 0, 0)))
        flops += B * (4 * nh + 2) * N * N
        trans += B * N * N

    bytes_acc = 0
    for arr in (w_half, b_packed, x1f, x2f, x3f, x4f, w1v, w3v,
                A1, A2, A3, b_aux, wcf, *attns):
        bytes_acc += int(arr.size) * int(arr.dtype.itemsize)
    for s in out_shapes:
        bytes_acc += int(np.prod(s.shape)) * 4

    outs = pl.pallas_call(
        _tscd_fused_kernel,
        out_shape=tuple(out_shapes),
        grid=(B,),
        in_specs=in_specs,
        out_specs=tuple(out_specs),
        compiler_params=pltpu.CompilerParams(dimension_semantics=("parallel",)),
        cost_estimate=pl.CostEstimate(flops=int(flops),
                                      transcendentals=int(trans),
                                      bytes_accessed=int(bytes_acc)),
    )(w_half, b_packed, x1f, x2f, x3f, x4f, w1v, w3v,
      A1, A2, A3, b_aux, wcf, *attns)

    fin, aux = outs[0], outs[1]
    return fin.reshape(B, ncls), aux.reshape(B, ncls), list(outs[2:])


# ----------------------------------------------------------------------------
# TSCD forward (non-encoder / non-decoder parts)
# ----------------------------------------------------------------------------
def tscd_forward(params, x1, x2, x3, x4, attns):
    # NCHW f32 features -> channels-last (B, H*W, C) bf16, cast ONCE at the
    # module boundary (kernel upcasts to f32 right after load; f32 accumulate).
    def to_cl(x):
        b, c, h, w = x.shape
        return jnp.transpose(x, (0, 2, 3, 1)).reshape(b, h * w, c).astype(jnp.bfloat16)

    H2, W2 = x2.shape[2], x2.shape[3]
    x1f, x2f, x3f, x4f = to_cl(x1), to_cl(x2), to_cl(x3), to_cl(x4)

    w1v = _gap_fold_weights((H2, W2), (x1.shape[2], x1.shape[3]))
    w3v = _gap_fold_weights((H2, W2), (x3.shape[2], x3.shape[3]))

    attns_bf = [a.astype(jnp.bfloat16) for a in attns]

    final_x, aux_cls, attn_preds = tscd_fused_call(
        x1f, x2f, x3f, x4f, w1v, w3v,
        params["aux_A1"], params["aux_A2"], params["aux_A3"],
        params["aux_b"], params["cls_w"],
        attns_bf, params["proj_w_half"], params["proj_b_packed"])

    # TODO(synk): SegFormerHead decoder output `segs` is omitted (not provided).
    return final_x, aux_cls, attn_preds


# ----------------------------------------------------------------------------
# Deterministic parameter init + host-side algebraic folds:
#   cat([a1,a2,a3]) @ Wf == a1@Wf1 + a2@Wf2 + a3@Wf3 ; the 1x1 convs & biases
#   commute with the (row-stochastic) bilinear resize and the GAP, so the whole
#   Aux_x path + aux_classifier folds into per-stage (Ci, ncls) matrices.
# ----------------------------------------------------------------------------
def init_params(key, in_channels, num_classes, heads):
    c1, c2, c3, c4 = in_channels
    mid = c2
    ncls = num_classes - 1
    keys = jax.random.split(key, 12)

    def w_(k, cin, cout):
        return jax.random.normal(k, (cin, cout), jnp.float32) / np.sqrt(cin)

    def b_(k, cout):
        return 0.1 * jax.random.normal(k, (cout,), jnp.float32)

    w1, b1 = w_(keys[0], c1, mid), b_(keys[1], mid)
    w2, b2 = w_(keys[2], c2, mid), b_(keys[3], mid)
    w3, b3 = w_(keys[4], c3, mid), b_(keys[5], mid)
    wf, bf = w_(keys[6], 3 * mid, mid), b_(keys[7], mid)
    wf1, wf2, wf3 = wf[:mid], wf[mid:2 * mid], wf[2 * mid:]

    cls_w = w_(keys[10], c4, ncls)        # classifier (no bias)
    aux_cls_w = w_(keys[11], mid, ncls)   # aux_classifier (no bias)

    A1 = w1 @ wf1 @ aux_cls_w
    A2 = w2 @ wf2 @ aux_cls_w
    A3 = w3 @ wf3 @ aux_cls_w
    b_aux = (b1 @ wf1 + b2 @ wf2 + b3 @ wf3 + bf) @ aux_cls_w

    proj_w, proj_b = [], []
    pkeys = jax.random.split(keys[8], 4)
    for i in range(4):
        proj_w.append(
            jax.random.normal(pkeys[i], (heads[i],), jnp.float32) / np.sqrt(heads[i]))
        proj_b.append(
            0.1 * jax.random.normal(jax.random.fold_in(keys[9], i), (1,), jnp.float32))

    return {
        "aux_A1": A1, "aux_A2": A2, "aux_A3": A3,
        "aux_b": b_aux.reshape(1, ncls),
        "cls_w": cls_w,
        # pre-scaled by 0.5 (the mean over the two attention maps per stage)
        "proj_w_half": 0.5 * jnp.concatenate(proj_w),
        "proj_b_packed": jnp.concatenate(proj_b),
    }


if __name__ == "__main__":
    key = jax.random.PRNGKey(0)
    B = 2
    in_channels = [16, 32, 48, 64]               # stand-in for encoder embed_dims
    num_classes = 5
    heads = [1, 2, 5, 8]                         # StageAttn_projs in_channels
    sizes = [(16, 16), (8, 8), (4, 4), (2, 2)]   # strides 4/8/16/32 of a 64x64 image

    k_feat, k_attn, k_par = jax.random.split(key, 3)

    fkeys = jax.random.split(k_feat, 4)
    feats = [
        jax.random.normal(fkeys[i], (B, in_channels[i], *sizes[i]), jnp.float32)
        for i in range(4)
    ]

    akeys = jax.random.split(k_attn, 8)
    attns = []
    for i in range(4):
        n = sizes[i][0] * sizes[i][1]
        for j in range(2):
            logits = jax.random.normal(akeys[2 * i + j], (B, heads[i], n, n), jnp.float32)
            attns.append(jax.nn.softmax(logits, axis=-1))

    params = init_params(k_par, in_channels, num_classes, heads)

    fwd = jax.jit(tscd_forward)
    final_x, aux_cls, attn_preds = fwd(params, feats[0], feats[1], feats[2], feats[3], attns)
    jax.block_until_ready((final_x, aux_cls, attn_preds))

    assert final_x.shape == (B, num_classes - 1)
    assert aux_cls.shape == (B, num_classes - 1)
    assert [tuple(p.shape) for p in attn_preds] == [
        (B, 256, 256), (B, 64, 64), (B, 16, 16), (B, 4, 4)
    ]
    print("KERNEL_OK")
</pallas_src>

<mosaic_0001>
module attributes {stable_mosaic.version = 11 : i64} {
  func.func @_tscd_fused_kernel(%arg0: i32, %arg1: memref<16xf32, #tpu.memory_space<smem>>, %arg2: memref<4xf32, #tpu.memory_space<smem>>, %arg3: memref<1x256x16xbf16, #tpu.memory_space<vmem>>, %arg4: memref<1x64x32xbf16, #tpu.memory_space<vmem>>, %arg5: memref<1x16x48xbf16, #tpu.memory_space<vmem>>, %arg6: memref<1x4x64xbf16, #tpu.memory_space<vmem>>, %arg7: memref<1x256xf32, #tpu.memory_space<vmem>>, %arg8: memref<1x16xf32, #tpu.memory_space<vmem>>, %arg9: memref<16x4xf32, #tpu.memory_space<vmem>>, %arg10: memref<32x4xf32, #tpu.memory_space<vmem>>, %arg11: memref<48x4xf32, #tpu.memory_space<vmem>>, %arg12: memref<1x4xf32, #tpu.memory_space<vmem>>, %arg13: memref<64x4xf32, #tpu.memory_space<vmem>>, %arg14: memref<1x1x256x256xbf16, #tpu.memory_space<vmem>>, %arg15: memref<1x1x256x256xbf16, #tpu.memory_space<vmem>>, %arg16: memref<1x2x64x64xbf16, #tpu.memory_space<vmem>>, %arg17: memref<1x2x64x64xbf16, #tpu.memory_space<vmem>>, %arg18: memref<1x5x16x16xbf16, #tpu.memory_space<vmem>>, %arg19: memref<1x5x16x16xbf16, #tpu.memory_space<vmem>>, %arg20: memref<1x8x4x4xbf16, #tpu.memory_space<vmem>>, %arg21: memref<1x8x4x4xbf16, #tpu.memory_space<vmem>>, %arg22: memref<1x1x4xf32, #tpu.memory_space<vmem>>, %arg23: memref<1x1x4xf32, #tpu.memory_space<vmem>>, %arg24: memref<1x256x256xf32, #tpu.memory_space<vmem>>, %arg25: memref<1x64x64xf32, #tpu.memory_space<vmem>>, %arg26: memref<1x16x16xf32, #tpu.memory_space<vmem>>, %arg27: memref<1x4x4xf32, #tpu.memory_space<vmem>>) attributes {dimension_semantics = [#tpu.dimension_semantics<parallel>], iteration_bounds = array<i64: 2>, scalar_prefetch = 0 : i64, scratch_operands = 0 : i64, tpu.core_type = #tpu.core_type<tc>, window_params = [{transform_indices = @transform_0, window_bounds = array<i64: 16>}, {transform_indices = @transform_1, window_bounds = array<i64: 4>}, {transform_indices = @transform_2, window_bounds = array<i64: 1, 256, 16>}, {transform_indices = @transform_3, window_bounds = array<i64: 1, 64, 32>}, {transform_indices = @transform_4, window_bounds = array<i64: 1, 16, 48>}, {transform_indices = @transform_5, window_bounds = array<i64: 1, 4, 64>}, {pipeline_mode = #tpu.pipeline_mode<synchronous>, transform_indices = @transform_6, window_bounds = array<i64: 1, 256>}, {pipeline_mode = #tpu.pipeline_mode<synchronous>, transform_indices = @transform_7, window_bounds = array<i64: 1, 16>}, {pipeline_mode = #tpu.pipeline_mode<synchronous>, transform_indices = @transform_8, window_bounds = array<i64: 16, 4>}, {pipeline_mode = #tpu.pipeline_mode<synchronous>, transform_indices = @transform_9, window_bounds = array<i64: 32, 4>}, {pipeline_mode = #tpu.pipeline_mode<synchronous>, transform_indices = @transform_10, window_bounds = array<i64: 48, 4>}, {pipeline_mode = #tpu.pipeline_mode<synchronous>, transform_indices = @transform_11, window_bounds = array<i64: 1, 4>}, {pipeline_mode = #tpu.pipeline_mode<synchronous>, transform_indices = @transform_12, window_bounds = array<i64: 64, 4>}, {transform_indices = @transform_13, window_bounds = array<i64: 1, 1, 256, 256>}, {transform_indices = @transform_14, window_bounds = array<i64: 1, 1, 256, 256>}, {transform_indices = @transform_15, window_bounds = array<i64: 1, 2, 64, 64>}, {transform_indices = @transform_16, window_bounds = array<i64: 1, 2, 64, 64>}, {transform_indices = @transform_17, window_bounds = array<i64: 1, 5, 16, 16>}, {transform_indices = @transform_18, window_bounds = array<i64: 1, 5, 16, 16>}, {transform_indices = @transform_19, window_bounds = array<i64: 1, 8, 4, 4>}, {transform_indices = @transform_20, window_bounds = array<i64: 1, 8, 4, 4>}, {transform_indices = @transform_21, window_bounds = array<i64: 1, 1, 4>}, {transform_indices = @transform_22, window_bounds = array<i64: 1, 1, 4>}, {transform_indices = @transform_23, window_bounds = array<i64: 1, 256, 256>}, {transform_indices = @transform_24, window_bounds = array<i64: 1, 64, 64>}, {transform_indices = @transform_25, window_bounds = array<i64: 1, 16, 16>}, {transform_indices = @transform_26, window_bounds = array<i64: 1, 4, 4>}]} {
    %c0 = arith.constant 0 : index
    %c0_0 = arith.constant 0 : index
    %0 = vector.load %arg7[%c0, %c0_0] : memref<1x256xf32, #tpu.memory_space<vmem>>, vector<1x256xf32>
    %c0_1 = arith.constant 0 : index
    %c0_2 = arith.constant 0 : index
    %c0_3 = arith.constant 0 : index
    %1 = vector.load %arg3[%c0_1, %c0_2, %c0_3] : memref<1x256x16xbf16, #tpu.memory_space<vmem>>, vector<1x256x16xbf16>
    %2 = vector.shape_cast %1 : vector<1x256x16xbf16> to vector<256x16xbf16>
    %3 = arith.extf %2 : vector<256x16xbf16> to vector<256x16xf32>
    %cst = arith.constant dense<0.000000e+00> : vector<1x16xf32>
    %4 = tpu.matmul %0, %3, %cst {dimension_numbers = #tpu.dot_dimension_numbers<[1], [0], [0], [1], [0, 0, 1, 1], [], []>} : vector<1x256xf32>, vector<256x16xf32>, vector<1x16xf32> -> vector<1x16xf32>
    %c0_4 = arith.constant 0 : index
    %c0_5 = arith.constant 0 : index
    %c0_6 = arith.constant 0 : index
    %5 = vector.load %arg4[%c0_4, %c0_5, %c0_6] : memref<1x64x32xbf16, #tpu.memory_space<vmem>>, vector<1x64x32xbf16>
    %6 = vector.shape_cast %5 : vector<1x64x32xbf16> to vector<64x32xbf16>
    %7 = arith.extf %6 : vector<64x32xbf16> to vector<64x32xf32>
    %cst_7 = arith.constant dense<0.000000e+00> : vector<32xf32>
    %8 = vector.multi_reduction <add>, %7, %cst_7 [0] : vector<64x32xf32> to vector<32xf32>
    %9 = vector.shape_cast %8 : vector<32xf32> to vector<1x32xf32>
    %cst_8 = arith.constant 6.400000e+01 : f32
    %10 = vector.broadcast %cst_8 : f32 to vector<1x32xf32>
    %11 = arith.divf %9, %10 : vector<1x32xf32>
    %c0_9 = arith.constant 0 : index
    %c0_10 = arith.constant 0 : index
    %12 = vector.load %arg8[%c0_9, %c0_10] : memref<1x16xf32, #tpu.memory_space<vmem>>, vector<1x16xf32>
    %c0_11 = arith.constant 0 : index
    %c0_12 = arith.constant 0 : index
    %c0_13 = arith.constant 0 : index
    %13 = vector.load %arg5[%c0_11, %c0_12, %c0_13] : memref<1x16x48xbf16, #tpu.memory_space<vmem>>, vector<1x16x48xbf16>
    %14 = vector.shape_cast %13 : vector<1x16x48xbf16> to vector<16x48xbf16>
    %15 = arith.extf %14 : vector<16x48xbf16> to vector<16x48xf32>
    %cst_14 = arith.constant dense<0.000000e+00> : vector<1x48xf32>
    %16 = tpu.matmul %12, %15, %cst_14 {dimension_numbers = #tpu.dot_dimension_numbers<[1], [0], [0], [1], [0, 0, 1, 1], [], []>} : vector<1x16xf32>, vector<16x48xf32>, vector<1x48xf32> -> vector<1x48xf32>
    %c0_15 = arith.constant 0 : index
    %c0_16 = arith.constant 0 : index
    %c0_17 = arith.constant 0 : index
    %17 = vector.load %arg6[%c0_15, %c0_16, %c0_17] : memref<1x4x64xbf16, #tpu.memory_space<vmem>>, vector<1x4x64xbf16>
    %18 = vector.shape_cast %17 : vector<1x4x64xbf16> to vector<4x64xbf16>
    %19 = arith.extf %18 : vector<4x64xbf16> to vector<4x64xf32>
    %cst_18 = arith.constant dense<0.000000e+00> : vector<64xf32>
    %20 = vector.multi_reduction <add>, %19, %cst_18 [0] : vector<4x64xf32> to vector<64xf32>
    %21 = vector.shape_cast %20 : vector<64xf32> to vector<1x64xf32>
    %cst_19 = arith.constant 4.000000e+00 : f32
    %22 = vector.broadcast %cst_19 : f32 to vector<1x64xf32>
    %23 = arith.divf %21, %22 : vector<1x64xf32>
    %c0_20 = arith.constant 0 : index
    %c0_21 = arith.constant 0 : index
    %24 = vector.load %arg9[%c0_20, %c0_21] : memref<16x4xf32, #tpu.memory_space<vmem>>, vector<16x4xf32>
    %cst_22 = arith.constant dense<0.000000e+00> : vector<1x4xf32>
    %25 = tpu.matmul %4, %24, %cst_22 {dimension_numbers = #tpu.dot_dimension_numbers<[1], [0], [0], [1], [0, 0, 1, 1], [], []>} : vector<1x16xf32>, vector<16x4xf32>, vector<1x4xf32> -> vector<1x4xf32>
    %c0_23 = arith.constant 0 : index
    %c0_24 = arith.constant 0 : index
    %26 = vector.load %arg10[%c0_23, %c0_24] : memref<32x4xf32, #tpu.memory_space<vmem>>, vector<32x4xf32>
    %cst_25 = arith.constant dense<0.000000e+00> : vector<1x4xf32>
    %27 = tpu.matmul %11, %26, %cst_25 {dimension_numbers = #tpu.dot_dimension_numbers<[1], [0], [0], [1], [0, 0, 1, 1], [], []>} : vector<1x32xf32>, vector<32x4xf32>, vector<1x4xf32> -> vector<1x4xf32>
    %28 = arith.addf %25, %27 : vector<1x4xf32>
    %c0_26 = arith.constant 0 : index
    %c0_27 = arith.constant 0 : index
    %29 = vector.load %arg11[%c0_26, %c0_27] : memref<48x4xf32, #tpu.memory_space<vmem>>, vector<48x4xf32>
    %cst_28 = arith.constant dense<0.000000e+00> : vector<1x4xf32>
    %30 = tpu.matmul %16, %29, %cst_28 {dimension_numbers = #tpu.dot_dimension_numbers<[1], [0], [0], [1], [0, 0, 1, 1], [], []>} : vector<1x48xf32>, vector<48x4xf32>, vector<1x4xf32> -> vector<1x4xf32>
    %31 = arith.addf %28, %30 : vector<1x4xf32>
    %c0_29 = arith.constant 0 : index
    %c0_30 = arith.constant 0 : index
    %32 = vector.load %arg12[%c0_29, %c0_30] : memref<1x4xf32, #tpu.memory_space<vmem>>, vector<1x4xf32>
    %33 = arith.addf %31, %32 : vector<1x4xf32>
    %c0_31 = arith.constant 0 : index
    %c0_32 = arith.constant 0 : index
    %c0_33 = arith.constant 0 : index
    %34 = vector.load %arg23[%c0_31, %c0_32, %c0_33] : memref<1x1x4xf32, #tpu.memory_space<vmem>>, vector<1x1x4xf32>
    %35 = vector.shape_cast %34 : vector<1x1x4xf32> to vector<1x4xf32>
    %36 = vector.shape_cast %33 : vector<1x4xf32> to vector<1x1x4xf32>
    tpu.vector_store %arg23[%c0_31, %c0_32, %c0_33], %36 {strides = array<i32>} : memref<1x1x4xf32, #tpu.memory_space<vmem>>, vector<1x1x4xf32>,
    %c0_34 = arith.constant 0 : index
    %c0_35 = arith.constant 0 : index
    %37 = vector.load %arg13[%c0_34, %c0_35] : memref<64x4xf32, #tpu.memory_space<vmem>>, vector<64x4xf32>
    %cst_36 = arith.constant dense<0.000000e+00> : vector<1x4xf32>
    %38 = tpu.matmul %23, %37, %cst_36 {dimension_numbers = #tpu.dot_dimension_numbers<[1], [0], [0], [1], [0, 0, 1, 1], [], []>} : vector<1x64xf32>, vector<64x4xf32>, vector<1x4xf32> -> vector<1x4xf32>
    %c0_37 = arith.constant 0 : index
    %c0_38 = arith.constant 0 : index
    %c0_39 = arith.constant 0 : index
    %39 = vector.load %arg22[%c0_37, %c0_38, %c0_39] : memref<1x1x4xf32, #tpu.memory_space<vmem>>, vector<1x1x4xf32>
    %40 = vector.shape_cast %39 : vector<1x1x4xf32> to vector<1x4xf32>
    %41 = vector.shape_cast %38 : vector<1x4xf32> to vector<1x1x4xf32>
    tpu.vector_store %arg22[%c0_37, %c0_38, %c0_39], %41 {strides = array<i32>} : memref<1x1x4xf32, #tpu.memory_space<vmem>>, vector<1x1x4xf32>,
    %c0_40 = arith.constant 0 : index
    %c0_41 = arith.constant 0 : index
    %c0_42 = arith.constant 0 : index
    %c0_43 = arith.constant 0 : index
    %42 = vector.load %arg14[%c0_40, %c0_41, %c0_42, %c0_43] : memref<1x1x256x256xbf16, #tpu.memory_space<vmem>>, vector<1x1x256x256xbf16>
    %43 = vector.shape_cast %42 : vector<1x1x256x256xbf16> to vector<256x256xbf16>
    %44 = arith.extf %43 : vector<256x256xbf16> to vector<256x256xf32>
    %c0_44 = arith.constant 0 : index
    %c0_45 = arith.constant 0 : index
    %c0_46 = arith.constant 0 : index
    %c0_47 = arith.constant 0 : index
    %45 = vector.load %arg15[%c0_44, %c0_45, %c0_46, %c0_47] : memref<1x1x256x256xbf16, #tpu.memory_space<vmem>>, vector<1x1x256x256xbf16>
    %46 = vector.shape_cast %45 : vector<1x1x256x256xbf16> to vector<256x256xbf16>
    %47 = arith.extf %46 : vector<256x256xbf16> to vector<256x256xf32>
    %48 = arith.addf %44, %47 : vector<256x256xf32>
    %c0_48 = arith.constant 0 : index
    %49 = memref.load %arg1[%c0_48] : memref<16xf32, #tpu.memory_space<smem>>
    %50 = vector.broadcast %49 : f32 to vector<256x256xf32>
    %51 = arith.mulf %48, %50 : vector<256x256xf32>
    %52 = tpu.transpose %51, [1, 0] : vector<256x256xf32> -> vector<256x256xf32>
    %53 = arith.addf %51, %52 : vector<256x256xf32>
    %c0_49 = arith.constant 0 : index
    %54 = memref.load %arg2[%c0_49] : memref<4xf32, #tpu.memory_space<smem>>
    %55 = vector.broadcast %54 : f32 to vector<256x256xf32>
    %56 = arith.addf %53, %55 : vector<256x256xf32>
    %cst_50 = arith.constant 0.000000e+00 : f32
    %57 = vector.broadcast %cst_50 : f32 to vector<256x256xf32>
    %58 = arith.subf %57, %56 : vector<256x256xf32>
    %59 = math.exp %58 : vector<256x256xf32>
    %cst_51 = arith.constant 1.000000e+00 : f32
    %60 = vector.broadcast %cst_51 : f32 to vector<256x256xf32>
    %61 = arith.addf %60, %59 : vector<256x256xf32>
    %62 = tpu.reciprocal %61 {approx = true} : vector<256x256xf32> -> vector<256x256xf32>
    %c0_52 = arith.constant 0 : index
    %c0_53 = arith.constant 0 : index
    %c0_54 = arith.constant 0 : index
    %63 = vector.load %arg24[%c0_52, %c0_53, %c0_54] : memref<1x256x256xf32, #tpu.memory_space<vmem>>, vector<1x256x256xf32>
    %64 = vector.shape_cast %63 : vector<1x256x256xf32> to vector<256x256xf32>
    %65 = vector.shape_cast %62 : vector<256x256xf32> to vector<1x256x256xf32>
    tpu.vector_store %arg24[%c0_52, %c0_53, %c0_54], %65 {strides = array<i32>} : memref<1x256x256xf32, #tpu.memory_space<vmem>>, vector<1x256x256xf32>,
    %c0_55 = arith.constant 0 : index
    %c0_56 = arith.constant 0 : index
    %c0_57 = arith.constant 0 : index
    %c0_58 = arith.constant 0 : index
    %66 = vector.load %arg16[%c0_55, %c0_56, %c0_57, %c0_58] : memref<1x2x64x64xbf16, #tpu.memory_space<vmem>>, vector<1x1x64x64xbf16>
    %67 = vector.shape_cast %66 : vector<1x1x64x64xbf16> to vector<64x64xbf16>
    %68 = arith.extf %67 : vector<64x64xbf16> to vector<64x64xf32>
    %c0_59 = arith.constant 0 : index
    %c0_60 = arith.constant 0 : index
    %c0_61 = arith.constant 0 : index
    %c0_62 = arith.constant 0 : index
    %69 = vector.load %arg17[%c0_59, %c0_60, %c0_61, %c0_62] : memref<1x2x64x64xbf16, #tpu.memory_space<vmem>>, vector<1x1x64x64xbf16>
    %70 = vector.shape_cast %69 : vector<1x1x64x64xbf16> to vector<64x64xbf16>
    %71 = arith.extf %70 : vector<64x64xbf16> to vector<64x64xf32>
    %72 = arith.addf %68, %71 : vector<64x64xf32>
    %c1 = arith.constant 1 : index
    %73 = memref.load %arg1[%c1] : memref<16xf32, #tpu.memory_space<smem>>
    %74 = vector.broadcast %73 : f32 to vector<64x64xf32>
    %75 = arith.mulf %72, %74 : vector<64x64xf32>
    %c0_63 = arith.constant 0 : index
    %c1_64 = arith.constant 1 : index
    %c0_65 = arith.constant 0 : index
    %c0_66 = arith.constant 0 : index
    %76 = vector.load %arg16[%c0_63, %c1_64, %c0_65, %c0_66] : memref<1x2x64x64xbf16, #tpu.memory_space<vmem>>, vector<1x1x64x64xbf16>
    %77 = vector.shape_cast %76 : vector<1x1x64x64xbf16> to vector<64x64xbf16>
    %78 = arith.extf %77 : vector<64x64xbf16> to vector<64x64xf32>
    %c0_67 = arith.constant 0 : index
    %c1_68 = arith.constant 1 : index
    %c0_69 = arith.constant 0 : index
    %c0_70 = arith.constant 0 : index
    %79 = vector.load %arg17[%c0_67, %c1_68, %c0_69, %c0_70] : memref<1x2x64x64xbf16, #tpu.memory_space<vmem>>, vector<1x1x64x64xbf16>
    %80 = vector.shape_cast %79 : vector<1x1x64x64xbf16> to vector<64x64xbf16>
    %81 = arith.extf %80 : vector<64x64xbf16> to vector<64x64xf32>
    %82 = arith.addf %78, %81 : vector<64x64xf32>
    %c2 = arith.constant 2 : index
    %83 = memref.load %arg1[%c2] : memref<16xf32, #tpu.memory_space<smem>>
    %84 = vector.broadcast %83 : f32 to vector<64x64xf32>
    %85 = arith.mulf %82, %84 : vector<64x64xf32>
    %86 = arith.addf %75, %85 : vector<64x64xf32>
    %87 = tpu.transpose %86, [1, 0] : vector<64x64xf32> -> vector<64x64xf32>
    %88 = arith.addf %86, %87 : vector<64x64xf32>
    %c1_71 = arith.constant 1 : index
    %89 = memref.load %arg2[%c1_71] : memref<4xf32, #tpu.memory_space<smem>>
    %90 = vector.broadcast %89 : f32 to vector<64x64xf32>
    %91 = arith.addf %88, %90 : vector<64x64xf32>
    %cst_72 = arith.constant 0.000000e+00 : f32
    %92 = vector.broadcast %cst_72 : f32 to vector<64x64xf32>
    %93 = arith.subf %92, %91 : vector<64x64xf32>
    %94 = math.exp %93 : vector<64x64xf32>
    %cst_73 = arith.constant 1.000000e+00 : f32
    %95 = vector.broadcast %cst_73 : f32 to vector<64x64xf32>
    %96 = arith.addf %95, %94 : vector<64x64xf32>
    %97 = tpu.reciprocal %96 {approx = true} : vector<64x64xf32> -> vector<64x64xf32>
    %c0_74 = arith.constant 0 : index
    %c0_75 = arith.constant 0 : index
    %c0_76 = arith.constant 0 : index
    %98 = vector.load %arg25[%c0_74, %c0_75, %c0_76] : memref<1x64x64xf32, #tpu.memory_space<vmem>>, vector<1x64x64xf32>
    %99 = vector.shape_cast %98 : vector<1x64x64xf32> to vector<64x64xf32>
    %100 = vector.shape_cast %97 : vector<64x64xf32> to vector<1x64x64xf32>
    tpu.vector_store %arg25[%c0_74, %c0_75, %c0_76], %100 {strides = array<i32>} : memref<1x64x64xf32, #tpu.memory_space<vmem>>, vector<1x64x64xf32>,
    %c0_77 = arith.constant 0 : index
    %c0_78 = arith.constant 0 : index
    %c0_79 = arith.constant 0 : index
    %c0_80 = arith.constant 0 : index
    %101 = vector.load %arg18[%c0_77, %c0_78, %c0_79, %c0_80] : memref<1x5x16x16xbf16, #tpu.memory_space<vmem>>, vector<1x1x16x16xbf16>
    %102 = vector.shape_cast %101 : vector<1x1x16x16xbf16> to vector<16x16xbf16>
    %103 = arith.extf %102 : vector<16x16xbf16> to vector<16x16xf32>
    %c0_81 = arith.constant 0 : index
    %c0_82 = arith.constant 0 : index
    %c0_83 = arith.constant 0 : index
    %c0_84 = arith.constant 0 : index
    %104 = vector.load %arg19[%c0_81, %c0_82, %c0_83, %c0_84] : memref<1x5x16x16xbf16, #tpu.memory_space<vmem>>, vector<1x1x16x16xbf16>
    %105 = vector.shape_cast %104 : vector<1x1x16x16xbf16> to vector<16x16xbf16>
    %106 = arith.extf %105 : vector<16x16xbf16> to vector<16x16xf32>
    %107 = arith.addf %103, %106 : vector<16x16xf32>
    %c3 = arith.constant 3 : index
    %108 = memref.load %arg1[%c3] : memref<16xf32, #tpu.memory_space<smem>>
    %109 = vector.broadcast %108 : f32 to vector<16x16xf32>
    %110 = arith.mulf %107, %109 : vector<16x16xf32>
    %c0_85 = arith.constant 0 : index
    %c1_86 = arith.constant 1 : index
    %c0_87 = arith.constant 0 : index
    %c0_88 = arith.constant 0 : index
    %111 = vector.load %arg18[%c0_85, %c1_86, %c0_87, %c0_88] : memref<1x5x16x16xbf16, #tpu.memory_space<vmem>>, vector<1x1x16x16xbf16>
    %112 = vector.shape_cast %111 : vector<1x1x16x16xbf16> to vector<16x16xbf16>
    %113 = arith.extf %112 : vector<16x16xbf16> to vector<16x16xf32>
    %c0_89 = arith.constant 0 : index
    %c1_90 = arith.constant 1 : index
    %c0_91 = arith.constant 0 : index
    %c0_92 = arith.constant 0 : index
    %114 = vector.load %arg19[%c0_89, %c1_90, %c0_91, %c0_92] : memref<1x5x16x16xbf16, #tpu.memory_space<vmem>>, vector<1x1x16x16xbf16>
    %115 = vector.shape_cast %114 : vector<1x1x16x16xbf16> to vector<16x16xbf16>
    %116 = arith.extf %115 : vector<16x16xbf16> to vector<16x16xf32>
    %117 = arith.addf %113, %116 : vector<16x16xf32>
    %c4 = arith.constant 4 : index
    %118 = memref.load %arg1[%c4] : memref<16xf32, #tpu.memory_space<smem>>
    %119 = vector.broadcast %118 : f32 to vector<16x16xf32>
    %120 = arith.mulf %117, %119 : vector<16x16xf32>
    %121 = arith.addf %110, %120 : vector<16x16xf32>
    %c0_93 = arith.constant 0 : index
    %c2_94 = arith.constant 2 : index
    %c0_95 = arith.constant 0 : index
    %c0_96 = arith.constant 0 : index
    %122 = vector.load %arg18[%c0_93, %c2_94, %c0_95, %c0_96] : memref<1x5x16x16xbf16, #tpu.memory_space<vmem>>, vector<1x1x16x16xbf16>
    %123 = vector.shape_cast %122 : vector<1x1x16x16xbf16> to vector<16x16xbf16>
    %124 = arith.extf %123 : vector<16x16xbf16> to vector<16x16xf32>
    %c0_97 = arith.constant 0 : index
    %c2_98 = arith.constant 2 : index
    %c0_99 = arith.constant 0 : index
    %c0_100 = arith.constant 0 : index
    %125 = vector.load %arg19[%c0_97, %c2_98, %c0_99, %c0_100] : memref<1x5x16x16xbf16, #tpu.memory_space<vmem>>, vector<1x1x16x16xbf16>
    %126 = vector.shape_cast %125 : vector<1x1x16x16xbf16> to vector<16x16xbf16>
    %127 = arith.extf %126 : vector<16x16xbf16> to vector<16x16xf32>
    %128 = arith.addf %124, %127 : vector<16x16xf32>
    %c5 = arith.constant 5 : index
    %129 = memref.load %arg1[%c5] : memref<16xf32, #tpu.memory_space<smem>>
    %130 = vector.broadcast %129 : f32 to vector<16x16xf32>
    %131 = arith.mulf %128, %130 : vector<16x16xf32>
    %132 = arith.addf %121, %131 : vector<16x16xf32>
    %c0_101 = arith.constant 0 : index
    %c3_102 = arith.constant 3 : index
    %c0_103 = arith.constant 0 : index
    %c0_104 = arith.constant 0 : index
    %133 = vector.load %arg18[%c0_101, %c3_102, %c0_103, %c0_104] : memref<1x5x16x16xbf16, #tpu.memory_space<vmem>>, vector<1x1x16x16xbf16>
    %134 = vector.shape_cast %133 : vector<1x1x16x16xbf16> to vector<16x16xbf16>
    %135 = arith.extf %134 : vector<16x16xbf16> to vector<16x16xf32>
    %c0_105 = arith.constant 0 : index
    %c3_106 = arith.constant 3 : index
    %c0_107 = arith.constant 0 : index
    %c0_108 = arith.constant 0 : index
    %136 = vector.load %arg19[%c0_105, %c3_106, %c0_107, %c0_108] : memref<1x5x16x16xbf16, #tpu.memory_space<vmem>>, vector<1x1x16x16xbf16>
    %137 = vector.shape_cast %136 : vector<1x1x16x16xbf16> to vector<16x16xbf16>
    %138 = arith.extf %137 : vector<16x16xbf16> to vector<16x16xf32>
    %139 = arith.addf %135, %138 : vector<16x16xf32>
    %c6 = arith.constant 6 : index
    %140 = memref.load %arg1[%c6] : memref<16xf32, #tpu.memory_space<smem>>
    %141 = vector.broadcast %140 : f32 to vector<16x16xf32>
    %142 = arith.mulf %139, %141 : vector<16x16xf32>
    %143 = arith.addf %132, %142 : vector<16x16xf32>
    %c0_109 = arith.constant 0 : index
    %c4_110 = arith.constant 4 : index
    %c0_111 = arith.constant 0 : index
    %c0_112 = arith.constant 0 : index
    %144 = vector.load %arg18[%c0_109, %c4_110, %c0_111, %c0_112] : memref<1x5x16x16xbf16, #tpu.memory_space<vmem>>, vector<1x1x16x16xbf16>
    %145 = vector.shape_cast %144 : vector<1x1x16x16xbf16> to vector<16x16xbf16>
    %146 = arith.extf %145 : vector<16x16xbf16> to vector<16x16xf32>
    %c0_113 = arith.constant 0 : index
    %c4_114 = arith.constant 4 : index
    %c0_115 = arith.constant 0 : index
    %c0_116 = arith.constant 0 : index
    %147 = vector.load %arg19[%c0_113, %c4_114, %c0_115, %c0_116] : memref<1x5x16x16xbf16, #tpu.memory_space<vmem>>, vector<1x1x16x16xbf16>
    %148 = vector.shape_cast %147 : vector<1x1x16x16xbf16> to vector<16x16xbf16>
    %149 = arith.extf %148 : vector<16x16xbf16> to vector<16x16xf32>
    %150 = arith.addf %146, %149 : vector<16x16xf32>
    %c7 = arith.constant 7 : index
    %151 = memref.load %arg1[%c7] : memref<16xf32, #tpu.memory_space<smem>>
    %152 = vector.broadcast %151 : f32 to vector<16x16xf32>
    %153 = arith.mulf %150, %152 : vector<16x16xf32>
    %154 = arith.addf %143, %153 : vector<16x16xf32>
    %155 = tpu.transpose %154, [1, 0] : vector<16x16xf32> -> vector<16x16xf32>
    %156 = arith.addf %154, %155 : vector<16x16xf32>
    %c2_117 = arith.constant 2 : index
    %157 = memref.load %arg2[%c2_117] : memref<4xf32, #tpu.memory_space<smem>>
    %158 = vector.broadcast %157 : f32 to vector<16x16xf32>
    %159 = arith.addf %156, %158 : vector<16x16xf32>
    %cst_118 = arith.constant 0.000000e+00 : f32
    %160 = vector.broadcast %cst_118 : f32 to vector<16x16xf32>
    %161 = arith.subf %160, %159 : vector<16x16xf32>
    %162 = math.exp %161 : vector<16x16xf32>
    %cst_119 = arith.constant 1.000000e+00 : f32
    %163 = vector.broadcast %cst_119 : f32 to vector<16x16xf32>
    %164 = arith.addf %163, %162 : vector<16x16xf32>
    %165 = tpu.reciprocal %164 {approx = true} : vector<16x16xf32> -> vector<16x16xf32>
    %c0_120 = arith.constant 0 : index
    %c0_121 = arith.constant 0 : index
    %c0_122 = arith.constant 0 : index
    %166 = vector.load %arg26[%c0_120, %c0_121, %c0_122] : memref<1x16x16xf32, #tpu.memory_space<vmem>>, vector<1x16x16xf32>
    %167 = vector.shape_cast %166 : vector<1x16x16xf32> to vector<16x16xf32>
    %168 = vector.shape_cast %165 : vector<16x16xf32> to vector<1x16x16xf32>
    tpu.vector_store %arg26[%c0_120, %c0_121, %c0_122], %168 {strides = array<i32>} : memref<1x16x16xf32, #tpu.memory_space<vmem>>, vector<1x16x16xf32>,
    %c0_123 = arith.constant 0 : index
    %c0_124 = arith.constant 0 : index
    %c0_125 = arith.constant 0 : index
    %c0_126 = arith.constant 0 : index
    %169 = vector.load %arg20[%c0_123, %c0_124, %c0_125, %c0_126] : memref<1x8x4x4xbf16, #tpu.memory_space<vmem>>, vector<1x1x4x4xbf16>
    %170 = vector.shape_cast %169 : vector<1x1x4x4xbf16> to vector<4x4xbf16>
    %171 = arith.extf %170 : vector<4x4xbf16> to vector<4x4xf32>
    %c0_127 = arith.constant 0 : index
    %c0_128 = arith.constant 0 : index
    %c0_129 = arith.constant 0 : index
    %c0_130 = arith.constant 0 : index
    %172 = vector.load %arg21[%c0_127, %c0_128, %c0_129, %c0_130] : memref<1x8x4x4xbf16, #tpu.memory_space<vmem>>, vector<1x1x4x4xbf16>
    %173 = vector.shape_cast %172 : vector<1x1x4x4xbf16> to vector<4x4xbf16>
    %174 = arith.extf %173 : vector<4x4xbf16> to vector<4x4xf32>
    %175 = arith.addf %171, %174 : vector<4x4xf32>
    %c8 = arith.constant 8 : index
    %176 = memref.load %arg1[%c8] : memref<16xf32, #tpu.memory_space<smem>>
    %177 = vector.broadcast %176 : f32 to vector<4x4xf32>
    %178 = arith.mulf %175, %177 : vector<4x4xf32>
    %c0_131 = arith.constant 0 : index
    %c1_132 = arith.constant 1 : index
    %c0_133 = arith.constant 0 : index
    %c0_134 = arith.constant 0 : index
    %179 = vector.load %arg20[%c0_131, %c1_132, %c0_133, %c0_134] : memref<1x8x4x4xbf16, #tpu.memory_space<vmem>>, vector<1x1x4x4xbf16>
    %180 = vector.shape_cast %179 : vector<1x1x4x4xbf16> to vector<4x4xbf16>
    %181 = arith.extf %180 : vector<4x4xbf16> to vector<4x4xf32>
    %c0_135 = arith.constant 0 : index
    %c1_136 = arith.constant 1 : index
    %c0_137 = arith.constant 0 : index
    %c0_138 = arith.constant 0 : index
    %182 = vector.load %arg21[%c0_135, %c1_136, %c0_137, %c0_138] : memref<1x8x4x4xbf16, #tpu.memory_space<vmem>>, vector<1x1x4x4xbf16>
    %183 = vector.shape_cast %182 : vector<1x1x4x4xbf16> to vector<4x4xbf16>
    %184 = arith.extf %183 : vector<4x4xbf16> to vector<4x4xf32>
    %185 = arith.addf %181, %184 : vector<4x4xf32>
    %c9 = arith.constant 9 : index
    %186 = memref.load %arg1[%c9] : memref<16xf32, #tpu.memory_space<smem>>
    %187 = vector.broadcast %186 : f32 to vector<4x4xf32>
    %188 = arith.mulf %185, %187 : vector<4x4xf32>
    %189 = arith.addf %178, %188 : vector<4x4xf32>
    %c0_139 = arith.constant 0 : index
    %c2_140 = arith.constant 2 : index
    %c0_141 = arith.constant 0 : index
    %c0_142 = arith.constant 0 : index
    %190 = vector.load %arg20[%c0_139, %c2_140, %c0_141, %c0_142] : memref<1x8x4x4xbf16, #tpu.memory_space<vmem>>, vector<1x1x4x4xbf16>
    %191 = vector.shape_cast %190 : vector<1x1x4x4xbf16> to vector<4x4xbf16>
    %192 = arith.extf %191 : vector<4x4xbf16> to vector<4x4xf32>
    %c0_143 = arith.constant 0 : index
    %c2_144 = arith.constant 2 : index
    %c0_145 = arith.constant 0 : index
    %c0_146 = arith.constant 0 : index
    %193 = vector.load %arg21[%c0_143, %c2_144, %c0_145, %c0_146] : memref<1x8x4x4xbf16, #tpu.memory_space<vmem>>, vector<1x1x4x4xbf16>
    %194 = vector.shape_cast %193 : vector<1x1x4x4xbf16> to vector<4x4xbf16>
    %195 = arith.extf %194 : vector<4x4xbf16> to vector<4x4xf32>
    %196 = arith.addf %192, %195 : vector<4x4xf32>
    %c10 = arith.constant 10 : index
    %197 = memref.load %arg1[%c10] : memref<16xf32, #tpu.memory_space<smem>>
    %198 = vector.broadcast %197 : f32 to vector<4x4xf32>
    %199 = arith.mulf %196, %198 : vector<4x4xf32>
    %200 = arith.addf %189, %199 : vector<4x4xf32>
    %c0_147 = arith.constant 0 : index
    %c3_148 = arith.constant 3 : index
    %c0_149 = arith.constant 0 : index
    %c0_150 = arith.constant 0 : index
    %201 = vector.load %arg20[%c0_147, %c3_148, %c0_149, %c0_150] : memref<1x8x4x4xbf16, #tpu.memory_space<vmem>>, vector<1x1x4x4xbf16>
    %202 = vector.shape_cast %201 : vector<1x1x4x4xbf16> to vector<4x4xbf16>
    %203 = arith.extf %202 : vector<4x4xbf16> to vector<4x4xf32>
    %c0_151 = arith.constant 0 : index
    %c3_152 = arith.constant 3 : index
    %c0_153 = arith.constant 0 : index
    %c0_154 = arith.constant 0 : index
    %204 = vector.load %arg21[%c0_151, %c3_152, %c0_153, %c0_154] : memref<1x8x4x4xbf16, #tpu.memory_space<vmem>>, vector<1x1x4x4xbf16>
    %205 = vector.shape_cast %204 : vector<1x1x4x4xbf16> to vector<4x4xbf16>
    %206 = arith.extf %205 : vector<4x4xbf16> to vector<4x4xf32>
    %207 = arith.addf %203, %206 : vector<4x4xf32>
    %c11 = arith.constant 11 : index
    %208 = memref.load %arg1[%c11] : memref<16xf32, #tpu.memory_space<smem>>
    %209 = vector.broadcast %208 : f32 to vector<4x4xf32>
    %210 = arith.mulf %207, %209 : vector<4x4xf32>
    %211 = arith.addf %200, %210 : vector<4x4xf32>
    %c0_155 = arith.constant 0 : index
    %c4_156 = arith.constant 4 : index
    %c0_157 = arith.constant 0 : index
    %c0_158 = arith.constant 0 : index
    %212 = vector.load %arg20[%c0_155, %c4_156, %c0_157, %c0_158] : memref<1x8x4x4xbf16, #tpu.memory_space<vmem>>, vector<1x1x4x4xbf16>
    %213 = vector.shape_cast %212 : vector<1x1x4x4xbf16> to vector<4x4xbf16>
    %214 = arith.extf %213 : vector<4x4xbf16> to vector<4x4xf32>
    %c0_159 = arith.constant 0 : index
    %c4_160 = arith.constant 4 : index
    %c0_161 = arith.constant 0 : index
    %c0_162 = arith.constant 0 : index
    %215 = vector.load %arg21[%c0_159, %c4_160, %c0_161, %c0_162] : memref<1x8x4x4xbf16, #tpu.memory_space<vmem>>, vector<1x1x4x4xbf16>
    %216 = vector.shape_cast %215 : vector<1x1x4x4xbf16> to vector<4x4xbf16>
    %217 = arith.extf %216 : vector<4x4xbf16> to vector<4x4xf32>
    %218 = arith.addf %214, %217 : vector<4x4xf32>
    %c12 = arith.constant 12 : index
    %219 = memref.load %arg1[%c12] : memref<16xf32, #tpu.memory_space<smem>>
    %220 = vector.broadcast %219 : f32 to vector<4x4xf32>
    %221 = arith.mulf %218, %220 : vector<4x4xf32>
    %222 = arith.addf %211, %221 : vector<4x4xf32>
    %c0_163 = arith.constant 0 : index
    %c5_164 = arith.constant 5 : index
    %c0_165 = arith.constant 0 : index
    %c0_166 = arith.constant 0 : index
    %223 = vector.load %arg20[%c0_163, %c5_164, %c0_165, %c0_166] : memref<1x8x4x4xbf16, #tpu.memory_space<vmem>>, vector<1x1x4x4xbf16>
    %224 = vector.shape_cast %223 : vector<1x1x4x4xbf16> to vector<4x4xbf16>
    %225 = arith.extf %224 : vector<4x4xbf16> to vector<4x4xf32>
    %c0_167 = arith.constant 0 : index
    %c5_168 = arith.constant 5 : index
    %c0_169 = arith.constant 0 : index
    %c0_170 = arith.constant 0 : index
    %226 = vector.load %arg21[%c0_167, %c5_168, %c0_169, %c0_170] : memref<1x8x4x4xbf16, #tpu.memory_space<vmem>>, vector<1x1x4x4xbf16>
    %227 = vector.shape_cast %226 : vector<1x1x4x4xbf16> to vector<4x4xbf16>
    %228 = arith.extf %227 : vector<4x4xbf16> to vector<4x4xf32>
    %229 = arith.addf %225, %228 : vector<4x4xf32>
    %c13 = arith.constant 13 : index
    %230 = memref.load %arg1[%c13] : memref<16xf32, #tpu.memory_space<smem>>
    %231 = vector.broadcast %230 : f32 to vector<4x4xf32>
    %232 = arith.mulf %229, %231 : vector<4x4xf32>
    %233 = arith.addf %222, %232 : vector<4x4xf32>
    %c0_171 = arith.constant 0 : index
    %c6_172 = arith.constant 6 : index
    %c0_173 = arith.constant 0 : index
    %c0_174 = arith.constant 0 : index
    %234 = vector.load %arg20[%c0_171, %c6_172, %c0_173, %c0_174] : memref<1x8x4x4xbf16, #tpu.memory_space<vmem>>, vector<1x1x4x4xbf16>
    %235 = vector.shape_cast %234 : vector<1x1x4x4xbf16> to vector<4x4xbf16>
    %236 = arith.extf %235 : vector<4x4xbf16> to vector<4x4xf32>
    %c0_175 = arith.constant 0 : index
    %c6_176 = arith.constant 6 : index
    %c0_177 = arith.constant 0 : index
    %c0_178 = arith.constant 0 : index
    %237 = vector.load %arg21[%c0_175, %c6_176, %c0_177, %c0_178] : memref<1x8x4x4xbf16, #tpu.memory_space<vmem>>, vector<1x1x4x4xbf16>
    %238 = vector.shape_cast %237 : vector<1x1x4x4xbf16> to vector<4x4xbf16>
    %239 = arith.extf %238 : vector<4x4xbf16> to vector<4x4xf32>
    %240 = arith.addf %236, %239 : vector<4x4xf32>
    %c14 = arith.constant 14 : index
    %241 = memref.load %arg1[%c14] : memref<16xf32, #tpu.memory_space<smem>>
    %242 = vector.broadcast %241 : f32 to vector<4x4xf32>
    %243 = arith.mulf %240, %242 : vector<4x4xf32>
    %244 = arith.addf %233, %243 : vector<4x4xf32>
    %c0_179 = arith.constant 0 : index
    %c7_180 = arith.constant 7 : index
    %c0_181 = arith.constant 0 : index
    %c0_182 = arith.constant 0 : index
    %245 = vector.load %arg20[%c0_179, %c7_180, %c0_181, %c0_182] : memref<1x8x4x4xbf16, #tpu.memory_space<vmem>>, vector<1x1x4x4xbf16>
    %246 = vector.shape_cast %245 : vector<1x1x4x4xbf16> to vector<4x4xbf16>
    %247 = arith.extf %246 : vector<4x4xbf16> to vector<4x4xf32>
    %c0_183 = arith.constant 0 : index
    %c7_184 = arith.constant 7 : index
    %c0_185 = arith.constant 0 : index
    %c0_186 = arith.constant 0 : index
    %248 = vector.load %arg21[%c0_183, %c7_184, %c0_185, %c0_186] : memref<1x8x4x4xbf16, #tpu.memory_space<vmem>>, vector<1x1x4x4xbf16>
    %249 = vector.shape_cast %248 : vector<1x1x4x4xbf16> to vector<4x4xbf16>
    %250 = arith.extf %249 : vector<4x4xbf16> to vector<4x4xf32>
    %251 = arith.addf %247, %250 : vector<4x4xf32>
    %c15 = arith.constant 15 : index
    %252 = memref.load %arg1[%c15] : memref<16xf32, #tpu.memory_space<smem>>
    %253 = vector.broadcast %252 : f32 to vector<4x4xf32>
    %254 = arith.mulf %251, %253 : vector<4x4xf32>
    %255 = arith.addf %244, %254 : vector<4x4xf32>
    %256 = tpu.transpose %255, [1, 0] : vector<4x4xf32> -> vector<4x4xf32>
    %257 = arith.addf %255, %256 : vector<4x4xf32>
    %c3_187 = arith.constant 3 : index
    %258 = memref.load %arg2[%c3_187] : memref<4xf32, #tpu.memory_space<smem>>
    %259 = vector.broadcast %258 : f32 to vector<4x4xf32>
    %260 = arith.addf %257, %259 : vector<4x4xf32>
    %cst_188 = arith.constant 0.000000e+00 : f32
    %261 = vector.broadcast %cst_188 : f32 to vector<4x4xf32>
    %262 = arith.subf %261, %260 : vector<4x4xf32>
    %263 = math.exp %262 : vector<4x4xf32>
    %cst_189 = arith.constant 1.000000e+00 : f32
    %264 = vector.broadcast %cst_189 : f32 to vector<4x4xf32>
    %265 = arith.addf %264, %263 : vector<4x4xf32>
    %266 = tpu.reciprocal %265 {approx = true} : vector<4x4xf32> -> vector<4x4xf32>
    %c0_190 = arith.constant 0 : index
    %c0_191 = arith.constant 0 : index
    %c0_192 = arith.constant 0 : index
    %267 = vector.load %arg27[%c0_190, %c0_191, %c0_192] : memref<1x4x4xf32, #tpu.memory_space<vmem>>, vector<1x4x4xf32>
    %268 = vector.shape_cast %267 : vector<1x4x4xf32> to vector<4x4xf32>
    %269 = vector.shape_cast %266 : vector<4x4xf32> to vector<1x4x4xf32>
    tpu.vector_store %arg27[%c0_190, %c0_191, %c0_192], %269 {strides = array<i32>} : memref<1x4x4xf32, #tpu.memory_space<vmem>>, vector<1x4x4xf32>,
    return
  }
  func.func @transform_0(%arg0: i32) -> i32 {
    %c0_i32 = arith.constant 0 : i32
    %c0_i32_0 = arith.constant 0 : i32
    return %c0_i32 : i32
  }
  func.func @transform_1(%arg0: i32) -> i32 {
    %c0_i32 = arith.constant 0 : i32
    %c0_i32_0 = arith.constant 0 : i32
    return %c0_i32 : i32
  }
  func.func @transform_2(%arg0: i32) -> (i32, i32, i32) {
    %c0_i32 = arith.constant 0 : i32
    %c0_i32_0 = arith.constant 0 : i32
    %c0_i32_1 = arith.constant 0 : i32
    return %arg0, %c0_i32, %c0_i32_0 : i32, i32, i32
  }
  func.func @transform_3(%arg0: i32) -> (i32, i32, i32) {
    %c0_i32 = arith.constant 0 : i32
    %c0_i32_0 = arith.constant 0 : i32
    %c0_i32_1 = arith.constant 0 : i32
    return %arg0, %c0_i32, %c0_i32_0 : i32, i32, i32
  }
  func.func @transform_4(%arg0: i32) -> (i32, i32, i32) {
    %c0_i32 = arith.constant 0 : i32
    %c0_i32_0 = arith.constant 0 : i32
    %c0_i32_1 = arith.constant 0 : i32
    return %arg0, %c0_i32, %c0_i32_0 : i32, i32, i32
  }
  func.func @transform_5(%arg0: i32) -> (i32, i32, i32) {
    %c0_i32 = arith.constant 0 : i32
    %c0_i32_0 = arith.constant 0 : i32
    %c0_i32_1 = arith.constant 0 : i32
    return %arg0, %c0_i32, %c0_i32_0 : i32, i32, i32
  }
  func.func @transform_6(%arg0: i32) -> (i32, i32) {
    %c0_i32 = arith.constant 0 : i32
    %c0_i32_0 = arith.constant 0 : i32
    %c0_i32_1 = arith.constant 0 : i32
    return %c0_i32, %c0_i32_0 : i32, i32
  }
  func.func @transform_7(%arg0: i32) -> (i32, i32) {
    %c0_i32 = arith.constant 0 : i32
    %c0_i32_0 = arith.constant 0 : i32
    %c0_i32_1 = arith.constant 0 : i32
    return %c0_i32, %c0_i32_0 : i32, i32
  }
  func.func @transform_8(%arg0: i32) -> (i32, i32) {
    %c0_i32 = arith.constant 0 : i32
    %c0_i32_0 = arith.constant 0 : i32
    %c0_i32_1 = arith.constant 0 : i32
    return %c0_i32, %c0_i32_0 : i32, i32
  }
  func.func @transform_9(%arg0: i32) -> (i32, i32) {
    %c0_i32 = arith.constant 0 : i32
    %c0_i32_0 = arith.constant 0 : i32
    %c0_i32_1 = arith.constant 0 : i32
    return %c0_i32, %c0_i32_0 : i32, i32
  }
  func.func @transform_10(%arg0: i32) -> (i32, i32) {
    %c0_i32 = arith.constant 0 : i32
    %c0_i32_0 = arith.constant 0 : i32
    %c0_i32_1 = arith.constant 0 : i32
    return %c0_i32, %c0_i32_0 : i32, i32
  }
  func.func @transform_11(%arg0: i32) -> (i32, i32) {
    %c0_i32 = arith.constant 0 : i32
    %c0_i32_0 = arith.constant 0 : i32
    %c0_i32_1 = arith.constant 0 : i32
    return %c0_i32, %c0_i32_0 : i32, i32
  }
  func.func @transform_12(%arg0: i32) -> (i32, i32) {
    %c0_i32 = arith.constant 0 : i32
    %c0_i32_0 = arith.constant 0 : i32
    %c0_i32_1 = arith.constant 0 : i32
    return %c0_i32, %c0_i32_0 : i32, i32
  }
  func.func @transform_13(%arg0: i32) -> (i32, i32, i32, i32) {
    %c0_i32 = arith.constant 0 : i32
    %c0_i32_0 = arith.constant 0 : i32
    %c0_i32_1 = arith.constant 0 : i32
    %c0_i32_2 = arith.constant 0 : i32
    return %arg0, %c0_i32, %c0_i32_0, %c0_i32_1 : i32, i32, i32, i32
  }
  func.func @transform_14(%arg0: i32) -> (i32, i32, i32, i32) {
    %c0_i32 = arith.constant 0 : i32
    %c0_i32_0 = arith.constant 0 : i32
    %c0_i32_1 = arith.constant 0 : i32
    %c0_i32_2 = arith.constant 0 : i32
    return %arg0, %c0_i32, %c0_i32_0, %c0_i32_1 : i32, i32, i32, i32
  }
  func.func @transform_15(%arg0: i32) -> (i32, i32, i32, i32) {
    %c0_i32 = arith.constant 0 : i32
    %c0_i32_0 = arith.constant 0 : i32
    %c0_i32_1 = arith.constant 0 : i32
    %c0_i32_2 = arith.constant 0 : i32
    return %arg0, %c0_i32, %c0_i32_0, %c0_i32_1 : i32, i32, i32, i32
  }
  func.func @transform_16(%arg0: i32) -> (i32, i32, i32, i32) {
    %c0_i32 = arith.constant 0 : i32
    %c0_i32_0 = arith.constant 0 : i32
    %c0_i32_1 = arith.constant 0 : i32
    %c0_i32_2 = arith.constant 0 : i32
    return %arg0, %c0_i32, %c0_i32_0, %c0_i32_1 : i32, i32, i32, i32
  }
  func.func @transform_17(%arg0: i32) -> (i32, i32, i32, i32) {
    %c0_i32 = arith.constant 0 : i32
    %c0_i32_0 = arith.constant 0 : i32
    %c0_i32_1 = arith.constant 0 : i32
    %c0_i32_2 = arith.constant 0 : i32
    return %arg0, %c0_i32, %c0_i32_0, %c0_i32_1 : i32, i32, i32, i32
  }
  func.func @transform_18(%arg0: i32) -> (i32, i32, i32, i32) {
    %c0_i32 = arith.constant 0 : i32
    %c0_i32_0 = arith.constant 0 : i32
    %c0_i32_1 = arith.constant 0 : i32
    %c0_i32_2 = arith.constant 0 : i32
    return %arg0, %c0_i32, %c0_i32_0, %c0_i32_1 : i32, i32, i32, i32
  }
  func.func @transform_19(%arg0: i32) -> (i32, i32, i32, i32) {
    %c0_i32 = arith.constant 0 : i32
    %c0_i32_0 = arith.constant 0 : i32
    %c0_i32_1 = arith.constant 0 : i32
    %c0_i32_2 = arith.constant 0 : i32
    return %arg0, %c0_i32, %c0_i32_0, %c0_i32_1 : i32, i32, i32, i32
  }
  func.func @transform_20(%arg0: i32) -> (i32, i32, i32, i32) {
    %c0_i32 = arith.constant 0 : i32
    %c0_i32_0 = arith.constant 0 : i32
    %c0_i32_1 = arith.constant 0 : i32
    %c0_i32_2 = arith.constant 0 : i32
    return %arg0, %c0_i32, %c0_i32_0, %c0_i32_1 : i32, i32, i32, i32
  }
  func.func @transform_21(%arg0: i32) -> (i32, i32, i32) {
    %c0_i32 = arith.constant 0 : i32
    %c0_i32_0 = arith.constant 0 : i32
    %c0_i32_1 = arith.constant 0 : i32
    return %arg0, %c0_i32, %c0_i32_0 : i32, i32, i32
  }
  func.func @transform_22(%arg0: i32) -> (i32, i32, i32) {
    %c0_i32 = arith.constant 0 : i32
    %c0_i32_0 = arith.constant 0 : i32
    %c0_i32_1 = arith.constant 0 : i32
    return %arg0, %c0_i32, %c0_i32_0 : i32, i32, i32
  }
  func.func @transform_23(%arg0: i32) -> (i32, i32, i32) {
    %c0_i32 = arith.constant 0 : i32
    %c0_i32_0 = arith.constant 0 : i32
    %c0_i32_1 = arith.constant 0 : i32
    return %arg0, %c0_i32, %c0_i32_0 : i32, i32, i32
  }
  func.func @transform_24(%arg0: i32) -> (i32, i32, i32) {
    %c0_i32 = arith.constant 0 : i32
    %c0_i32_0 = arith.constant 0 : i32
    %c0_i32_1 = arith.constant 0 : i32
    return %arg0, %c0_i32, %c0_i32_0 : i32, i32, i32
  }
  func.func @transform_25(%arg0: i32) -> (i32, i32, i32) {
    %c0_i32 = arith.constant 0 : i32
    %c0_i32_0 = arith.constant 0 : i32
    %c0_i32_1 = arith.constant 0 : i32
    return %arg0, %c0_i32, %c0_i32_0 : i32, i32, i32
  }
  func.func @transform_26(%arg0: i32) -> (i32, i32, i32) {
    %c0_i32 = arith.constant 0 : i32
    %c0_i32_0 = arith.constant 0 : i32
    %c0_i32_1 = arith.constant 0 : i32
    return %arg0, %c0_i32, %c0_i32_0 : i32, i32, i32
  }
}

</mosaic_0001>

<llo_original>
// kernel: tscd_forward.1
$region0: #{tscd_forward.1}
  #allocation0 [shape = 'u32[]', space=smem, size = 0x4, offset = 0x4, fixed_abs, tag = 'smem constant byte address 0x4 - core index']
  #allocation1 [shape = 'u32[144,128]{1,0:T(1,128)}', space=vmem, size = 0x12000, scoped, tag = 'internal scratch']
  %s0 = inlined_call_operand.vmem [shape: f32[16], index: 0, kind: input, shape index: {}]
  %s1 = inlined_call_operand.vmem [shape: f32[4], index: 1, kind: input, shape index: {}]
  %s2 = inlined_call_operand.vmem [shape: bf16[2,256,16], index: 2, kind: input, shape index: {}]
  %s3 = inlined_call_operand.vmem [shape: bf16[2,64,32], index: 3, kind: input, shape index: {}]
  %s4 = inlined_call_operand.vmem [shape: bf16[2,16,48], index: 4, kind: input, shape index: {}]
  %s5 = inlined_call_operand.vmem [shape: bf16[2,4,64], index: 5, kind: input, shape index: {}]
  %s6 = inlined_call_operand.vmem [shape: f32[1,256], index: 6, kind: input, shape index: {}]
  %s7 = inlined_call_operand.vmem [shape: f32[1,16], index: 7, kind: input, shape index: {}]
  %s8 = inlined_call_operand.vmem [shape: f32[16,4], index: 8, kind: input, shape index: {}]
  %s9 = inlined_call_operand.vmem [shape: f32[32,4], index: 9, kind: input, shape index: {}]
  %s10 = inlined_call_operand.vmem [shape: f32[48,4], index: 10, kind: input, shape index: {}]
  %s11 = inlined_call_operand.vmem [shape: f32[1,4], index: 11, kind: input, shape index: {}]
  %s12 = inlined_call_operand.vmem [shape: f32[64,4], index: 12, kind: input, shape index: {}]
  %s13 = inlined_call_operand.vmem [shape: bf16[2,1,256,256], index: 13, kind: input, shape index: {}]
  %s14 = inlined_call_operand.vmem [shape: bf16[2,1,256,256], index: 14, kind: input, shape index: {}]
  %s15 = inlined_call_operand.vmem [shape: bf16[2,2,64,64], index: 15, kind: input, shape index: {}]
  %s16 = inlined_call_operand.vmem [shape: bf16[2,2,64,64], index: 16, kind: input, shape index: {}]
  %s17 = inlined_call_operand.vmem [shape: bf16[2,5,16,16], index: 17, kind: input, shape index: {}]
  %s18 = inlined_call_operand.vmem [shape: bf16[2,5,16,16], index: 18, kind: input, shape index: {}]
  %s19 = inlined_call_operand.vmem [shape: bf16[2,8,4,4], index: 19, kind: input, shape index: {}]
  %s20 = inlined_call_operand.vmem [shape: bf16[2,8,4,4], index: 20, kind: input, shape index: {}]
  %s21 = inlined_call_operand.hbm [shape: f32[2,1,4], index: 21, kind: output, shape index: {0}]
  %s22 = inlined_call_operand.hbm [shape: f32[2,1,4], index: 22, kind: output, shape index: {1}]
  %s23 = inlined_call_operand.hbm [shape: f32[2,256,256], index: 23, kind: output, shape index: {2}]
  %s24 = inlined_call_operand.hbm [shape: f32[2,64,64], index: 24, kind: output, shape index: {3}]
  %s25 = inlined_call_operand.hbm [shape: f32[2,16,16], index: 25, kind: output, shape index: {4}]
  %s26 = inlined_call_operand.hbm [shape: f32[2,4,4], index: 26, kind: output, shape index: {5}]
  %27 = xla_tuple %s21, %s22, %s23, %s24, %s25, %s26
  %s28 = sld [smem:[#allocation0]]
  $region165: #{tscd_forward.1} parent=0
    _
  %s30 = ssub.s32 1, %s28
  %s31 = scalar_select 0, %s30, %s28
  $region1: #{tscd_forward.1} parent=0
    #allocation2 [shape = 'u8[512]{0}', space=smem, size = 0x200, scoped, tag = 'input window, operand 0, single buffered']
    #allocation3 [shape = 's32[2]{0}', space=sflag, size = 0x8, scoped, tag = 'scoped memory for tscd_forward.1']
    #allocation4 [shape = 's32[2]{0}', space=sflag, size = 0x8, scoped, tag = 'scoped memory for tscd_forward.1']
    #allocation5 [shape = 'u8[512]{0}', space=smem, size = 0x200, scoped, tag = 'input window, operand 1, single buffered']
    #allocation6 [shape = 's32[1]{0}', space=sflag, size = 0x4, scoped, tag = 'scoped memory for tscd_forward.1']
    #allocation7 [shape = 'u8[1024]{0}', space=vmem, size = 0x400, scoped, tag = 'output window, operand 0']
    #allocation8 [shape = 'u8[1024]{0}', space=vmem, size = 0x400, scoped, tag = 'output window, operand 1']
    #allocation9 [shape = 's32[2]{0}', space=sflag, size = 0x8, scoped, tag = 'scoped memory for tscd_forward.1']
    #allocation10 [shape = 'u8[524288]{0}', space=vmem, size = 0x80000, scoped, tag = 'output window, operand 2']
    #allocation11 [shape = 'u8[65536]{0}', space=vmem, size = 0x10000, scoped, tag = 'output window, operand 3']
    #allocation12 [shape = 's32[2]{0}', space=sflag, size = 0x8, scoped, tag = 'scoped memory for tscd_forward.1']
    #allocation13 [shape = 'u8[16384]{0}', space=vmem, size = 0x4000, scoped, tag = 'output window, operand 4']
    #allocation14 [shape = 'u8[4096]{0}', space=vmem, size = 0x1000, scoped, tag = 'output window, operand 5']
    #allocation15 [shape = 's32[2]{0}', space=sflag, size = 0x8, scoped, tag = 'scoped memory for tscd_forward.1']
    %32 = vsyncpa [#allocation4], 0
    %33 = vsyncpa [#allocation6], 0
    %34 = vsyncpa [#allocation3], 0
    %s35 = scalar_lea.sflag [#allocation3], 1
    %36 = vsyncpa %s35, 0
    %37 = vsyncpa [#allocation9], 0
    %s38 = scalar_lea.sflag [#allocation9], 1
    %39 = vsyncpa %s38, 0
    %40 = vsyncpa [#allocation12], 0
    %s41 = scalar_lea.sflag [#allocation12], 1
    %42 = vsyncpa %s41, 0
    %43 = vsyncpa [#allocation15], 0
    %s44 = scalar_lea.sflag [#allocation15], 1
    %45 = vsyncpa %s44, 0
    loop: start=0, step=1, limit=4
    $region2: #{tscd_forward.1} parent=1 // loop_pre_header
      _
    $region3: #{tscd_forward.1} parent=1 // loop_header
      %s47 = sphi 0, %s51
      %p48 = scmp.ge.s32.totalorder %s47, 4
      %s55 = sphi 0, %s55
      %s57 = sphi 0, %s55
      %s58 = sphi 0, %s57
      %s72 = sphi 0, %s58
      %s76 = sphi 0, %s76
      %s78 = sphi 0, %s76
      %s79 = sphi 0, %s78
      %s93 = sphi 0, %s79
      %s99 = sphi 0, %s101
      %s102 = sphi 0, %s99
      %s103 = sphi 0, %s102
      %s119 = sphi 0, %s103
      %s125 = sphi 0, %s127
      %s128 = sphi 0, %s125
      %s129 = sphi 0, %s128
      %s145 = sphi 0, %s129
      %s151 = sphi 0, %s153
      %s154 = sphi 0, %s151
      %s155 = sphi 0, %s154
      %s171 = sphi 0, %s155
      %s177 = sphi 0, %s179
      %s180 = sphi 0, %s177
      %s181 = sphi 0, %s180
      %s197 = sphi 0, %s181
      %s201 = sphi 0, %s201
      %s203 = sphi 0, %s201
      %s204 = sphi 0, %s203
      %s218 = sphi 0, %s204
      %s222 = sphi 0, %s222
      %s224 = sphi 0, %s222
      %s225 = sphi 0, %s224
      %s239 = sphi 0, %s225
      %s243 = sphi 0, %s243
      %s245 = sphi 0, %s243
      %s246 = sphi 0, %s245
      %s260 = sphi 0, %s246
      %s264 = sphi 0, %s264
      %s266 = sphi 0, %s264
      %s267 = sphi 0, %s266
      %s281 = sphi 0, %s267
      %s285 = sphi 0, %s285
      %s287 = sphi 0, %s285
      %s288 = sphi 0, %s287
      %s302 = sphi 0, %s288
      %s306 = sphi 0, %s306
      %s308 = sphi 0, %s306
      %s309 = sphi 0, %s308
      %s323 = sphi 0, %s309
      %s327 = sphi 0, %s327
      %s329 = sphi 0, %s327
      %s330 = sphi 0, %s329
      %s344 = sphi 0, %s330
      %s350 = sphi 0, %s352
      %s353 = sphi 0, %s350
      %s354 = sphi 0, %s353
      %s370 = sphi 0, %s354
      %s376 = sphi 0, %s378
      %s379 = sphi 0, %s376
      %s380 = sphi 0, %s379
      %s396 = sphi 0, %s380
      %s402 = sphi 0, %s404
      %s405 = sphi 0, %s402
      %s406 = sphi 0, %s405
      %s422 = sphi 0, %s406
      %s428 = sphi 0, %s430
      %s431 = sphi 0, %s428
      %s432 = sphi 0, %s431
      %s448 = sphi 0, %s432
      %s454 = sphi 0, %s456
      %s457 = sphi 0, %s454
      %s458 = sphi 0, %s457
      %s474 = sphi 0, %s458
      %s480 = sphi 0, %s482
      %s483 = sphi 0, %s480
      %s484 = sphi 0, %s483
      %s500 = sphi 0, %s484
      %s506 = sphi 0, %s508
      %s509 = sphi 0, %s506
      %s510 = sphi 0, %s509
      %s526 = sphi 0, %s510
      %s532 = sphi 0, %s534
      %s535 = sphi 0, %s532
      %s536 = sphi 0, %s535
      %s552 = sphi 0, %s536
      %s558 = sphi 0, %s560
      %s561 = sphi 0, %s558
      %s562 = sphi 0, %s561
      %s578 = sphi 0, %s562
      %s584 = sphi 0, %s586
      %s587 = sphi 0, %s584
      %s588 = sphi 0, %s587
      %s604 = sphi 0, %s588
      %s610 = sphi 0, %s612
      %s613 = sphi 0, %s610
      %s614 = sphi 0, %s613
      %s630 = sphi 0, %s614
      %s636 = sphi 0, %s638
      %s639 = sphi 0, %s636
      %s640 = sphi 0, %s639
      %s656 = sphi 0, %s640
      %s662 = sphi 0, %s664
      %s665 = sphi 0, %s662
      %s666 = sphi 0, %s665
      %s682 = sphi 0, %s666
      %s688 = sphi 0, %s690
      %s691 = sphi 0, %s688
      %s692 = sphi 0, %s691
      %s708 = sphi 0, %s692
    $region4: #{tscd_forward.1} parent=1 // loop_header_branch
      %50 = sbr.rel (%p48) target = $region8
    $region5: #{tscd_forward.1} parent=1 // loop_body
      %s52 = ssub.s32 %s47, 1
      %s53 = ssub.s32 %s47, 2
      %s54 = sadd.s32 %s47, 1
      %s56 = sadd.s32 %s55, 1
      %p59 = scmp.eq.s32.totalorder %s47, 1
      %p60 = scmp.ne.s32.totalorder %s55, %s57
      %p61 = scmp.eq.s32.totalorder %s47, 0
      %p62 = por %p60, %p61
      %p63 = scmp.ne.s32.totalorder %s55, %s57
      %p64 = scmp.eq.s32.totalorder %s52, 1
      %p65 = por %p63, %p64
      %p66 = scmp.ne.s32.totalorder %s57, %s58
      %p67 = scmp.eq.s32.totalorder %s52, 0
      %p68 = por %p66, %p67
      %p69 = scmp.ne.s32.totalorder %s57, %s58
      %p70 = scmp.eq.s32.totalorder %s53, 1
      %p71 = por %p69, %p70
      %p73 = scmp.ne.s32.totalorder %s58, %s72
      %p74 = scmp.eq.s32.totalorder %s53, 0
      %p75 = por %p73, %p74
      %s77 = sadd.s32 %s76, 1
      %p80 = scmp.eq.s32.totalorder %s47, 1
      %p81 = scmp.ne.s32.totalorder %s76, %s78
      %p82 = scmp.eq.s32.totalorder %s47, 0
      %p83 = por %p81, %p82
      %p84 = scmp.ne.s32.totalorder %s76, %s78
      %p85 = scmp.eq.s32.totalorder %s52, 1
      %p86 = por %p84, %p85
      %p87 = scmp.ne.s32.totalorder %s78, %s79
      %p88 = scmp.eq.s32.totalorder %s52, 0
      %p89 = por %p87, %p88
      %p90 = scmp.ne.s32.totalorder %s78, %s79
      %p91 = scmp.eq.s32.totalorder %s53, 1
      %p92 = por %p90, %p91
      %p94 = scmp.ne.s32.totalorder %s79, %s93
      %p95 = scmp.eq.s32.totalorder %s53, 0
      %p96 = por %p94, %p95
      %s97 = ssub.s32 %s47, %s54
      %p98 = scmp.eq.s32.totalorder %s97, 0
      %s100 = sadd.s32 %s99, 1
      %s101 = scalar_select %p98, %s99, %s100
      %p104 = pneg %p98
      %p105 = scmp.eq.s32.totalorder %s47, 1
      %p106 = por %p104, %p105
      %p107 = scmp.ne.s32.totalorder %s99, %s102
      %p108 = scmp.eq.s32.totalorder %s47, 0
      %p109 = por %p107, %p108
      %p110 = scmp.ne.s32.totalorder %s99, %s102
      %p111 = scmp.eq.s32.totalorder %s52, 1
      %p112 = por %p110, %p111
      %p113 = scmp.ne.s32.totalorder %s102, %s103
      %p114 = scmp.eq.s32.totalorder %s52, 0
      %p115 = por %p113, %p114
      %p116 = scmp.ne.s32.totalorder %s102, %s103
      %p117 = scmp.eq.s32.totalorder %s53, 1
      %p118 = por %p116, %p117
      %p120 = scmp.ne.s32.totalorder %s103, %s119
      %p121 = scmp.eq.s32.totalorder %s53, 0
      %p122 = por %p120, %p121
      %s123 = ssub.s32 %s47, %s54
      %p124 = scmp.eq.s32.totalorder %s123, 0
      %s126 = sadd.s32 %s125, 1
      %s127 = scalar_select %p124, %s125, %s126
      %p130 = pneg %p124
      %p131 = scmp.eq.s32.totalorder %s47, 1
      %p132 = por %p130, %p131
      %p133 = scmp.ne.s32.totalorder %s125, %s128
      %p134 = scmp.eq.s32.totalorder %s47, 0
      %p135 = por %p133, %p134
      %p136 = scmp.ne.s32.totalorder %s125, %s128
      %p137 = scmp.eq.s32.totalorder %s52, 1
      %p138 = por %p136, %p137
      %p139 = scmp.ne.s32.totalorder %s128, %s129
      %p140 = scmp.eq.s32.totalorder %s52, 0
      %p141 = por %p139, %p140
      %p142 = scmp.ne.s32.totalorder %s128, %s129
      %p143 = scmp.eq.s32.totalorder %s53, 1
      %p144 = por %p142, %p143
      %p146 = scmp.ne.s32.totalorder %s129, %s145
      %p147 = scmp.eq.s32.totalorder %s53, 0
      %p148 = por %p146, %p147
      %s149 = ssub.s32 %s47, %s54
      %p150 = scmp.eq.s32.totalorder %s149, 0
      %s152 = sadd.s32 %s151, 1
      %s153 = scalar_select %p150, %s151, %s152
      %p156 = pneg %p150
      %p157 = scmp.eq.s32.totalorder %s47, 1
      %p158 = por %p156, %p157
      %p159 = scmp.ne.s32.totalorder %s151, %s154
      %p160 = scmp.eq.s32.totalorder %s47, 0
      %p161 = por %p159, %p160
      %p162 = scmp.ne.s32.totalorder %s151, %s154
      %p163 = scmp.eq.s32.totalorder %s52, 1
      %p164 = por %p162, %p163
      %p165 = scmp.ne.s32.totalorder %s154, %s155
      %p166 = scmp.eq.s32.totalorder %s52, 0
      %p167 = por %p165, %p166
      %p168 = scmp.ne.s32.totalorder %s154, %s155
      %p169 = scmp.eq.s32.totalorder %s53, 1
      %p170 = por %p168, %p169
      %p172 = scmp.ne.s32.totalorder %s155, %s171
      %p173 = scmp.eq.s32.totalorder %s53, 0
      %p174 = por %p172, %p173
      %s175 = ssub.s32 %s47, %s54
      %p176 = scmp.eq.s32.totalorder %s175, 0
      %s178 = sadd.s32 %s177, 1
      %s179 = scalar_select %p176, %s177, %s178
      %p182 = pneg %p176
      %p183 = scmp.eq.s32.totalorder %s47, 1
      %p184 = por %p182, %p183
      %p185 = scmp.ne.s32.totalorder %s177, %s180
      %p186 = scmp.eq.s32.totalorder %s47, 0
      %p187 = por %p185, %p186
      %p188 = scmp.ne.s32.totalorder %s177, %s180
      %p189 = scmp.eq.s32.totalorder %s52, 1
      %p190 = por %p188, %p189
      %p191 = scmp.ne.s32.totalorder %s180, %s181
      %p192 = scmp.eq.s32.totalorder %s52, 0
      %p193 = por %p191, %p192
      %p194 = scmp.ne.s32.totalorder %s180, %s181
      %p195 = scmp.eq.s32.totalorder %s53, 1
      %p196 = por %p194, %p195
      %p198 = scmp.ne.s32.totalorder %s181, %s197
      %p199 = scmp.eq.s32.totalorder %s53, 0
      %p200 = por %p198, %p199
      %s202 = sadd.s32 %s201, 1
      %p205 = scmp.eq.s32.totalorder %s47, 1
      %p206 = scmp.ne.s32.totalorder %s201, %s203
      %p207 = scmp.eq.s32.totalorder %s47, 0
      %p208 = por %p206, %p207
      %p209 = scmp.ne.s32.totalorder %s201, %s203
      %p210 = scmp.eq.s32.totalorder %s52, 1
      %p211 = por %p209, %p210
      %p212 = scmp.ne.s32.totalorder %s203, %s204
      %p213 = scmp.eq.s32.totalorder %s52, 0
      %p214 = por %p212, %p213
      %p215 = scmp.ne.s32.totalorder %s203, %s204
      %p216 = scmp.eq.s32.totalorder %s53, 1
      %p217 = por %p215, %p216
      %p219 = scmp.ne.s32.totalorder %s204, %s218
      %p220 = scmp.eq.s32.totalorder %s53, 0
      %p221 = por %p219, %p220
      %s223 = sadd.s32 %s222, 1
      %p226 = scmp.eq.s32.totalorder %s47, 1
      %p227 = scmp.ne.s32.totalorder %s222, %s224
      %p228 = scmp.eq.s32.totalorder %s47, 0
      %p229 = por %p227, %p228
      %p230 = scmp.ne.s32.totalorder %s222, %s224
      %p231 = scmp.eq.s32.totalorder %s52, 1
      %p232 = por %p230, %p231
      %p233 = scmp.ne.s32.totalorder %s224, %s225
      %p234 = scmp.eq.s32.totalorder %s52, 0
      %p235 = por %p233, %p234
      %p236 = scmp.ne.s32.totalorder %s224, %s225
      %p237 = scmp.eq.s32.totalorder %s53, 1
      %p238 = por %p236, %p237
      %p240 = scmp.ne.s32.totalorder %s225, %s239
      %p241 = scmp.eq.s32.totalorder %s53, 0
      %p242 = por %p240, %p241
      %s244 = sadd.s32 %s243, 1
      %p247 = scmp.eq.s32.totalorder %s47, 1
      %p248 = scmp.ne.s32.totalorder %s243, %s245
      %p249 = scmp.eq.s32.totalorder %s47, 0
      %p250 = por %p248, %p249
      %p251 = scmp.ne.s32.totalorder %s243, %s245
      %p252 = scmp.eq.s32.totalorder %s52, 1
      %p253 = por %p251, %p252
      %p254 = scmp.ne.s32.totalorder %s245, %s246
      %p255 = scmp.eq.s32.totalorder %s52, 0
      %p256 = por %p254, %p255
      %p257 = scmp.ne.s32.totalorder %s245, %s246
      %p258 = scmp.eq.s32.totalorder %s53, 1
      %p259 = por %p257, %p258
      %p261 = scmp.ne.s32.totalorder %s246, %s260
      %p262 = scmp.eq.s32.totalorder %s53, 0
      %p263 = por %p261, %p262
      %s265 = sadd.s32 %s264, 1
      %p268 = scmp.eq.s32.totalorder %s47, 1
      %p269 = scmp.ne.s32.totalorder %s264, %s266
      %p270 = scmp.eq.s32.totalorder %s47, 0
      %p271 = por %p269, %p270
      %p272 = scmp.ne.s32.totalorder %s264, %s266
      %p273 = scmp.eq.s32.totalorder %s52, 1
      %p274 = por %p272, %p273
      %p275 = scmp.ne.s32.totalorder %s266, %s267
      %p276 = scmp.eq.s32.totalorder %s52, 0
      %p277 = por %p275, %p276
      %p278 = scmp.ne.s32.totalorder %s266, %s267
      %p279 = scmp.eq.s32.totalorder %s53, 1
      %p280 = por %p278, %p279
      %p282 = scmp.ne.s32.totalorder %s267, %s281
      %p283 = scmp.eq.s32.totalorder %s53, 0
      %p284 = por %p282, %p283
      %s286 = sadd.s32 %s285, 1
      %p289 = scmp.eq.s32.totalorder %s47, 1
      %p290 = scmp.ne.s32.totalorder %s285, %s287
      %p291 = scmp.eq.s32.totalorder %s47, 0
      %p292 = por %p290, %p291
      %p293 = scmp.ne.s32.totalorder %s285, %s287
      %p294 = scmp.eq.s32.totalorder %s52, 1
      %p295 = por %p293, %p294
      %p296 = scmp.ne.s32.totalorder %s287, %s288
      %p297 = scmp.eq.s32.totalorder %s52, 0
      %p298 = por %p296, %p297
      %p299 = scmp.ne.s32.totalorder %s287, %s288
      %p300 = scmp.eq.s32.totalorder %s53, 1
      %p301 = por %p299, %p300
      %p303 = scmp.ne.s32.totalorder %s288, %s302
      %p304 = scmp.eq.s32.totalorder %s53, 0
      %p305 = por %p303, %p304
      %s307 = sadd.s32 %s306, 1
      %p310 = scmp.eq.s32.totalorder %s47, 1
      %p311 = scmp.ne.s32.totalorder %s306, %s308
      %p312 = scmp.eq.s32.totalorder %s47, 0
      %p313 = por %p311, %p312
      %p314 = scmp.ne.s32.totalorder %s306, %s308
      %p315 = scmp.eq.s32.totalorder %s52, 1
      %p316 = por %p314, %p315
      %p317 = scmp.ne.s32.totalorder %s308, %s309
      %p318 = scmp.eq.s32.totalorder %s52, 0
      %p319 = por %p317, %p318
      %p320 = scmp.ne.s32.totalorder %s308, %s309
      %p321 = scmp.eq.s32.totalorder %s53, 1
      %p322 = por %p320, %p321
      %p324 = scmp.ne.s32.totalorder %s309, %s323
      %p325 = scmp.eq.s32.totalorder %s53, 0
      %p326 = por %p324, %p325
      %s328 = sadd.s32 %s327, 1
      %p331 = scmp.eq.s32.totalorder %s47, 1
      %p332 = scmp.ne.s32.totalorder %s327, %s329
      %p333 = scmp.eq.s32.totalorder %s47, 0
      %p334 = por %p332, %p333
      %p335 = scmp.ne.s32.totalorder %s327, %s329
      %p336 = scmp.eq.s32.totalorder %s52, 1
      %p337 = por %p335, %p336
      %p338 = scmp.ne.s32.totalorder %s329, %s330
      %p339 = scmp.eq.s32.totalorder %s52, 0
      %p340 = por %p338, %p339
      %p341 = scmp.ne.s32.totalorder %s329, %s330
      %p342 = scmp.eq.s32.totalorder %s53, 1
      %p343 = por %p341, %p342
      %p345 = scmp.ne.s32.totalorder %s330, %s344
      %p346 = scmp.eq.s32.totalorder %s53, 0
      %p347 = por %p345, %p346
      %s348 = ssub.s32 %s47, %s54
      %p349 = scmp.eq.s32.totalorder %s348, 0
      %s351 = sadd.s32 %s350, 1
      %s352 = scalar_select %p349, %s350, %s351
      %p355 = pneg %p349
      %p356 = scmp.eq.s32.totalorder %s47, 1
      %p357 = por %p355, %p356
      %p358 = scmp.ne.s32.totalorder %s350, %s353
      %p359 = scmp.eq.s32.totalorder %s47, 0
      %p360 = por %p358, %p359
      %p361 = scmp.ne.s32.totalorder %s350, %s353
      %p362 = scmp.eq.s32.totalorder %s52, 1
      %p363 = por %p361, %p362
      %p364 = scmp.ne.s32.totalorder %s353, %s354
      %p365 = scmp.eq.s32.totalorder %s52, 0
      %p366 = por %p364, %p365
      %p367 = scmp.ne.s32.totalorder %s353, %s354
      %p368 = scmp.eq.s32.totalorder %s53, 1
      %p369 = por %p367, %p368
      %p371 = scmp.ne.s32.totalorder %s354, %s370
      %p372 = scmp.eq.s32.totalorder %s53, 0
      %p373 = por %p371, %p372
      %s374 = ssub.s32 %s47, %s54
      %p375 = scmp.eq.s32.totalorder %s374, 0
      %s377 = sadd.s32 %s376, 1
      %s378 = scalar_select %p375, %s376, %s377
      %p381 = pneg %p375
      %p382 = scmp.eq.s32.totalorder %s47, 1
      %p383 = por %p381, %p382
      %p384 = scmp.ne.s32.totalorder %s376, %s379
      %p385 = scmp.eq.s32.totalorder %s47, 0
      %p386 = por %p384, %p385
      %p387 = scmp.ne.s32.totalorder %s376, %s379
      %p388 = scmp.eq.s32.totalorder %s52, 1
      %p389 = por %p387, %p388
      %p390 = scmp.ne.s32.totalorder %s379, %s380
      %p391 = scmp.eq.s32.totalorder %s52, 0
      %p392 = por %p390, %p391
      %p393 = scmp.ne.s32.totalorder %s379, %s380
      %p394 = scmp.eq.s32.totalorder %s53, 1
      %p395 = por %p393, %p394
      %p397 = scmp.ne.s32.totalorder %s380, %s396
      %p398 = scmp.eq.s32.totalorder %s53, 0
      %p399 = por %p397, %p398
      %s400 = ssub.s32 %s47, %s54
      %p401 = scmp.eq.s32.totalorder %s400, 0
      %s403 = sadd.s32 %s402, 1
      %s404 = scalar_select %p401, %s402, %s403
      %p407 = pneg %p401
      %p408 = scmp.eq.s32.totalorder %s47, 1
      %p409 = por %p407, %p408
      %p410 = scmp.ne.s32.totalorder %s402, %s405
      %p411 = scmp.eq.s32.totalorder %s47, 0
      %p412 = por %p410, %p411
      %p413 = scmp.ne.s32.totalorder %s402, %s405
      %p414 = scmp.eq.s32.totalorder %s52, 1
      %p415 = por %p413, %p414
      %p416 = scmp.ne.s32.totalorder %s405, %s406
      %p417 = scmp.eq.s32.totalorder %s52, 0
      %p418 = por %p416, %p417
      %p419 = scmp.ne.s32.totalorder %s405, %s406
      %p420 = scmp.eq.s32.totalorder %s53, 1
      %p421 = por %p419, %p420
      %p423 = scmp.ne.s32.totalorder %s406, %s422
      %p424 = scmp.eq.s32.totalorder %s53, 0
      %p425 = por %p423, %p424
      %s426 = ssub.s32 %s47, %s54
      %p427 = scmp.eq.s32.totalorder %s426, 0
      %s429 = sadd.s32 %s428, 1
      %s430 = scalar_select %p427, %s428, %s429
      %p433 = pneg %p427
      %p434 = scmp.eq.s32.totalorder %s47, 1
      %p435 = por %p433, %p434
      %p436 = scmp.ne.s32.totalorder %s428, %s431
      %p437 = scmp.eq.s32.totalorder %s47, 0
      %p438 = por %p436, %p437
      %p439 = scmp.ne.s32.totalorder %s428, %s431
      %p440 = scmp.eq.s32.totalorder %s52, 1
      %p441 = por %p439, %p440
      %p442 = scmp.ne.s32.totalorder %s431, %s432
      %p443 = scmp.eq.s32.totalorder %s52, 0
      %p444 = por %p442, %p443
      %p445 = scmp.ne.s32.totalorder %s431, %s432
      %p446 = scmp.eq.s32.totalorder %s53, 1
      %p447 = por %p445, %p446
      %p449 = scmp.ne.s32.totalorder %s432, %s448
      %p450 = scmp.eq.s32.totalorder %s53, 0
      %p451 = por %p449, %p450
      %s452 = ssub.s32 %s47, %s54
      %p453 = scmp.eq.s32.totalorder %s452, 0
      %s455 = sadd.s32 %s454, 1
      %s456 = scalar_select %p453, %s454, %s455
      %p459 = pneg %p453
      %p460 = scmp.eq.s32.totalorder %s47, 1
      %p461 = por %p459, %p460
      %p462 = scmp.ne.s32.totalorder %s454, %s457
      %p463 = scmp.eq.s32.totalorder %s47, 0
      %p464 = por %p462, %p463
      %p465 = scmp.ne.s32.totalorder %s454, %s457
      %p466 = scmp.eq.s32.totalorder %s52, 1
      %p467 = por %p465, %p466
      %p468 = scmp.ne.s32.totalorder %s457, %s458
      %p469 = scmp.eq.s32.totalorder %s52, 0
      %p470 = por %p468, %p469
      %p471 = scmp.ne.s32.totalorder %s457, %s458
      %p472 = scmp.eq.s32.totalorder %s53, 1
      %p473 = por %p471, %p472
      %p475 = scmp.ne.s32.totalorder %s458, %s474
      %p476 = scmp.eq.s32.totalorder %s53, 0
      %p477 = por %p475, %p476
      %s478 = ssub.s32 %s47, %s54
      %p479 = scmp.eq.s32.totalorder %s478, 0
      %s481 = sadd.s32 %s480, 1
      %s482 = scalar_select %p479, %s480, %s481
      %p485 = pneg %p479
      %p486 = scmp.eq.s32.totalorder %s47, 1
      %p487 = por %p485, %p486
      %p488 = scmp.ne.s32.totalorder %s480, %s483
      %p489 = scmp.eq.s32.totalorder %s47, 0
      %p490 = por %p488, %p489
      %p491 = scmp.ne.s32.totalorder %s480, %s483
      %p492 = scmp.eq.s32.totalorder %s52, 1
      %p493 = por %p491, %p492
      %p494 = scmp.ne.s32.totalorder %s483, %s484
      %p495 = scmp.eq.s32.totalorder %s52, 0
      %p496 = por %p494, %p495
      %p497 = scmp.ne.s32.totalorder %s483, %s484
      %p498 = scmp.eq.s32.totalorder %s53, 1
      %p499 = por %p497, %p498
      %p501 = scmp.ne.s32.totalorder %s484, %s500
      %p502 = scmp.eq.s32.totalorder %s53, 0
      %p503 = por %p501, %p502
      %s504 = ssub.s32 %s47, %s54
      %p505 = scmp.eq.s32.totalorder %s504, 0
      %s507 = sadd.s32 %s506, 1
      %s508 = scalar_select %p505, %s506, %s507
      %p511 = pneg %p505
      %p512 = scmp.eq.s32.totalorder %s47, 1
      %p513 = por %p511, %p512
      %p514 = scmp.ne.s32.totalorder %s506, %s509
      %p515 = scmp.eq.s32.totalorder %s47, 0
      %p516 = por %p514, %p515
      %p517 = scmp.ne.s32.totalorder %s506, %s509
      %p518 = scmp.eq.s32.totalorder %s52, 1
      %p519 = por %p517, %p518
      %p520 = scmp.ne.s32.totalorder %s509, %s510
      %p521 = scmp.eq.s32.totalorder %s52, 0
      %p522 = por %p520, %p521
      %p523 = scmp.ne.s32.totalorder %s509, %s510
      %p524 = scmp.eq.s32.totalorder %s53, 1
      %p525 = por %p523, %p524
      %p527 = scmp.ne.s32.totalorder %s510, %s526
      %p528 = scmp.eq.s32.totalorder %s53, 0
      %p529 = por %p527, %p528
      %s530 = ssub.s32 %s47, %s54
      %p531 = scmp.eq.s32.totalorder %s530, 0
      %s533 = sadd.s32 %s532, 1
      %s534 = scalar_select %p531, %s532, %s533
      %p537 = pneg %p531
      %p538 = scmp.eq.s32.totalorder %s47, 1
      %p539 = por %p537, %p538
      %p540 = scmp.ne.s32.totalorder %s532, %s535
      %p541 = scmp.eq.s32.totalorder %s47, 0
      %p542 = por %p540, %p541
      %p543 = scmp.ne.s32.totalorder %s532, %s535
      %p544 = scmp.eq.s32.totalorder %s52, 1
      %p545 = por %p543, %p544
      %p546 = scmp.ne.s32.totalorder %s535, %s536
      %p547 = scmp.eq.s32.totalorder %s52, 0
      %p548 = por %p546, %p547
      %p549 = scmp.ne.s32.totalorder %s535, %s536
      %p550 = scmp.eq.s32.totalorder %s53, 1
      %p551 = por %p549, %p550
      %p553 = scmp.ne.s32.totalorder %s536, %s552
      %p554 = scmp.eq.s32.totalorder %s53, 0
      %p555 = por %p553, %p554
      %s556 = ssub.s32 %s47, %s54
      %p557 = scmp.eq.s32.totalorder %s556, 0
      %s559 = sadd.s32 %s558, 1
      %s560 = scalar_select %p557, %s558, %s559
      %p563 = pneg %p557
      %p564 = scmp.eq.s32.totalorder %s47, 1
      %p565 = por %p563, %p564
      %p566 = scmp.ne.s32.totalorder %s558, %s561
      %p567 = scmp.eq.s32.totalorder %s47, 0
      %p568 = por %p566, %p567
      %p569 = scmp.ne.s32.totalorder %s558, %s561
      %p570 = scmp.eq.s32.totalorder %s52, 1
      %p571 = por %p569, %p570
      %p572 = scmp.ne.s32.totalorder %s561, %s562
      %p573 = scmp.eq.s32.totalorder %s52, 0
      %p574 = por %p572, %p573
      %p575 = scmp.ne.s32.totalorder %s561, %s562
      %p576 = scmp.eq.s32.totalorder %s53, 1
      %p577 = por %p575, %p576
      %p579 = scmp.ne.s32.totalorder %s562, %s578
      %p580 = scmp.eq.s32.totalorder %s53, 0
      %p581 = por %p579, %p580
      %s582 = ssub.s32 %s47, %s54
      %p583 = scmp.eq.s32.totalorder %s582, 0
      %s585 = sadd.s32 %s584, 1
      %s586 = scalar_select %p583, %s584, %s585
      %p589 = pneg %p583
      %p590 = scmp.eq.s32.totalorder %s47, 1
      %p591 = por %p589, %p590
      %p592 = scmp.ne.s32.totalorder %s584, %s587
      %p593 = scmp.eq.s32.totalorder %s47, 0
      %p594 = por %p592, %p593
      %p595 = scmp.ne.s32.totalorder %s584, %s587
      %p596 = scmp.eq.s32.totalorder %s52, 1
      %p597 = por %p595, %p596
      %p598 = scmp.ne.s32.totalorder %s587, %s588
      %p599 = scmp.eq.s32.totalorder %s52, 0
      %p600 = por %p598, %p599
      %p601 = scmp.ne.s32.totalorder %s587, %s588
      %p602 = scmp.eq.s32.totalorder %s53, 1
      %p603 = por %p601, %p602
      %p605 = scmp.ne.s32.totalorder %s588, %s604
      %p606 = scmp.eq.s32.totalorder %s53, 0
      %p607 = por %p605, %p606
      %s608 = ssub.s32 %s47, %s54
      %p609 = scmp.eq.s32.totalorder %s608, 0
      %s611 = sadd.s32 %s610, 1
      %s612 = scalar_select %p609, %s610, %s611
      %p615 = pneg %p609
      %p616 = scmp.eq.s32.totalorder %s47, 1
      %p617 = por %p615, %p616
      %p618 = scmp.ne.s32.totalorder %s610, %s613
      %p619 = scmp.eq.s32.totalorder %s47, 0
      %p620 = por %p618, %p619
      %p621 = scmp.ne.s32.totalorder %s610, %s613
      %p622 = scmp.eq.s32.totalorder %s52, 1
      %p623 = por %p621, %p622
      %p624 = scmp.ne.s32.totalorder %s613, %s614
      %p625 = scmp.eq.s32.totalorder %s52, 0
      %p626 = por %p624, %p625
      %p627 = scmp.ne.s32.totalorder %s613, %s614
      %p628 = scmp.eq.s32.totalorder %s53, 1
      %p629 = por %p627, %p628
      %p631 = scmp.ne.s32.totalorder %s614, %s630
      %p632 = scmp.eq.s32.totalorder %s53, 0
      %p633 = por %p631, %p632
      %s634 = ssub.s32 %s47, %s54
      %p635 = scmp.eq.s32.totalorder %s634, 0
      %s637 = sadd.s32 %s636, 1
      %s638 = scalar_select %p635, %s636, %s637
      %p641 = pneg %p635
      %p642 = scmp.eq.s32.totalorder %s47, 1
      %p643 = por %p641, %p642
      %p644 = scmp.ne.s32.totalorder %s636, %s639
      %p645 = scmp.eq.s32.totalorder %s47, 0
      %p646 = por %p644, %p645
      %p647 = scmp.ne.s32.totalorder %s636, %s639
      %p648 = scmp.eq.s32.totalorder %s52, 1
      %p649 = por %p647, %p648
      %p650 = scmp.ne.s32.totalorder %s639, %s640
      %p651 = scmp.eq.s32.totalorder %s52, 0
      %p652 = por %p650, %p651
      %p653 = scmp.ne.s32.totalorder %s639, %s640
      %p654 = scmp.eq.s32.totalorder %s53, 1
      %p655 = por %p653, %p654
      %p657 = scmp.ne.s32.totalorder %s640, %s656
      %p658 = scmp.eq.s32.totalorder %s53, 0
      %p659 = por %p657, %p658
      %s660 = ssub.s32 %s47, %s54
      %p661 = scmp.eq.s32.totalorder %s660, 0
      %s663 = sadd.s32 %s662, 1
      %s664 = scalar_select %p661, %s662, %s663
      %p667 = pneg %p661
      %p668 = scmp.eq.s32.totalorder %s47, 1
      %p669 = por %p667, %p668
      %p670 = scmp.ne.s32.totalorder %s662, %s665
      %p671 = scmp.eq.s32.totalorder %s47, 0
      %p672 = por %p670, %p671
      %p673 = scmp.ne.s32.totalorder %s662, %s665
      %p674 = scmp.eq.s32.totalorder %s52, 1
      %p675 = por %p673, %p674
      %p676 = scmp.ne.s32.totalorder %s665, %s666
      %p677 = scmp.eq.s32.totalorder %s52, 0
      %p678 = por %p676, %p677
      %p679 = scmp.ne.s32.totalorder %s665, %s666
      %p680 = scmp.eq.s32.totalorder %s53, 1
      %p681 = por %p679, %p680
      %p683 = scmp.ne.s32.totalorder %s666, %s682
      %p684 = scmp.eq.s32.totalorder %s53, 0
      %p685 = por %p683, %p684
      %s686 = ssub.s32 %s47, %s54
      %p687 = scmp.eq.s32.totalorder %s686, 0
      %s689 = sadd.s32 %s688, 1
      %s690 = scalar_select %p687, %s688, %s689
      %p693 = pneg %p687
      %p694 = scmp.eq.s32.totalorder %s47, 1
      %p695 = por %p693, %p694
      %p696 = scmp.ne.s32.totalorder %s688, %s691
      %p697 = scmp.eq.s32.totalorder %s47, 0
      %p698 = por %p696, %p697
      %p699 = scmp.ne.s32.totalorder %s688, %s691
      %p700 = scmp.eq.s32.totalorder %s52, 1
      %p701 = por %p699, %p700
      %p702 = scmp.ne.s32.totalorder %s691, %s692
      %p703 = scmp.eq.s32.totalorder %s52, 0
      %p704 = por %p702, %p703
      %p705 = scmp.ne.s32.totalorder %s691, %s692
      %p706 = scmp.eq.s32.totalorder %s53, 1
      %p707 = por %p705, %p706
      %p709 = scmp.ne.s32.totalorder %s692, %s708
      %p710 = scmp.eq.s32.totalorder %s53, 0
      %p711 = por %p709, %p710
      %p712 = scmp.le.s32.totalorder 1, %s47
      %p713 = scmp.lt.s32.totalorder %s47, 3
      %p714 = pnand %p712, %p713
      %p715 = pneg %p714
      // Predicated region
      $region9: #{tscd_forward.1} parent=5 // pred_check
        _
      $region10: #{tscd_forward.1} parent=5 // pred_check_branch
        %717 = sbr.rel (%p714) target = $region12
      $region11: #{tscd_forward.1} parent=5 // pred_region
        %s718 = ssub.s32 %s47, 1
        // Predicated region
        $region13: #{tscd_forward.1} parent=11 // pred_check
          %p719 = pneg %p68
        $region14: #{tscd_forward.1} parent=11 // pred_check_branch
          %721 = sbr.rel (%p719) target = $region16
        $region15: #{tscd_forward.1} parent=11 // pred_region
          %s723 = ssub.s32 16, 16
          %724 = vsyncadd [#allocation4], %s723
          %s726 = sshll.u32 %s0, 4
          %s727 = int_to_ptr.vmem [resolvable:$true] %s726
          %729 = dma.vmem_to_smem %s727, 16, [#allocation2], [#allocation4]
        $region16: #{tscd_forward.1} parent=11 // pred_fallthru
          _
        // Predicated region
        $region17: #{tscd_forward.1} parent=11 // pred_check
          %p730 = pneg %p89
        $region18: #{tscd_forward.1} parent=11 // pred_check_branch
          %732 = sbr.rel (%p730) target = $region20
        $region19: #{tscd_forward.1} parent=11 // pred_region
          %s734 = ssub.s32 16, 16
          %735 = vsyncadd [#allocation6], %s734
          %s737 = sshll.u32 %s1, 4
          %s738 = int_to_ptr.vmem [resolvable:$true] %s737
          %740 = dma.vmem_to_smem %s738, 16, [#allocation5], [#allocation6]
        $region20: #{tscd_forward.1} parent=11 // pred_fallthru
          _
        // Predicated region
        $region21: #{tscd_forward.1} parent=11 // pred_check
          %p741 = pneg %p214
        $region22: #{tscd_forward.1} parent=11 // pred_check_branch
          %743 = sbr.rel (%p741) target = $region24
        $region23: #{tscd_forward.1} parent=11 // pred_region
          _
        $region24: #{tscd_forward.1} parent=11 // pred_fallthru
          _
        // Predicated region
        $region25: #{tscd_forward.1} parent=11 // pred_check
          %p744 = pneg %p235
        $region26: #{tscd_forward.1} parent=11 // pred_check_branch
          %746 = sbr.rel (%p744) target = $region28
        $region27: #{tscd_forward.1} parent=11 // pred_region
          _
        $region28: #{tscd_forward.1} parent=11 // pred_fallthru
          _
        // Predicated region
        $region29: #{tscd_forward.1} parent=11 // pred_check
          %p747 = pneg %p256
        $region30: #{tscd_forward.1} parent=11 // pred_check_branch
          %749 = sbr.rel (%p747) target = $region32
        $region31: #{tscd_forward.1} parent=11 // pred_region
          _
        $region32: #{tscd_forward.1} parent=11 // pred_fallthru
          _
        // Predicated region
        $region33: #{tscd_forward.1} parent=11 // pred_check
          %p750 = pneg %p277
        $region34: #{tscd_forward.1} parent=11 // pred_check_branch
          %752 = sbr.rel (%p750) target = $region36
        $region35: #{tscd_forward.1} parent=11 // pred_region
          _
        $region36: #{tscd_forward.1} parent=11 // pred_fallthru
          _
        // Predicated region
        $region37: #{tscd_forward.1} parent=11 // pred_check
          %p753 = pneg %p298
        $region38: #{tscd_forward.1} parent=11 // pred_check_branch
          %755 = sbr.rel (%p753) target = $region40
        $region39: #{tscd_forward.1} parent=11 // pred_region
          _
        $region40: #{tscd_forward.1} parent=11 // pred_fallthru
          _
        // Predicated region
        $region41: #{tscd_forward.1} parent=11 // pred_check
          %p756 = pneg %p319
        $region42: #{tscd_forward.1} parent=11 // pred_check_branch
          %758 = sbr.rel (%p756) target = $region44
        $region43: #{tscd_forward.1} parent=11 // pred_region
          _
        $region44: #{tscd_forward.1} parent=11 // pred_fallthru
          _
        // Predicated region
        $region45: #{tscd_forward.1} parent=11 // pred_check
          %p759 = pneg %p340
        $region46: #{tscd_forward.1} parent=11 // pred_check_branch
          %761 = sbr.rel (%p759) target = $region48
        $region47: #{tscd_forward.1} parent=11 // pred_region
          _
        $region48: #{tscd_forward.1} parent=11 // pred_fallthru
          _
      $region12: #{tscd_forward.1} parent=5 // pred_fallthru
        _
      %p762 = scmp.lt.s32.totalorder %s47, 2
      // Predicated region
      $region49: #{tscd_forward.1} parent=5 // pred_check
        %p763 = pneg %p762
      $region50: #{tscd_forward.1} parent=5 // pred_check_branch
        %765 = sbr.rel (%p763) target = $region52
      $region51: #{tscd_forward.1} parent=5 // pred_region
        // Predicated region
        $region53: #{tscd_forward.1} parent=51 // pred_check
          %p766 = pneg %p109
        $region54: #{tscd_forward.1} parent=51 // pred_check_branch
          %768 = sbr.rel (%p766) target = $region56
        $region55: #{tscd_forward.1} parent=51 // pred_region
          %p769 = scmp.lt.s32.totalorder %s47, 1
          %s770 = scalar_select %p769, %s47, 1
          %s771 = smul.addr %s770, 32
          %s772 = smul.addr %s771, 4
          %s773 = scalar_lea.vmem %s2, %s772
        $region56: #{tscd_forward.1} parent=51 // pred_fallthru
          _
        // Predicated region
        $region57: #{tscd_forward.1} parent=51 // pred_check
          %p774 = pneg %p135
        $region58: #{tscd_forward.1} parent=51 // pred_check_branch
          %776 = sbr.rel (%p774) target = $region60
        $region59: #{tscd_forward.1} parent=51 // pred_region
          %p777 = scmp.lt.s32.totalorder %s47, 1
          %s778 = scalar_select %p777, %s47, 1
          %s779 = smul.addr %s778, 8
          %s780 = smul.addr %s779, 4
          %s781 = scalar_lea.vmem %s3, %s780
        $region60: #{tscd_forward.1} parent=51 // pred_fallthru
          _
        // Predicated region
        $region61: #{tscd_forward.1} parent=51 // pred_check
          %p782 = pneg %p161
        $region62: #{tscd_forward.1} parent=51 // pred_check_branch
          %784 = sbr.rel (%p782) target = $region64
        $region63: #{tscd_forward.1} parent=51 // pred_region
          %p785 = scmp.lt.s32.totalorder %s47, 1
          %s786 = scalar_select %p785, %s47, 1
          %s787 = smul.addr %s786, 2
          %s788 = smul.addr %s787, 4
          %s789 = scalar_lea.vmem %s4, %s788
        $region64: #{tscd_forward.1} parent=51 // pred_fallthru
          _
        // Predicated region
        $region65: #{tscd_forward.1} parent=51 // pred_check
          %p790 = pneg %p187
        $region66: #{tscd_forward.1} parent=51 // pred_check_branch
          %792 = sbr.rel (%p790) target = $region68
        $region67: #{tscd_forward.1} parent=51 // pred_region
          %p793 = scmp.lt.s32.totalorder %s47, 1
          %s794 = scalar_select %p793, %s47, 1
          %s795 = smul.addr %s794, 2
          %s796 = scalar_lea.vmem %s5, %s795
        $region68: #{tscd_forward.1} parent=51 // pred_fallthru
          _
        // Predicated region
        $region69: #{tscd_forward.1} parent=51 // pred_check
          %p797 = pneg %p360
        $region70: #{tscd_forward.1} parent=51 // pred_check_branch
          %799 = sbr.rel (%p797) target = $region72
        $region71: #{tscd_forward.1} parent=51 // pred_region
          %p800 = scmp.lt.s32.totalorder %s47, 1
          %s801 = scalar_select %p800, %s47, 1
          %s802 = smul.addr %s801, 64
          %s803 = smul.addr %s802, 4
          %s804 = scalar_lea.vmem %s13, %s803
        $region72: #{tscd_forward.1} parent=51 // pred_fallthru
          _
        // Predicated region
        $region73: #{tscd_forward.1} parent=51 // pred_check
          %p805 = pneg %p386
        $region74: #{tscd_forward.1} parent=51 // pred_check_branch
          %807 = sbr.rel (%p805) target = $region76
        $region75: #{tscd_forward.1} parent=51 // pred_region
          %p808 = scmp.lt.s32.totalorder %s47, 1
          %s809 = scalar_select %p808, %s47, 1
          %s810 = smul.addr %s809, 64
          %s811 = smul.addr %s810, 4
          %s812 = scalar_lea.vmem %s14, %s811
        $region76: #{tscd_forward.1} parent=51 // pred_fallthru
          _
        // Predicated region
        $region77: #{tscd_forward.1} parent=51 // pred_check
          %p813 = pneg %p412
        $region78: #{tscd_forward.1} parent=51 // pred_check_branch
          %815 = sbr.rel (%p813) target = $region80
        $region79: #{tscd_forward.1} parent=51 // pred_region
          %p816 = scmp.lt.s32.totalorder %s47, 1
          %s817 = scalar_select %p816, %s47, 1
          %s818 = smul.addr %s817, 16
          %s819 = smul.addr %s818, 4
          %s820 = scalar_lea.vmem %s15, %s819
        $region80: #{tscd_forward.1} parent=51 // pred_fallthru
          _
        // Predicated region
        $region81: #{tscd_forward.1} parent=51 // pred_check
          %p821 = pneg %p438
        $region82: #{tscd_forward.1} parent=51 // pred_check_branch
          %823 = sbr.rel (%p821) target = $region84
        $region83: #{tscd_forward.1} parent=51 // pred_region
          %p824 = scmp.lt.s32.totalorder %s47, 1
          %s825 = scalar_select %p824, %s47, 1
          %s826 = smul.addr %s825, 16
          %s827 = smul.addr %s826, 4
          %s828 = scalar_lea.vmem %s16, %s827
        $region84: #{tscd_forward.1} parent=51 // pred_fallthru
          _
        // Predicated region
        $region85: #{tscd_forward.1} parent=51 // pred_check
          %p829 = pneg %p464
        $region86: #{tscd_forward.1} parent=51 // pred_check_branch
          %831 = sbr.rel (%p829) target = $region88
        $region87: #{tscd_forward.1} parent=51 // pred_region
          %p832 = scmp.lt.s32.totalorder %s47, 1
          %s833 = scalar_select %p832, %s47, 1
          %s834 = smul.addr %s833, 10
          %s835 = smul.addr %s834, 4
          %s836 = scalar_lea.vmem %s17, %s835
        $region88: #{tscd_forward.1} parent=51 // pred_fallthru
          _
        // Predicated region
        $region89: #{tscd_forward.1} parent=51 // pred_check
          %p837 = pneg %p490
        $region90: #{tscd_forward.1} parent=51 // pred_check_branch
          %839 = sbr.rel (%p837) target = $region92
        $region91: #{tscd_forward.1} parent=51 // pred_region
          %p840 = scmp.lt.s32.totalorder %s47, 1
          %s841 = scalar_select %p840, %s47, 1
          %s842 = smul.addr %s841, 10
          %s843 = smul.addr %s842, 4
          %s844 = scalar_lea.vmem %s18, %s843
        $region92: #{tscd_forward.1} parent=51 // pred_fallthru
          _
        // Predicated region
        $region93: #{tscd_forward.1} parent=51 // pred_check
          %p845 = pneg %p516
        $region94: #{tscd_forward.1} parent=51 // pred_check_branch
          %847 = sbr.rel (%p845) target = $region96
        $region95: #{tscd_forward.1} parent=51 // pred_region
          %p848 = scmp.lt.s32.totalorder %s47, 1
          %s849 = scalar_select %p848, %s47, 1
          %s850 = smul.addr %s849, 8
          %s851 = smul.addr %s850, 2
          %s852 = scalar_lea.vmem %s19, %s851
        $region96: #{tscd_forward.1} parent=51 // pred_fallthru
          _
        // Predicated region
        $region97: #{tscd_forward.1} parent=51 // pred_check
          %p853 = pneg %p542
        $region98: #{tscd_forward.1} parent=51 // pred_check_branch
          %855 = sbr.rel (%p853) target = $region100
        $region99: #{tscd_forward.1} parent=51 // pred_region
          %p856 = scmp.lt.s32.totalorder %s47, 1
          %s857 = scalar_select %p856, %s47, 1
          %s858 = smul.addr %s857, 8
          %s859 = smul.addr %s858, 2
          %s860 = scalar_lea.vmem %s20, %s859
        $region100: #{tscd_forward.1} parent=51 // pred_fallthru
          _
      $region52: #{tscd_forward.1} parent=5 // pred_fallthru
        _
      %p861 = scmp.le.s32.totalorder 1, %s47
      %p862 = scmp.lt.s32.totalorder %s47, 3
      %p863 = pnand %p861, %p862
      %p864 = pneg %p863
      // Predicated region
      $region101: #{tscd_forward.1} parent=5 // pred_check
        _
      $region102: #{tscd_forward.1} parent=5 // pred_check_branch
        %866 = sbr.rel (%p863) target = $region104
      $region103: #{tscd_forward.1} parent=5 // pred_region
        %s867 = ssub.s32 %s47, 1
        // Predicated region
        $region105: #{tscd_forward.1} parent=103 // pred_check
          %p868 = pneg %p68
        $region106: #{tscd_forward.1} parent=103 // pred_check_branch
          %870 = sbr.rel (%p868) target = $region108
        $region107: #{tscd_forward.1} parent=103 // pred_region
          %871 = dma.done [#allocation4], 16
        $region108: #{tscd_forward.1} parent=103 // pred_fallthru
          _
        // Predicated region
        $region109: #{tscd_forward.1} parent=103 // pred_check
          %p872 = pneg %p89
        $region110: #{tscd_forward.1} parent=103 // pred_check_branch
          %874 = sbr.rel (%p872) target = $region112
        $region111: #{tscd_forward.1} parent=103 // pred_region
          %875 = dma.done [#allocation6], 16
        $region112: #{tscd_forward.1} parent=103 // pred_fallthru
          _
        %876 = sfence
        %p877 = pneg %p68
        %p878 = pneg %p65
        %p879 = pneg %p89
        %p880 = pneg %p86
        %p881 = scmp.lt.s32.totalorder %s52, 1
        %s882 = scalar_select %p881, %s52, 1
        %s883 = smul.addr %s882, 32
        %s884 = smul.addr %s883, 4
        %s885 = scalar_lea.vmem %s2, %s884
        %p886 = pneg %p115
        %p887 = pneg %p112
        %p888 = scmp.lt.s32.totalorder %s52, 1
        %s889 = scalar_select %p888, %s52, 1
        %s890 = smul.addr %s889, 8
        %s891 = smul.addr %s890, 4
        %s892 = scalar_lea.vmem %s3, %s891
        %p893 = pneg %p141
        %p894 = pneg %p138
        %p895 = scmp.lt.s32.totalorder %s52, 1
        %s896 = scalar_select %p895, %s52, 1
        %s897 = smul.addr %s896, 2
        %s898 = smul.addr %s897, 4
        %s899 = scalar_lea.vmem %s4, %s898
        %p900 = pneg %p167
        %p901 = pneg %p164
        %p902 = scmp.lt.s32.totalorder %s52, 1
        %s903 = scalar_select %p902, %s52, 1
        %s904 = smul.addr %s903, 2
        %s905 = scalar_lea.vmem %s5, %s904
        %p906 = pneg %p193
        %p907 = pneg %p190
        %p908 = pneg %p214
        %p909 = pneg %p211
        %p910 = pneg %p235
        %p911 = pneg %p232
        %p912 = pneg %p256
        %p913 = pneg %p253
        %p914 = pneg %p277
        %p915 = pneg %p274
        %p916 = pneg %p298
        %p917 = pneg %p295
        %p918 = pneg %p319
        %p919 = pneg %p316
        %p920 = pneg %p340
        %p921 = pneg %p337
        %p922 = scmp.lt.s32.totalorder %s52, 1
        %s923 = scalar_select %p922, %s52, 1
        %s924 = smul.addr %s923, 64
        %s925 = smul.addr %s924, 4
        %s926 = scalar_lea.vmem %s13, %s925
        %p927 = pneg %p366
        %p928 = pneg %p363
        %p929 = scmp.lt.s32.totalorder %s52, 1
        %s930 = scalar_select %p929, %s52, 1
        %s931 = smul.addr %s930, 64
        %s932 = smul.addr %s931, 4
        %s933 = scalar_lea.vmem %s14, %s932
        %p934 = pneg %p392
        %p935 = pneg %p389
        %p936 = scmp.lt.s32.totalorder %s52, 1
        %s937 = scalar_select %p936, %s52, 1
        %s938 = smul.addr %s937, 16
        %s939 = smul.addr %s938, 4
        %s940 = scalar_lea.vmem %s15, %s939
        %p941 = pneg %p418
        %p942 = pneg %p415
        %p943 = scmp.lt.s32.totalorder %s52, 1
        %s944 = scalar_select %p943, %s52, 1
        %s945 = smul.addr %s944, 16
        %s946 = smul.addr %s945, 4
        %s947 = scalar_lea.vmem %s16, %s946
        %p948 = pneg %p444
        %p949 = pneg %p441
        %p950 = scmp.lt.s32.totalorder %s52, 1
        %s951 = scalar_select %p950, %s52, 1
        %s952 = smul.addr %s951, 10
        %s953 = smul.addr %s952, 4
        %s954 = scalar_lea.vmem %s17, %s953
        %p955 = pneg %p470
        %p956 = pneg %p467
        %p957 = scmp.lt.s32.totalorder %s52, 1
        %s958 = scalar_select %p957, %s52, 1
        %s959 = smul.addr %s958, 10
        %s960 = smul.addr %s959, 4
        %s961 = scalar_lea.vmem %s18, %s960
        %p962 = pneg %p496
        %p963 = pneg %p493
        %p964 = scmp.lt.s32.totalorder %s52, 1
        %s965 = scalar_select %p964, %s52, 1
        %s966 = smul.addr %s965, 8
        %s967 = smul.addr %s966, 2
        %s968 = scalar_lea.vmem %s19, %s967
        %p969 = pneg %p522
        %p970 = pneg %p519
        %p971 = scmp.lt.s32.totalorder %s52, 1
        %s972 = scalar_select %p971, %s52, 1
        %s973 = smul.addr %s972, 8
        %s974 = smul.addr %s973, 2
        %s975 = scalar_lea.vmem %s20, %s974
        %p976 = pneg %p548
        %p977 = pneg %p545
        %p978 = pneg %p574
        %p979 = pneg %p571
        %s980 = sand.u32 %s561, 1
        %s981 = scalar_lea.sflag [#allocation3], %s980
        %s982 = sand.u32 %s561, 1
        %s983 = scalar_lea.vmem [#allocation7], %s982
        %p984 = pneg %p600
        %p985 = pneg %p597
        %s986 = sand.u32 %s52, 1
        %s987 = scalar_lea.sflag [#allocation9], %s986
        %s988 = sand.u32 %s587, 1
        %s989 = scalar_lea.vmem [#allocation8], %s988
        %p990 = pneg %p626
        %p991 = pneg %p623
        %s992 = sand.u32 %s52, 1
        %s993 = scalar_lea.sflag [#allocation9], %s992
        %s994 = sand.u32 %s613, 1
        %s995 = smul.addr %s994, 512
        %s996 = scalar_lea.vmem [#allocation10], %s995
        %p997 = pneg %p652
        %p998 = pneg %p649
        %s999 = sand.u32 %s52, 1
        %s1000 = scalar_lea.sflag [#allocation12], %s999
        %s1001 = sand.u32 %s639, 1
        %s1002 = smul.addr %s1001, 64
        %s1003 = scalar_lea.vmem [#allocation11], %s1002
        %p1004 = pneg %p678
        %p1005 = pneg %p675
        %s1006 = sand.u32 %s52, 1
        %s1007 = scalar_lea.sflag [#allocation12], %s1006
        %s1008 = sand.u32 %s665, 1
        %s1009 = smul.addr %s1008, 16
        %s1010 = scalar_lea.vmem [#allocation13], %s1009
        %p1011 = pneg %p704
        %p1012 = pneg %p701
        %s1013 = sand.u32 %s691, 1
        %s1014 = scalar_lea.sflag [#allocation15], %s1013
        %s1015 = sand.u32 %s691, 1
        %s1016 = smul.addr %s1015, 4
        %s1017 = scalar_lea.vmem [#allocation14], %s1016
        %p1018 = scmp.lt.s32.totalorder %s52, 1
        %s1019 = scalar_select %p1018, %s52, 1
        %s1020 = smul.addr %s1019, 32
        %s1021 = smul.addr %s1020, 4
        %s1022 = scalar_lea.vmem %s2, %s1021
        %p1023 = scmp.lt.s32.totalorder %s52, 1
        %s1024 = scalar_select %p1023, %s52, 1
        %s1025 = smul.addr %s1024, 8
        %s1026 = smul.addr %s1025, 4
        %s1027 = scalar_lea.vmem %s3, %s1026
        %p1028 = scmp.lt.s32.totalorder %s52, 1
        %s1029 = scalar_select %p1028, %s52, 1
        %s1030 = smul.addr %s1029, 2
        %s1031 = smul.addr %s1030, 4
        %s1032 = scalar_lea.vmem %s4, %s1031
        %p1033 = scmp.lt.s32.totalorder %s52, 1
        %s1034 = scalar_select %p1033, %s52, 1
        %s1035 = smul.addr %s1034, 2
        %s1036 = scalar_lea.vmem %s5, %s1035
        %p1037 = scmp.lt.s32.totalorder %s52, 1
        %s1038 = scalar_select %p1037, %s52, 1
        %s1039 = smul.addr %s1038, 64
        %s1040 = smul.addr %s1039, 4
        %s1041 = scalar_lea.vmem %s13, %s1040
        %p1042 = scmp.lt.s32.totalorder %s52, 1
        %s1043 = scalar_select %p1042, %s52, 1
        %s1044 = smul.addr %s1043, 64
        %s1045 = smul.addr %s1044, 4
        %s1046 = scalar_lea.vmem %s14, %s1045
        %p1047 = scmp.lt.s32.totalorder %s52, 1
        %s1048 = scalar_select %p1047, %s52, 1
        %s1049 = smul.addr %s1048, 16
        %s1050 = smul.addr %s1049, 4
        %s1051 = scalar_lea.vmem %s15, %s1050
        %p1052 = scmp.lt.s32.totalorder %s52, 1
        %s1053 = scalar_select %p1052, %s52, 1
        %s1054 = smul.addr %s1053, 16
        %s1055 = smul.addr %s1054, 4
        %s1056 = scalar_lea.vmem %s16, %s1055
        %p1057 = scmp.lt.s32.totalorder %s52, 1
        %s1058 = scalar_select %p1057, %s52, 1
        %s1059 = smul.addr %s1058, 10
        %s1060 = smul.addr %s1059, 4
        %s1061 = scalar_lea.vmem %s17, %s1060
        %p1062 = scmp.lt.s32.totalorder %s52, 1
        %s1063 = scalar_select %p1062, %s52, 1
        %s1064 = smul.addr %s1063, 10
        %s1065 = smul.addr %s1064, 4
        %s1066 = scalar_lea.vmem %s18, %s1065
        %p1067 = scmp.lt.s32.totalorder %s52, 1
        %s1068 = scalar_select %p1067, %s52, 1
        %s1069 = smul.addr %s1068, 8
        %s1070 = smul.addr %s1069, 2
        %s1071 = scalar_lea.vmem %s19, %s1070
        %p1072 = scmp.lt.s32.totalorder %s52, 1
        %s1073 = scalar_select %p1072, %s52, 1
        %s1074 = smul.addr %s1073, 8
        %s1075 = smul.addr %s1074, 2
        %s1076 = scalar_lea.vmem %s20, %s1075
        %v1077 = vld [vmem:[%s6] sm:$0x3]
        %v1078 = vld [vmem:[%s1022] sm:$0xf]
        %v1079 = vld [vmem:[%s1022 + $0x4] sm:$0xf]
        %v1080 = vld [vmem:[%s1022 + $0x8] sm:$0xf]
        %v1081 = vld [vmem:[%s1022 + $0xc] sm:$0xf]
        %v1082 = vld [vmem:[%s1022 + $0x10] sm:$0xf]
        %v1083 = vld [vmem:[%s1022 + $0x14] sm:$0xf]
        %v1084 = vld [vmem:[%s1022 + $0x18] sm:$0xf]
        %v1085 = vld [vmem:[%s1022 + $0x1c] sm:$0xf]
        %v1086 = vld [vmem:[%s1022 + $0x20] sm:$0xf]
        %v1087 = vld [vmem:[%s1022 + $0x24] sm:$0xf]
        %v1088 = vld [vmem:[%s1022 + $0x28] sm:$0xf]
        %v1089 = vld [vmem:[%s1022 + $0x2c] sm:$0xf]
        %v1090 = vld [vmem:[%s1022 + $0x30] sm:$0xf]
        %v1091 = vld [vmem:[%s1022 + $0x34] sm:$0xf]
        %v1092 = vld [vmem:[%s1022 + $0x38] sm:$0xf]
        %v1093 = vld [vmem:[%s1022 + $0x3c] sm:$0xf]
        %v1094 = vld [vmem:[%s1022 + $0x40] sm:$0xf]
        %v1095 = vld [vmem:[%s1022 + $0x44] sm:$0xf]
        %v1096 = vld [vmem:[%s1022 + $0x48] sm:$0xf]
        %v1097 = vld [vmem:[%s1022 + $0x4c] sm:$0xf]
        %v1098 = vld [vmem:[%s1022 + $0x50] sm:$0xf]
        %v1099 = vld [vmem:[%s1022 + $0x54] sm:$0xf]
        %v1100 = vld [vmem:[%s1022 + $0x58] sm:$0xf]
        %v1101 = vld [vmem:[%s1022 + $0x5c] sm:$0xf]
        %v1102 = vld [vmem:[%s1022 + $0x60] sm:$0xf]
        %v1103 = vld [vmem:[%s1022 + $0x64] sm:$0xf]
        %v1104 = vld [vmem:[%s1022 + $0x68] sm:$0xf]
        %v1105 = vld [vmem:[%s1022 + $0x6c] sm:$0xf]
        %v1106 = vld [vmem:[%s1022 + $0x70] sm:$0xf]
        %v1107 = vld [vmem:[%s1022 + $0x74] sm:$0xf]
        %v1108 = vld [vmem:[%s1022 + $0x78] sm:$0xf]
        %v1109 = vld [vmem:[%s1022 + $0x7c] sm:$0xf]
        %v1110 = vunpack.c.l.bf16 %v1078
        %v1111 = vunpack.c.l.bf16 %v1079
        %v1112 = vunpack.c.l.bf16 %v1080
        %v1113 = vunpack.c.l.bf16 %v1081
        %v1114 = vunpack.c.l.bf16 %v1082
        %v1115 = vunpack.c.l.bf16 %v1083
        %v1116 = vunpack.c.l.bf16 %v1084
        %v1117 = vunpack.c.l.bf16 %v1085
        %v1118 = vunpack.c.l.bf16 %v1086
        %v1119 = vunpack.c.l.bf16 %v1087
        %v1120 = vunpack.c.l.bf16 %v1088
        %v1121 = vunpack.c.l.bf16 %v1089
        %v1122 = vunpack.c.l.bf16 %v1090
        %v1123 = vunpack.c.l.bf16 %v1091
        %v1124 = vunpack.c.l.bf16 %v1092
        %v1125 = vunpack.c.l.bf16 %v1093
        %v1126 = vunpack.c.l.bf16 %v1094
        %v1127 = vunpack.c.l.bf16 %v1095
        %v1128 = vunpack.c.l.bf16 %v1096
        %v1129 = vunpack.c.l.bf16 %v1097
        %v1130 = vunpack.c.l.bf16 %v1098
        %v1131 = vunpack.c.l.bf16 %v1099
        %v1132 = vunpack.c.l.bf16 %v1100
        %v1133 = vunpack.c.l.bf16 %v1101
        %v1134 = vunpack.c.l.bf16 %v1102
        %v1135 = vunpack.c.l.bf16 %v1103
        %v1136 = vunpack.c.l.bf16 %v1104
        %v1137 = vunpack.c.l.bf16 %v1105
        %v1138 = vunpack.c.l.bf16 %v1106
        %v1139 = vunpack.c.l.bf16 %v1107
        %v1140 = vunpack.c.l.bf16 %v1108
        %v1141 = vunpack.c.l.bf16 %v1109
        %v1143 = vlaneseq
        %v1144 = vshrl.u32 %v1143, 7
        %v1145 = vsub.s32 0, %v1144
        %v1146 = vrot.slane %v1077, %v1145
        %v1147 = vlaneseq
        %v1148 = vshrl.u32 %v1147, 7
        %v1149 = vsub.s32 1, %v1148
        %v1150 = vrot.slane %v1077, %v1149
        %1153 = vmatprep.subr.mxu0 0.0
        %1154 = vmatpush1.msra.mxu0 %v1110
        %1155 = vmatprep.subr.mxu0 0.0
        %1156 = vmatpush1.msra.mxu0 %v1111
        %1157 = vmatprep.subr.mxu0 0.0
        %1158 = vmatpush1.msra.mxu0 %v1112
        %1159 = vmatprep.subr.mxu0 0.0
        %1160 = vmatpush1.msra.mxu0 %v1113
        %1161 = vmatprep.subr.mxu0 0.0
        %1162 = vmatpush1.msra.mxu0 %v1114
        %1163 = vmatprep.subr.mxu0 0.0
        %1164 = vmatpush1.msra.mxu0 %v1115
        %1165 = vmatprep.subr.mxu0 0.0
        %1166 = vmatpush1.msra.mxu0 %v1116
        %1167 = vmatprep.subr.mxu0 0.0
        %1168 = vmatpush1.msra.mxu0 %v1117
        %1169 = vmatprep.subr.mxu0 0.0
        %1170 = vmatpush1.msra.mxu0 %v1118
        %1171 = vmatprep.subr.mxu0 0.0
        %1172 = vmatpush1.msra.mxu0 %v1119
        %1173 = vmatprep.subr.mxu0 0.0
        %1174 = vmatpush1.msra.mxu0 %v1120
        %1175 = vmatprep.subr.mxu0 0.0
        %1176 = vmatpush1.msra.mxu0 %v1121
        %1177 = vmatprep.subr.mxu0 0.0
        %1178 = vmatpush1.msra.mxu0 %v1122
        %1179 = vmatprep.subr.mxu0 0.0
        %1180 = vmatpush1.msra.mxu0 %v1123
        %1181 = vmatprep.subr.mxu0 0.0
        %1182 = vmatpush1.msra.mxu0 %v1124
        %1183 = vmatprep.subr.mxu0 0.0
        %1184 = vmatpush1.msra.mxu0 %v1125
        %1185 = vmatprep.subr.mxu0 0.0
        %1186 = vmatpush1.msra.mxu0 %v1126
        %1187 = vmatprep.subr.mxu0 0.0
        %1188 = vmatpush1.msra.mxu0 %v1127
        %1189 = vmatprep.subr.mxu0 0.0
        %1190 = vmatpush1.msra.mxu0 %v1128
        %1191 = vmatprep.subr.mxu0 0.0
        %1192 = vmatpush1.msra.mxu0 %v1129
        %1193 = vmatprep.subr.mxu0 0.0
        %1194 = vmatpush1.msra.mxu0 %v1130
        %1195 = vmatprep.subr.mxu0 0.0
        %1196 = vmatpush1.msra.mxu0 %v1131
        %1197 = vmatprep.subr.mxu0 0.0
        %1198 = vmatpush1.msra.mxu0 %v1132
        %1199 = vmatprep.subr.mxu0 0.0
        %1200 = vmatpush1.msra.mxu0 %v1133
        %1201 = vmatprep.subr.mxu0 0.0
        %1202 = vmatpush1.msra.mxu0 %v1134
        %1203 = vmatprep.subr.mxu0 0.0
        %1204 = vmatpush1.msra.mxu0 %v1135
        %1205 = vmatprep.subr.mxu0 0.0
        %1206 = vmatpush1.msra.mxu0 %v1136
        %1207 = vmatprep.subr.mxu0 0.0
        %1208 = vmatpush1.msra.mxu0 %v1137
        %1209 = vmatprep.subr.mxu0 0.0
        %1210 = vmatpush1.msra.mxu0 %v1138
        %1211 = vmatprep.subr.mxu0 0.0
        %1212 = vmatpush1.msra.mxu0 %v1139
        %1213 = vmatprep.subr.mxu0 0.0
        %1214 = vmatpush1.msra.mxu0 %v1140
        %1215 = vmatprep.subr.mxu0 0.0
        %1216 = vmatpush1.msra.mxu0 %v1141
        %1217 = vmatprep.mubr.f32.mxu0 %v1150
        %1218 = vmatmul.mubr.f32.gmra.mrb[0].mxu0 %v1146
        %v1219 = vpop.f32.mrb[0].mxu0
        %v1220 = vadd.f32 0.0, %v1219
        %v1221 = vpop.f32.mrb[0].mxu0
        %1222 = vdwg.mxu0
        %v1223 = vld [vmem:[%s1027] sm:$0xf]
        %v1224 = vld [vmem:[%s1027 + $0x4] sm:$0xf]
        %v1225 = vld [vmem:[%s1027 + $0x8] sm:$0xf]
        %v1226 = vld [vmem:[%s1027 + $0xc] sm:$0xf]
        %v1227 = vld [vmem:[%s1027 + $0x10] sm:$0xf]
        %v1228 = vld [vmem:[%s1027 + $0x14] sm:$0xf]
        %v1229 = vld [vmem:[%s1027 + $0x18] sm:$0xf]
        %v1230 = vld [vmem:[%s1027 + $0x1c] sm:$0xf]
        %v1231 = vunpack.c.l.bf16 %v1223
        %v1232 = vunpack.c.l.bf16 %v1224
        %v1233 = vunpack.c.l.bf16 %v1225
        %v1234 = vunpack.c.l.bf16 %v1226
        %v1235 = vunpack.c.l.bf16 %v1227
        %v1236 = vunpack.c.l.bf16 %v1228
        %v1237 = vunpack.c.l.bf16 %v1229
        %v1238 = vunpack.c.l.bf16 %v1230
        %vm1239 = vcmask 261120
        %v1240 = vsel %vm1239, %v1231, 0.0
        %v1241 = vsel %vm1239, %v1232, 0.0
        %v1242 = vadd.f32 %v1240, %v1241
        %v1243 = vsel %vm1239, %v1233, 0.0
        %v1244 = vadd.f32 %v1242, %v1243
        %v1245 = vsel %vm1239, %v1234, 0.0
        %v1246 = vadd.f32 %v1244, %v1245
        %v1247 = vsel %vm1239, %v1235, 0.0
        %v1248 = vadd.f32 %v1246, %v1247
        %v1249 = vsel %vm1239, %v1236, 0.0
        %v1250 = vadd.f32 %v1248, %v1249
        %v1251 = vsel %vm1239, %v1237, 0.0
        %v1252 = vadd.f32 %v1250, %v1251
        %v1253 = vsel %vm1239, %v1238, 0.0
        %v1254 = vadd.f32 %v1252, %v1253
        %v1255 = vrot.slane %v1254, 4
        %v1256 = vadd.f32 %v1254, %v1255
        %v1257 = vrot.slane %v1256, 2
        %v1258 = vadd.f32 %v1256, %v1257
        %v1259 = vrot.slane %v1258, 1
        %v1260 = vadd.f32 %v1258, %v1259
        %v1261 = vrcp.pop 64.0
        %v1262 = vmul.f32 %v1260, %v1261
        %v1263 = vld [vmem:[%s7] sm:$0x1]
        %v1264 = vld [vmem:[%s1032] sm:$0xf]
        %v1265 = vld [vmem:[%s1032 + $0x4] sm:$0xf]
        %v1266 = vunpack.c.l.bf16 %v1264
        %v1267 = vunpack.c.l.bf16 %v1265
        %vm1268 = vcmask 130048
        %v1270 = vsel %vm1268, %v1263, 0
        %1272 = vmatprep.subr.mxu0 0.0
        %1273 = vmatpush1.msra.mxu0 %v1266
        %1274 = vmatprep.subr.mxu0 0.0
        %1275 = vmatpush1.msra.mxu0 %v1267
        %1276 = vmatprep.subr.mxu0 0.0
        %1277 = vmatpush1.msra.mxu0 0.0
        %1278 = vmatprep.subr.mxu0 0.0
        %1279 = vmatpush1.msra.mxu0 0.0
        %1280 = vmatprep.subr.mxu0 0.0
        %1281 = vmatpush1.msra.mxu0 0.0
        %1282 = vmatprep.subr.mxu0 0.0
        %1283 = vmatpush1.msra.mxu0 0.0
        %1284 = vmatprep.subr.mxu0 0.0
        %1285 = vmatpush1.msra.mxu0 0.0
        %1286 = vmatprep.subr.mxu0 0.0
        %1287 = vmatpush1.msra.mxu0 0.0
        %1288 = vmatprep.subr.mxu0 0.0
        %1289 = vmatpush1.msra.mxu0 0.0
        %1290 = vmatprep.subr.mxu0 0.0
        %1291 = vmatpush1.msra.mxu0 0.0
        %1292 = vmatprep.subr.mxu0 0.0
        %1293 = vmatpush1.msra.mxu0 0.0
        %1294 = vmatprep.subr.mxu0 0.0
        %1295 = vmatpush1.msra.mxu0 0.0
        %1296 = vmatprep.subr.mxu0 0.0
        %1297 = vmatpush1.msra.mxu0 0.0
        %1298 = vmatprep.subr.mxu0 0.0
        %1299 = vmatpush1.msra.mxu0 0.0
        %1300 = vmatprep.subr.mxu0 0.0
        %1301 = vmatpush1.msra.mxu0 0.0
        %1302 = vmatprep.subr.mxu0 0.0
        %1303 = vmatpush1.msra.mxu0 0.0
        %1304 = vmatprep.subr.mxu0 0.0
        %1305 = vmatpush1.msra.mxu0 0.0
        %1306 = vmatprep.subr.mxu0 0.0
        %1307 = vmatpush1.msra.mxu0 0.0
        %1308 = vmatprep.subr.mxu0 0.0
        %1309 = vmatpush1.msra.mxu0 0.0
        %1310 = vmatprep.subr.mxu0 0.0
        %1311 = vmatpush1.msra.mxu0 0.0
        %1312 = vmatprep.subr.mxu0 0.0
        %1313 = vmatpush1.msra.mxu0 0.0
        %1314 = vmatprep.subr.mxu0 0.0
        %1315 = vmatpush1.msra.mxu0 0.0
        %1316 = vmatprep.subr.mxu0 0.0
        %1317 = vmatpush1.msra.mxu0 0.0
        %1318 = vmatprep.subr.mxu0 0.0
        %1319 = vmatpush1.msra.mxu0 0.0
        %1320 = vmatprep.subr.mxu0 0.0
        %1321 = vmatpush1.msra.mxu0 0.0
        %1322 = vmatprep.subr.mxu0 0.0
        %1323 = vmatpush1.msra.mxu0 0.0
        %1324 = vmatprep.subr.mxu0 0.0
        %1325 = vmatpush1.msra.mxu0 0.0
        %1326 = vmatprep.subr.mxu0 0.0
        %1327 = vmatpush1.msra.mxu0 0.0
        %1328 = vmatprep.subr.mxu0 0.0
        %1329 = vmatpush1.msra.mxu0 0.0
        %1330 = vmatprep.subr.mxu0 0.0
        %1331 = vmatpush1.msra.mxu0 0.0
        %1332 = vmatprep.subr.mxu0 0.0
        %1333 = vmatpush1.msra.mxu0 0.0
        %1334 = vmatprep.subr.mxu0 0.0
        %1335 = vmatpush1.msra.mxu0 0.0
        %1336 = vmatprep.mubr.f32.mxu0 0.0
        %1337 = vmatmul.mubr.f32.gmra.mrb[0].mxu0 %v1270
        %v1338 = vpop.f32.mrb[0].mxu0
        %v1339 = vadd.f32 0.0, %v1338
        %v1340 = vpop.f32.mrb[0].mxu0
        %1341 = vdwg.mxu0
        %v1342 = vld [vmem:[%s1036] sm:$0x3]
        %v1343 = vunpack.c.l.bf16 %v1342
        %vm1344 = vcmask 519168
        %v1345 = vsel %vm1344, %v1343, 0.0
        %v1346 = vrot.slane %v1345, 4
        %v1347 = vadd.f32 %v1345, %v1346
        %v1348 = vrot.slane %v1347, 2
        %v1349 = vadd.f32 %v1347, %v1348
        %v1350 = vrot.slane %v1349, 1
        %v1351 = vadd.f32 %v1349, %v1350
        %v1352 = vrcp.pop 4.0
        %v1353 = vmul.f32 %v1351, %v1352
        %v1354 = vld [vmem:[%s8] sm:$0xff]
        %v1355 = vld [vmem:[%s8 + $0x8] sm:$0xff]
        %v1356 = vld [vmem:[%s9] sm:$0xff]
        %v1357 = vld [vmem:[%s9 + $0x8] sm:$0xff]
        %v1358 = vld [vmem:[%s9 + $0x10] sm:$0xff]
        %v1359 = vld [vmem:[%s9 + $0x18] sm:$0xff]
        %v1361 = vsel %vm1239, %v1262, 0
        %1363 = vmatprep.subr.mxu0 0.0
        %1364 = vmatpush1.msra.mxu0 %v1356
        %1365 = vmatprep.subr.mxu0 0.0
        %1366 = vmatpush1.msra.mxu0 %v1357
        %1367 = vmatprep.subr.mxu0 0.0
        %1368 = vmatpush1.msra.mxu0 %v1358
        %1369 = vmatprep.subr.mxu0 0.0
        %1370 = vmatpush1.msra.mxu0 %v1359
        %1371 = vmatprep.subr.mxu0 0.0
        %1372 = vmatpush1.msra.mxu0 0.0
        %1373 = vmatprep.subr.mxu0 0.0
        %1374 = vmatpush1.msra.mxu0 0.0
        %1375 = vmatprep.subr.mxu0 0.0
        %1376 = vmatpush1.msra.mxu0 0.0
        %1377 = vmatprep.subr.mxu0 0.0
        %1378 = vmatpush1.msra.mxu0 0.0
        %1379 = vmatprep.subr.mxu0 0.0
        %1380 = vmatpush1.msra.mxu0 0.0
        %1381 = vmatprep.subr.mxu0 0.0
        %1382 = vmatpush1.msra.mxu0 0.0
        %1383 = vmatprep.subr.mxu0 0.0
        %1384 = vmatpush1.msra.mxu0 0.0
        %1385 = vmatprep.subr.mxu0 0.0
        %1386 = vmatpush1.msra.mxu0 0.0
        %1387 = vmatprep.subr.mxu0 0.0
        %1388 = vmatpush1.msra.mxu0 0.0
        %1389 = vmatprep.subr.mxu0 0.0
        %1390 = vmatpush1.msra.mxu0 0.0
        %1391 = vmatprep.subr.mxu0 0.0
        %1392 = vmatpush1.msra.mxu0 0.0
        %1393 = vmatprep.subr.mxu0 0.0
        %1394 = vmatpush1.msra.mxu0 0.0
        %1395 = vmatprep.subr.mxu0 0.0
        %1396 = vmatpush1.msra.mxu0 0.0
        %1397 = vmatprep.subr.mxu0 0.0
        %1398 = vmatpush1.msra.mxu0 0.0
        %1399 = vmatprep.subr.mxu0 0.0
        %1400 = vmatpush1.msra.mxu0 0.0
        %1401 = vmatprep.subr.mxu0 0.0
        %1402 = vmatpush1.msra.mxu0 0.0
        %1403 = vmatprep.subr.mxu0 0.0
        %1404 = vmatpush1.msra.mxu0 0.0
        %1405 = vmatprep.subr.mxu0 0.0
        %1406 = vmatpush1.msra.mxu0 0.0
        %1407 = vmatprep.subr.mxu0 0.0
        %1408 = vmatpush1.msra.mxu0 0.0
        %1409 = vmatprep.subr.mxu0 0.0
        %1410 = vmatpush1.msra.mxu0 0.0
        %1411 = vmatprep.subr.mxu0 0.0
        %1412 = vmatpush1.msra.mxu0 0.0
        %1413 = vmatprep.subr.mxu0 0.0
        %1414 = vmatpush1.msra.mxu0 0.0
        %1415 = vmatprep.subr.mxu0 0.0
        %1416 = vmatpush1.msra.mxu0 0.0
        %1417 = vmatprep.subr.mxu0 0.0
        %1418 = vmatpush1.msra.mxu0 0.0
        %1419 = vmatprep.subr.mxu0 0.0
        %1420 = vmatpush1.msra.mxu0 0.0
        %1421 = vmatprep.subr.mxu0 0.0
        %1422 = vmatpush1.msra.mxu0 0.0
        %1423 = vmatprep.subr.mxu0 0.0
        %1424 = vmatpush1.msra.mxu0 0.0
        %1425 = vmatprep.subr.mxu0 0.0
        %1426 = vmatpush1.msra.mxu0 0.0
        %1427 = vmatprep.mubr.f32.mxu0 0.0
        %1428 = vmatmul.mubr.f32.gmra.mrb[0].mxu0 %v1361
        %v1429 = vpop.f32.mrb[0].mxu0
        %v1430 = vadd.f32 0.0, %v1429
        %v1431 = vpop.f32.mrb[0].mxu0
        %1432 = vdwg.mxu0
        %v1434 = vsel %vm1268, %v1220, 0
        %1436 = vmatprep.subr.mxu0 0.0
        %1437 = vmatpush1.msra.mxu0 %v1354
        %1438 = vmatprep.subr.mxu0 0.0
        %1439 = vmatpush1.msra.mxu0 %v1355
        %1440 = vmatprep.subr.mxu0 0.0
        %1441 = vmatpush1.msra.mxu0 0.0
        %1442 = vmatprep.subr.mxu0 0.0
        %1443 = vmatpush1.msra.mxu0 0.0
        %1444 = vmatprep.subr.mxu0 0.0
        %1445 = vmatpush1.msra.mxu0 0.0
        %1446 = vmatprep.subr.mxu0 0.0
        %1447 = vmatpush1.msra.mxu0 0.0
        %1448 = vmatprep.subr.mxu0 0.0
        %1449 = vmatpush1.msra.mxu0 0.0
        %1450 = vmatprep.subr.mxu0 0.0
        %1451 = vmatpush1.msra.mxu0 0.0
        %1452 = vmatprep.subr.mxu0 0.0
        %1453 = vmatpush1.msra.mxu0 0.0
        %1454 = vmatprep.subr.mxu0 0.0
        %1455 = vmatpush1.msra.mxu0 0.0
        %1456 = vmatprep.subr.mxu0 0.0
        %1457 = vmatpush1.msra.mxu0 0.0
        %1458 = vmatprep.subr.mxu0 0.0
        %1459 = vmatpush1.msra.mxu0 0.0
        %1460 = vmatprep.subr.mxu0 0.0
        %1461 = vmatpush1.msra.mxu0 0.0
        %1462 = vmatprep.subr.mxu0 0.0
        %1463 = vmatpush1.msra.mxu0 0.0
        %1464 = vmatprep.subr.mxu0 0.0
        %1465 = vmatpush1.msra.mxu0 0.0
        %1466 = vmatprep.subr.mxu0 0.0
        %1467 = vmatpush1.msra.mxu0 0.0
        %1468 = vmatprep.subr.mxu0 0.0
        %1469 = vmatpush1.msra.mxu0 0.0
        %1470 = vmatprep.subr.mxu0 0.0
        %1471 = vmatpush1.msra.mxu0 0.0
        %1472 = vmatprep.subr.mxu0 0.0
        %1473 = vmatpush1.msra.mxu0 0.0
        %1474 = vmatprep.subr.mxu0 0.0
        %1475 = vmatpush1.msra.mxu0 0.0
        %1476 = vmatprep.subr.mxu0 0.0
        %1477 = vmatpush1.msra.mxu0 0.0
        %1478 = vmatprep.subr.mxu0 0.0
        %1479 = vmatpush1.msra.mxu0 0.0
        %1480 = vmatprep.subr.mxu0 0.0
        %1481 = vmatpush1.msra.mxu0 0.0
        %1482 = vmatprep.subr.mxu0 0.0
        %1483 = vmatpush1.msra.mxu0 0.0
        %1484 = vmatprep.subr.mxu0 0.0
        %1485 = vmatpush1.msra.mxu0 0.0
        %1486 = vmatprep.subr.mxu0 0.0
        %1487 = vmatpush1.msra.mxu0 0.0
        %1488 = vmatprep.subr.mxu0 0.0
        %1489 = vmatpush1.msra.mxu0 0.0
        %1490 = vmatprep.subr.mxu0 0.0
        %1491 = vmatpush1.msra.mxu0 0.0
        %1492 = vmatprep.subr.mxu0 0.0
        %1493 = vmatpush1.msra.mxu0 0.0
        %1494 = vmatprep.subr.mxu0 0.0
        %1495 = vmatpush1.msra.mxu0 0.0
        %1496 = vmatprep.subr.mxu0 0.0
        %1497 = vmatpush1.msra.mxu0 0.0
        %1498 = vmatprep.subr.mxu0 0.0
        %1499 = vmatpush1.msra.mxu0 0.0
        %1500 = vmatprep.mubr.f32.mxu0 0.0
        %1501 = vmatmul.mubr.f32.gmra.mrb[0].mxu0 %v1434
        %v1502 = vpop.f32.mrb[0].mxu0
        %v1503 = vadd.f32 %v1430, %v1502
        %v1504 = vpop.f32.mrb[0].mxu0
        %1505 = vdwg.mxu0
        %v1506 = vld [vmem:[%s10] sm:$0xff]
        %v1507 = vld [vmem:[%s10 + $0x8] sm:$0xff]
        %v1508 = vld [vmem:[%s10 + $0x10] sm:$0xff]
        %v1509 = vld [vmem:[%s10 + $0x18] sm:$0xff]
        %v1510 = vld [vmem:[%s10 + $0x20] sm:$0xff]
        %v1511 = vld [vmem:[%s10 + $0x28] sm:$0xff]
        %vm1512 = vcmask 392192
        %v1514 = vsel %vm1512, %v1339, 0
        %1516 = vmatprep.subr.mxu0 0.0
        %1517 = vmatpush1.msra.mxu0 %v1506
        %1518 = vmatprep.subr.mxu0 0.0
        %1519 = vmatpush1.msra.mxu0 %v1507
        %1520 = vmatprep.subr.mxu0 0.0
        %1521 = vmatpush1.msra.mxu0 %v1508
        %1522 = vmatprep.subr.mxu0 0.0
        %1523 = vmatpush1.msra.mxu0 %v1509
        %1524 = vmatprep.subr.mxu0 0.0
        %1525 = vmatpush1.msra.mxu0 %v1510
        %1526 = vmatprep.subr.mxu0 0.0
        %1527 = vmatpush1.msra.mxu0 %v1511
        %1528 = vmatprep.subr.mxu0 0.0
        %1529 = vmatpush1.msra.mxu0 0.0
        %1530 = vmatprep.subr.mxu0 0.0
        %1531 = vmatpush1.msra.mxu0 0.0
        %1532 = vmatprep.subr.mxu0 0.0
        %1533 = vmatpush1.msra.mxu0 0.0
        %1534 = vmatprep.subr.mxu0 0.0
        %1535 = vmatpush1.msra.mxu0 0.0
        %1536 = vmatprep.subr.mxu0 0.0
        %1537 = vmatpush1.msra.mxu0 0.0
        %1538 = vmatprep.subr.mxu0 0.0
        %1539 = vmatpush1.msra.mxu0 0.0
        %1540 = vmatprep.subr.mxu0 0.0
        %1541 = vmatpush1.msra.mxu0 0.0
        %1542 = vmatprep.subr.mxu0 0.0
        %1543 = vmatpush1.msra.mxu0 0.0
        %1544 = vmatprep.subr.mxu0 0.0
        %1545 = vmatpush1.msra.mxu0 0.0
        %1546 = vmatprep.subr.mxu0 0.0
        %1547 = vmatpush1.msra.mxu0 0.0
        %1548 = vmatprep.subr.mxu0 0.0
        %1549 = vmatpush1.msra.mxu0 0.0
        %1550 = vmatprep.subr.mxu0 0.0
        %1551 = vmatpush1.msra.mxu0 0.0
        %1552 = vmatprep.subr.mxu0 0.0
        %1553 = vmatpush1.msra.mxu0 0.0
        %1554 = vmatprep.subr.mxu0 0.0
        %1555 = vmatpush1.msra.mxu0 0.0
        %1556 = vmatprep.subr.mxu0 0.0
        %1557 = vmatpush1.msra.mxu0 0.0
        %1558 = vmatprep.subr.mxu0 0.0
        %1559 = vmatpush1.msra.mxu0 0.0
        %1560 = vmatprep.subr.mxu0 0.0
        %1561 = vmatpush1.msra.mxu0 0.0
        %1562 = vmatprep.subr.mxu0 0.0
        %1563 = vmatpush1.msra.mxu0 0.0
        %1564 = vmatprep.subr.mxu0 0.0
        %1565 = vmatpush1.msra.mxu0 0.0
        %1566 = vmatprep.subr.mxu0 0.0
        %1567 = vmatpush1.msra.mxu0 0.0
        %1568 = vmatprep.subr.mxu0 0.0
        %1569 = vmatpush1.msra.mxu0 0.0
        %1570 = vmatprep.subr.mxu0 0.0
        %1571 = vmatpush1.msra.mxu0 0.0
        %1572 = vmatprep.subr.mxu0 0.0
        %1573 = vmatpush1.msra.mxu0 0.0
        %1574 = vmatprep.subr.mxu0 0.0
        %1575 = vmatpush1.msra.mxu0 0.0
        %1576 = vmatprep.subr.mxu0 0.0
        %1577 = vmatpush1.msra.mxu0 0.0
        %1578 = vmatprep.subr.mxu0 0.0
        %1579 = vmatpush1.msra.mxu0 0.0
        %1580 = vmatprep.mubr.f32.mxu0 0.0
        %1581 = vmatmul.mubr.f32.gmra.mrb[0].mxu0 %v1514
        %v1582 = vpop.f32.mrb[0].mxu0
        %v1583 = vadd.f32 0.0, %v1582
        %v1584 = vpop.f32.mrb[0].mxu0
        %1585 = vdwg.mxu0
        %v1586 = vadd.f32 %v1503, %v1583
        %v1587 = vld [vmem:[%s11] sm:$0x1]
        %v1588 = vadd.f32 %v1586, %v1587
        %vm1589 = vcmask 24576
        %1590 = vst.msk [vmem:[%s989] sm:$0x1] %vm1589, %v1588
        %v1591 = vld [vmem:[%s12] sm:$0xff]
        %v1592 = vld [vmem:[%s12 + $0x8] sm:$0xff]
        %v1593 = vld [vmem:[%s12 + $0x10] sm:$0xff]
        %v1594 = vld [vmem:[%s12 + $0x18] sm:$0xff]
        %v1595 = vld [vmem:[%s12 + $0x20] sm:$0xff]
        %v1596 = vld [vmem:[%s12 + $0x28] sm:$0xff]
        %v1597 = vld [vmem:[%s12 + $0x30] sm:$0xff]
        %v1598 = vld [vmem:[%s12 + $0x38] sm:$0xff]
        %vm1599 = vcmask 523264
        %v1601 = vsel %vm1599, %v1353, 0
        %1603 = vmatprep.subr.mxu0 0.0
        %1604 = vmatpush1.msra.mxu0 %v1591
        %1605 = vmatprep.subr.mxu0 0.0
        %1606 = vmatpush1.msra.mxu0 %v1592
        %1607 = vmatprep.subr.mxu0 0.0
        %1608 = vmatpush1.msra.mxu0 %v1593
        %1609 = vmatprep.subr.mxu0 0.0
        %1610 = vmatpush1.msra.mxu0 %v1594
        %1611 = vmatprep.subr.mxu0 0.0
        %1612 = vmatpush1.msra.mxu0 %v1595
        %1613 = vmatprep.subr.mxu0 0.0
        %1614 = vmatpush1.msra.mxu0 %v1596
        %1615 = vmatprep.subr.mxu0 0.0
        %1616 = vmatpush1.msra.mxu0 %v1597
        %1617 = vmatprep.subr.mxu0 0.0
        %1618 = vmatpush1.msra.mxu0 %v1598
        %1619 = vmatprep.subr.mxu0 0.0
        %1620 = vmatpush1.msra.mxu0 0.0
        %1621 = vmatprep.subr.mxu0 0.0
        %1622 = vmatpush1.msra.mxu0 0.0
        %1623 = vmatprep.subr.mxu0 0.0
        %1624 = vmatpush1.msra.mxu0 0.0
        %1625 = vmatprep.subr.mxu0 0.0
        %1626 = vmatpush1.msra.mxu0 0.0
        %1627 = vmatprep.subr.mxu0 0.0
        %1628 = vmatpush1.msra.mxu0 0.0
        %1629 = vmatprep.subr.mxu0 0.0
        %1630 = vmatpush1.msra.mxu0 0.0
        %1631 = vmatprep.subr.mxu0 0.0
        %1632 = vmatpush1.msra.mxu0 0.0
        %1633 = vmatprep.subr.mxu0 0.0
        %1634 = vmatpush1.msra.mxu0 0.0
        %1635 = vmatprep.subr.mxu0 0.0
        %1636 = vmatpush1.msra.mxu0 0.0
        %1637 = vmatprep.subr.mxu0 0.0
        %1638 = vmatpush1.msra.mxu0 0.0
        %1639 = vmatprep.subr.mxu0 0.0
        %1640 = vmatpush1.msra.mxu0 0.0
        %1641 = vmatprep.subr.mxu0 0.0
        %1642 = vmatpush1.msra.mxu0 0.0
        %1643 = vmatprep.subr.mxu0 0.0
        %1644 = vmatpush1.msra.mxu0 0.0
        %1645 = vmatprep.subr.mxu0 0.0
        %1646 = vmatpush1.msra.mxu0 0.0
        %1647 = vmatprep.subr.mxu0 0.0
        %1648 = vmatpush1.msra.mxu0 0.0
        %1649 = vmatprep.subr.mxu0 0.0
        %1650 = vmatpush1.msra.mxu0 0.0
        %1651 = vmatprep.subr.mxu0 0.0
        %1652 = vmatpush1.msra.mxu0 0.0
        %1653 = vmatprep.subr.mxu0 0.0
        %1654 = vmatpush1.msra.mxu0 0.0
        %1655 = vmatprep.subr.mxu0 0.0
        %1656 = vmatpush1.msra.mxu0 0.0
        %1657 = vmatprep.subr.mxu0 0.0
        %1658 = vmatpush1.msra.mxu0 0.0
        %1659 = vmatprep.subr.mxu0 0.0
        %1660 = vmatpush1.msra.mxu0 0.0
        %1661 = vmatprep.subr.mxu0 0.0
        %1662 = vmatpush1.msra.mxu0 0.0
        %1663 = vmatprep.subr.mxu0 0.0
        %1664 = vmatpush1.msra.mxu0 0.0
        %1665 = vmatprep.subr.mxu0 0.0
        %1666 = vmatpush1.msra.mxu0 0.0
        %1667 = vmatprep.mubr.f32.mxu0 0.0
        %1668 = vmatmul.mubr.f32.gmra.mrb[0].mxu0 %v1601
        %v1669 = vpop.f32.mrb[0].mxu0
        %v1670 = vadd.f32 0.0, %v1669
        %v1671 = vpop.f32.mrb[0].mxu0
        %1672 = vdwg.mxu0
        %1673 = vst.msk [vmem:[%s983] sm:$0x1] %vm1589, %v1670
        %v1674 = vld [vmem:[%s1041] sm:$0xff]
        %v1675 = vld [vmem:[%s1041 + $0x8] sm:$0xff]
        %v1676 = vld [vmem:[%s1041 + $0x10] sm:$0xff]
        %v1677 = vld [vmem:[%s1041 + $0x18] sm:$0xff]
        %v1678 = vld [vmem:[%s1041 + $0x20] sm:$0xff]
        %v1679 = vld [vmem:[%s1041 + $0x28] sm:$0xff]
        %v1680 = vld [vmem:[%s1041 + $0x30] sm:$0xff]
        %v1681 = vld [vmem:[%s1041 + $0x38] sm:$0xff]
        %v1682 = vld [vmem:[%s1041 + $0x40] sm:$0xff]
        %v1683 = vld [vmem:[%s1041 + $0x48] sm:$0xff]
        %v1684 = vld [vmem:[%s1041 + $0x50] sm:$0xff]
        %v1685 = vld [vmem:[%s1041 + $0x58] sm:$0xff]
        %v1686 = vld [vmem:[%s1041 + $0x60] sm:$0xff]
        %v1687 = vld [vmem:[%s1041 + $0x68] sm:$0xff]
        %v1688 = vld [vmem:[%s1041 + $0x70] sm:$0xff]
        %v1689 = vld [vmem:[%s1041 + $0x78] sm:$0xff]
        %v1690 = vld [vmem:[%s1041 + $0x80] sm:$0xff]
        %v1691 = vld [vmem:[%s1041 + $0x88] sm:$0xff]
        %v1692 = vld [vmem:[%s1041 + $0x90] sm:$0xff]
        %v1693 = vld [vmem:[%s1041 + $0x98] sm:$0xff]
        %v1694 = vld [vmem:[%s1041 + $0xa0] sm:$0xff]
        %v1695 = vld [vmem:[%s1041 + $0xa8] sm:$0xff]
        %v1696 = vld [vmem:[%s1041 + $0xb0] sm:$0xff]
        %v1697 = vld [vmem:[%s1041 + $0xb8] sm:$0xff]
        %v1698 = vld [vmem:[%s1041 + $0xc0] sm:$0xff]
        %v1699 = vld [vmem:[%s1041 + $0xc8] sm:$0xff]
        %v1700 = vld [vmem:[%s1041 + $0xd0] sm:$0xff]
        %v1701 = vld [vmem:[%s1041 + $0xd8] sm:$0xff]
        %v1702 = vld [vmem:[%s1041 + $0xe0] sm:$0xff]
        %v1703 = vld [vmem:[%s1041 + $0xe8] sm:$0xff]
        %v1704 = vld [vmem:[%s1041 + $0xf0] sm:$0xff]
        %v1705 = vld [vmem:[%s1041 + $0xf8] sm:$0xff]
        %v1706 = vunpack.c.l.bf16 %v1674
        %v1707 = vunpack.c.h.bf16 %v1674
        %v1708 = vunpack.c.l.bf16 %v1675
        %v1709 = vunpack.c.h.bf16 %v1675
        %v1710 = vunpack.c.l.bf16 %v1676
        %v1711 = vunpack.c.h.bf16 %v1676
        %v1712 = vunpack.c.l.bf16 %v1677
        %v1713 = vunpack.c.h.bf16 %v1677
        %v1714 = vunpack.c.l.bf16 %v1678
        %v1715 = vunpack.c.h.bf16 %v1678
        %v1716 = vunpack.c.l.bf16 %v1679
        %v1717 = vunpack.c.h.bf16 %v1679
        %v1718 = vunpack.c.l.bf16 %v1680
        %v1719 = vunpack.c.h.bf16 %v1680
        %v1720 = vunpack.c.l.bf16 %v1681
        %v1721 = vunpack.c.h.bf16 %v1681
        %v1722 = vunpack.c.l.bf16 %v1682
        %v1723 = vunpack.c.h.bf16 %v1682
        %v1724 = vunpack.c.l.bf16 %v1683
        %v1725 = vunpack.c.h.bf16 %v1683
        %v1726 = vunpack.c.l.bf16 %v1684
        %v1727 = vunpack.c.h.bf16 %v1684
        %v1728 = vunpack.c.l.bf16 %v1685
        %v1729 = vunpack.c.h.bf16 %v1685
        %v1730 = vunpack.c.l.bf16 %v1686
        %v1731 = vunpack.c.h.bf16 %v1686
        %v1732 = vunpack.c.l.bf16 %v1687
        %v1733 = vunpack.c.h.bf16 %v1687
        %v1734 = vunpack.c.l.bf16 %v1688
        %v1735 = vunpack.c.h.bf16 %v1688
        %v1736 = vunpack.c.l.bf16 %v1689
        %v1737 = vunpack.c.h.bf16 %v1689
        %v1738 = vunpack.c.l.bf16 %v1690
        %v1739 = vunpack.c.h.bf16 %v1690
        %v1740 = vunpack.c.l.bf16 %v1691
        %v1741 = vunpack.c.h.bf16 %v1691
        %v1742 = vunpack.c.l.bf16 %v1692
        %v1743 = vunpack.c.h.bf16 %v1692
        %v1744 = vunpack.c.l.bf16 %v1693
        %v1745 = vunpack.c.h.bf16 %v1693
        %v1746 = vunpack.c.l.bf16 %v1694
        %v1747 = vunpack.c.h.bf16 %v1694
        %v1748 = vunpack.c.l.bf16 %v1695
        %v1749 = vunpack.c.h.bf16 %v1695
        %v1750 = vunpack.c.l.bf16 %v1696
        %v1751 = vunpack.c.h.bf16 %v1696
        %v1752 = vunpack.c.l.bf16 %v1697
        %v1753 = vunpack.c.h.bf16 %v1697
        %v1754 = vunpack.c.l.bf16 %v1698
        %v1755 = vunpack.c.h.bf16 %v1698
        %v1756 = vunpack.c.l.bf16 %v1699
        %v1757 = vunpack.c.h.bf16 %v1699
        %v1758 = vunpack.c.l.bf16 %v1700
        %v1759 = vunpack.c.h.bf16 %v1700
        %v1760 = vunpack.c.l.bf16 %v1701
        %v1761 = vunpack.c.h.bf16 %v1701
        %v1762 = vunpack.c.l.bf16 %v1702
        %v1763 = vunpack.c.h.bf16 %v1702
        %v1764 = vunpack.c.l.bf16 %v1703
        %v1765 = vunpack.c.h.bf16 %v1703
        %v1766 = vunpack.c.l.bf16 %v1704
        %v1767 = vunpack.c.h.bf16 %v1704
        %v1768 = vunpack.c.l.bf16 %v1705
        %v1769 = vunpack.c.h.bf16 %v1705
        %v1770 = vld [vmem:[%s1046] sm:$0xff]
        %v1771 = vld [vmem:[%s1046 + $0x8] sm:$0xff]
        %v1772 = vld [vmem:[%s1046 + $0x10] sm:$0xff]
        %v1773 = vld [vmem:[%s1046 + $0x18] sm:$0xff]
        %v1774 = vld [vmem:[%s1046 + $0x20] sm:$0xff]
        %v1775 = vld [vmem:[%s1046 + $0x28] sm:$0xff]
        %v1776 = vld [vmem:[%s1046 + $0x30] sm:$0xff]
        %v1777 = vld [vmem:[%s1046 + $0x38] sm:$0xff]
        %v1778 = vld [vmem:[%s1046 + $0x40] sm:$0xff]
        %v1779 = vld [vmem:[%s1046 + $0x48] sm:$0xff]
        %v1780 = vld [vmem:[%s1046 + $0x50] sm:$0xff]
        %v1781 = vld [vmem:[%s1046 + $0x58] sm:$0xff]
        %v1782 = vld [vmem:[%s1046 + $0x60] sm:$0xff]
        %v1783 = vld [vmem:[%s1046 + $0x68] sm:$0xff]
        %v1784 = vld [vmem:[%s1046 + $0x70] sm:$0xff]
        %v1785 = vld [vmem:[%s1046 + $0x78] sm:$0xff]
        %v1786 = vld [vmem:[%s1046 + $0x80] sm:$0xff]
        %v1787 = vld [vmem:[%s1046 + $0x88] sm:$0xff]
        %v1788 = vld [vmem:[%s1046 + $0x90] sm:$0xff]
        %v1789 = vld [vmem:[%s1046 + $0x98] sm:$0xff]
        %v1790 = vld [vmem:[%s1046 + $0xa0] sm:$0xff]
        %v1791 = vld [vmem:[%s1046 + $0xa8] sm:$0xff]
        %v1792 = vld [vmem:[%s1046 + $0xb0] sm:$0xff]
        %v1793 = vld [vmem:[%s1046 + $0xb8] sm:$0xff]
        %v1794 = vld [vmem:[%s1046 + $0xc0] sm:$0xff]
        %v1795 = vld [vmem:[%s1046 + $0xc8] sm:$0xff]
        %v1796 = vld [vmem:[%s1046 + $0xd0] sm:$0xff]
        %v1797 = vld [vmem:[%s1046 + $0xd8] sm:$0xff]
        %v1798 = vld [vmem:[%s1046 + $0xe0] sm:$0xff]
        %v1799 = vld [vmem:[%s1046 + $0xe8] sm:$0xff]
        %v1800 = vld [vmem:[%s1046 + $0xf0] sm:$0xff]
        %v1801 = vld [vmem:[%s1046 + $0xf8] sm:$0xff]
        %v1802 = vunpack.c.l.bf16 %v1770
        %v1803 = vunpack.c.h.bf16 %v1770
        %v1804 = vunpack.c.l.bf16 %v1771
        %v1805 = vunpack.c.h.bf16 %v1771
        %v1806 = vunpack.c.l.bf16 %v1772
        %v1807 = vunpack.c.h.bf16 %v1772
        %v1808 = vunpack.c.l.bf16 %v1773
        %v1809 = vunpack.c.h.bf16 %v1773
        %v1810 = vunpack.c.l.bf16 %v1774
        %v1811 = vunpack.c.h.bf16 %v1774
        %v1812 = vunpack.c.l.bf16 %v1775
        %v1813 = vunpack.c.h.bf16 %v1775
        %v1814 = vunpack.c.l.bf16 %v1776
        %v1815 = vunpack.c.h.bf16 %v1776
        %v1816 = vunpack.c.l.bf16 %v1777
        %v1817 = vunpack.c.h.bf16 %v1777
        %v1818 = vunpack.c.l.bf16 %v1778
        %v1819 = vunpack.c.h.bf16 %v1778
        %v1820 = vunpack.c.l.bf16 %v1779
        %v1821 = vunpack.c.h.bf16 %v1779
        %v1822 = vunpack.c.l.bf16 %v1780
        %v1823 = vunpack.c.h.bf16 %v1780
        %v1824 = vunpack.c.l.bf16 %v1781
        %v1825 = vunpack.c.h.bf16 %v1781
        %v1826 = vunpack.c.l.bf16 %v1782
        %v1827 = vunpack.c.h.bf16 %v1782
        %v1828 = vunpack.c.l.bf16 %v1783
        %v1829 = vunpack.c.h.bf16 %v1783
        %v1830 = vunpack.c.l.bf16 %v1784
        %v1831 = vunpack.c.h.bf16 %v1784
        %v1832 = vunpack.c.l.bf16 %v1785
        %v1833 = vunpack.c.h.bf16 %v1785
        %v1834 = vunpack.c.l.bf16 %v1786
        %v1835 = vunpack.c.h.bf16 %v1786
        %v1836 = vunpack.c.l.bf16 %v1787
        %v1837 = vunpack.c.h.bf16 %v1787
        %v1838 = vunpack.c.l.bf16 %v1788
        %v1839 = vunpack.c.h.bf16 %v1788
        %v1840 = vunpack.c.l.bf16 %v1789
        %v1841 = vunpack.c.h.bf16 %v1789
        %v1842 = vunpack.c.l.bf16 %v1790
        %v1843 = vunpack.c.h.bf16 %v1790
        %v1844 = vunpack.c.l.bf16 %v1791
        %v1845 = vunpack.c.h.bf16 %v1791
        %v1846 = vunpack.c.l.bf16 %v1792
        %v1847 = vunpack.c.h.bf16 %v1792
        %v1848 = vunpack.c.l.bf16 %v1793
        %v1849 = vunpack.c.h.bf16 %v1793
        %v1850 = vunpack.c.l.bf16 %v1794
        %v1851 = vunpack.c.h.bf16 %v1794
        %v1852 = vunpack.c.l.bf16 %v1795
        %v1853 = vunpack.c.h.bf16 %v1795
        %v1854 = vunpack.c.l.bf16 %v1796
        %v1855 = vunpack.c.h.bf16 %v1796
        %v1856 = vunpack.c.l.bf16 %v1797
        %v1857 = vunpack.c.h.bf16 %v1797
        %v1858 = vunpack.c.l.bf16 %v1798
        %v1859 = vunpack.c.h.bf16 %v1798
        %v1860 = vunpack.c.l.bf16 %v1799
        %v1861 = vunpack.c.h.bf16 %v1799
        %v1862 = vunpack.c.l.bf16 %v1800
        %v1863 = vunpack.c.h.bf16 %v1800
        %v1864 = vunpack.c.l.bf16 %v1801
        %v1865 = vunpack.c.h.bf16 %v1801
        %v1866 = vadd.f32 %v1706, %v1802
        %v1867 = vadd.f32 %v1707, %v1803
        %v1868 = vadd.f32 %v1708, %v1804
        %v1869 = vadd.f32 %v1709, %v1805
        %v1870 = vadd.f32 %v1710, %v1806
        %v1871 = vadd.f32 %v1711, %v1807
        %v1872 = vadd.f32 %v1712, %v1808
        %v1873 = vadd.f32 %v1713, %v1809
        %v1874 = vadd.f32 %v1714, %v1810
        %v1875 = vadd.f32 %v1715, %v1811
        %v1876 = vadd.f32 %v1716, %v1812
        %v1877 = vadd.f32 %v1717, %v1813
        %v1878 = vadd.f32 %v1718, %v1814
        %v1879 = vadd.f32 %v1719, %v1815
        %v1880 = vadd.f32 %v1720, %v1816
        %v1881 = vadd.f32 %v1721, %v1817
        %v1882 = vadd.f32 %v1722, %v1818
        %v1883 = vadd.f32 %v1723, %v1819
        %v1884 = vadd.f32 %v1724, %v1820
        %v1885 = vadd.f32 %v1725, %v1821
        %v1886 = vadd.f32 %v1726, %v1822
        %v1887 = vadd.f32 %v1727, %v1823
        %v1888 = vadd.f32 %v1728, %v1824
        %v1889 = vadd.f32 %v1729, %v1825
        %v1890 = vadd.f32 %v1730, %v1826
        %v1891 = vadd.f32 %v1731, %v1827
        %v1892 = vadd.f32 %v1732, %v1828
        %v1893 = vadd.f32 %v1733, %v1829
        %v1894 = vadd.f32 %v1734, %v1830
        %v1895 = vadd.f32 %v1735, %v1831
        %v1896 = vadd.f32 %v1736, %v1832
        %v1897 = vadd.f32 %v1737, %v1833
        %v1898 = vadd.f32 %v1738, %v1834
        %v1899 = vadd.f32 %v1739, %v1835
        %v1900 = vadd.f32 %v1740, %v1836
        %v1901 = vadd.f32 %v1741, %v1837
        %v1902 = vadd.f32 %v1742, %v1838
        %v1903 = vadd.f32 %v1743, %v1839
        %v1904 = vadd.f32 %v1744, %v1840
        %v1905 = vadd.f32 %v1745, %v1841
        %v1906 = vadd.f32 %v1746, %v1842
        %v1907 = vadd.f32 %v1747, %v1843
        %v1908 = vadd.f32 %v1748, %v1844
        %v1909 = vadd.f32 %v1749, %v1845
        %v1910 = vadd.f32 %v1750, %v1846
        %v1911 = vadd.f32 %v1751, %v1847
        %v1912 = vadd.f32 %v1752, %v1848
        %v1913 = vadd.f32 %v1753, %v1849
        %v1914 = vadd.f32 %v1754, %v1850
        %v1915 = vadd.f32 %v1755, %v1851
        %v1916 = vadd.f32 %v1756, %v1852
        %v1917 = vadd.f32 %v1757, %v1853
        %v1918 = vadd.f32 %v1758, %v1854
        %v1919 = vadd.f32 %v1759, %v1855
        %v1920 = vadd.f32 %v1760, %v1856
        %v1921 = vadd.f32 %v1761, %v1857
        %v1922 = vadd.f32 %v1762, %v1858
        %v1923 = vadd.f32 %v1763, %v1859
        %v1924 = vadd.f32 %v1764, %v1860
        %v1925 = vadd.f32 %v1765, %v1861
        %v1926 = vadd.f32 %v1766, %v1862
        %v1927 = vadd.f32 %v1767, %v1863
        %v1928 = vadd.f32 %v1768, %v1864
        %v1929 = vadd.f32 %v1769, %v1865
        %s1930 = sld [smem:[#allocation2]]
        %v1931 = vstv %s1930
        %v1932 = vmul.f32 %v1866, %v1931
        %v1933 = vmul.f32 %v1867, %v1931
        %v1934 = vmul.f32 %v1868, %v1931
        %v1935 = vmul.f32 %v1869, %v1931
        %v1936 = vmul.f32 %v1870, %v1931
        %v1937 = vmul.f32 %v1871, %v1931
        %v1938 = vmul.f32 %v1872, %v1931
        %v1939 = vmul.f32 %v1873, %v1931
        %v1940 = vmul.f32 %v1874, %v1931
        %v1941 = vmul.f32 %v1875, %v1931
        %v1942 = vmul.f32 %v1876, %v1931
        %v1943 = vmul.f32 %v1877, %v1931
        %v1944 = vmul.f32 %v1878, %v1931
        %v1945 = vmul.f32 %v1879, %v1931
        %v1946 = vmul.f32 %v1880, %v1931
        %v1947 = vmul.f32 %v1881, %v1931
        %v1948 = vmul.f32 %v1882, %v1931
        %v1949 = vmul.f32 %v1883, %v1931
        %v1950 = vmul.f32 %v1884, %v1931
        %v1951 = vmul.f32 %v1885, %v1931
        %v1952 = vmul.f32 %v1886, %v1931
        %v1953 = vmul.f32 %v1887, %v1931
        %v1954 = vmul.f32 %v1888, %v1931
        %v1955 = vmul.f32 %v1889, %v1931
        %v1956 = vmul.f32 %v1890, %v1931
        %v1957 = vmul.f32 %v1891, %v1931
        %v1958 = vmul.f32 %v1892, %v1931
        %v1959 = vmul.f32 %v1893, %v1931
        %v1960 = vmul.f32 %v1894, %v1931
        %v1961 = vmul.f32 %v1895, %v1931
        %v1962 = vmul.f32 %v1896, %v1931
        %v1963 = vmul.f32 %v1897, %v1931
        %v1964 = vmul.f32 %v1898, %v1931
        %v1965 = vmul.f32 %v1899, %v1931
        %v1966 = vmul.f32 %v1900, %v1931
        %v1967 = vmul.f32 %v1901, %v1931
        %v1968 = vmul.f32 %v1902, %v1931
        %v1969 = vmul.f32 %v1903, %v1931
        %v1970 = vmul.f32 %v1904, %v1931
        %v1971 = vmul.f32 %v1905, %v1931
        %v1972 = vmul.f32 %v1906, %v1931
        %v1973 = vmul.f32 %v1907, %v1931
        %v1974 = vmul.f32 %v1908, %v1931
        %v1975 = vmul.f32 %v1909, %v1931
        %v1976 = vmul.f32 %v1910, %v1931
        %v1977 = vmul.f32 %v1911, %v1931
        %v1978 = vmul.f32 %v1912, %v1931
        %v1979 = vmul.f32 %v1913, %v1931
        %v1980 = vmul.f32 %v1914, %v1931
        %v1981 = vmul.f32 %v1915, %v1931
        %v1982 = vmul.f32 %v1916, %v1931
        %v1983 = vmul.f32 %v1917, %v1931
        %v1984 = vmul.f32 %v1918, %v1931
        %v1985 = vmul.f32 %v1919, %v1931
        %v1986 = vmul.f32 %v1920, %v1931
        %v1987 = vmul.f32 %v1921, %v1931
        %v1988 = vmul.f32 %v1922, %v1931
        %v1989 = vmul.f32 %v1923, %v1931
        %v1990 = vmul.f32 %v1924, %v1931
        %v1991 = vmul.f32 %v1925, %v1931
        %v1992 = vmul.f32 %v1926, %v1931
        %v1993 = vmul.f32 %v1927, %v1931
        %v1994 = vmul.f32 %v1928, %v1931
        %v1995 = vmul.f32 %v1929, %v1931
        %1996 = vxpose.xlu0.b32.start [1/16] %v1932, 128
        %1997 = vxpose.xlu0.b32.cont [2/16] %v1934, 128
        %1998 = vxpose.xlu0.b32.cont [3/16] %v1936, 128
        %1999 = vxpose.xlu0.b32.cont [4/16] %v1938, 128
        %2000 = vxpose.xlu0.b32.cont [5/16] %v1940, 128
        %2001 = vxpose.xlu0.b32.cont [6/16] %v1942, 128
        %2002 = vxpose.xlu0.b32.cont [7/16] %v1944, 128
        %2003 = vxpose.xlu0.b32.cont [8/16] %v1946, 128
        %2004 = vxpose.xlu0.b32.cont [9/16] %v1948, 128
        %2005 = vxpose.xlu0.b32.cont [10/16] %v1950, 128
        %2006 = vxpose.xlu0.b32.cont [11/16] %v1952, 128
        %2007 = vxpose.xlu0.b32.cont [12/16] %v1954, 128
        %2008 = vxpose.xlu0.b32.cont [13/16] %v1956, 128
        %2009 = vxpose.xlu0.b32.cont [14/16] %v1958, 128
        %2010 = vxpose.xlu0.b32.cont [15/16] %v1960, 128
        %2011 = vxpose.xlu0.b32.end [16/16] %v1962, 128
        %v2012 = vpop.trf.xlu0
        %v2013 = vpop.trf.xlu0
        %v2014 = vpop.trf.xlu0
        %v2015 = vpop.trf.xlu0
        %v2016 = vpop.trf.xlu0
        %v2017 = vpop.trf.xlu0
        %v2018 = vpop.trf.xlu0
        %v2019 = vpop.trf.xlu0
        %v2020 = vpop.trf.xlu0
        %v2021 = vpop.trf.xlu0
        %v2022 = vpop.trf.xlu0
        %v2023 = vpop.trf.xlu0
        %v2024 = vpop.trf.xlu0
        %v2025 = vpop.trf.xlu0
        %v2026 = vpop.trf.xlu0
        %v2027 = vpop.trf.xlu0
        %2028 = vxpose.xlu0.b32.start [1/16] %v1933, 128
        %2029 = vxpose.xlu0.b32.cont [2/16] %v1935, 128
        %2030 = vxpose.xlu0.b32.cont [3/16] %v1937, 128
        %2031 = vxpose.xlu0.b32.cont [4/16] %v1939, 128
        %2032 = vxpose.xlu0.b32.cont [5/16] %v1941, 128
        %2033 = vxpose.xlu0.b32.cont [6/16] %v1943, 128
        %2034 = vxpose.xlu0.b32.cont [7/16] %v1945, 128
        %2035 = vxpose.xlu0.b32.cont [8/16] %v1947, 128
        %2036 = vxpose.xlu0.b32.cont [9/16] %v1949, 128
        %2037 = vxpose.xlu0.b32.cont [10/16] %v1951, 128
        %2038 = vxpose.xlu0.b32.cont [11/16] %v1953, 128
        %2039 = vxpose.xlu0.b32.cont [12/16] %v1955, 128
        %2040 = vxpose.xlu0.b32.cont [13/16] %v1957, 128
        %2041 = vxpose.xlu0.b32.cont [14/16] %v1959, 128
        %2042 = vxpose.xlu0.b32.cont [15/16] %v1961, 128
        %2043 = vxpose.xlu0.b32.end [16/16] %v1963, 128
        %v2044 = vpop.trf.xlu0
        %v2045 = vpop.trf.xlu0
        %v2046 = vpop.trf.xlu0
        %v2047 = vpop.trf.xlu0
        %v2048 = vpop.trf.xlu0
        %v2049 = vpop.trf.xlu0
        %v2050 = vpop.trf.xlu0
        %v2051 = vpop.trf.xlu0
        %v2052 = vpop.trf.xlu0
        %v2053 = vpop.trf.xlu0
        %v2054 = vpop.trf.xlu0
        %v2055 = vpop.trf.xlu0
        %v2056 = vpop.trf.xlu0
        %v2057 = vpop.trf.xlu0
        %v2058 = vpop.trf.xlu0
        %v2059 = vpop.trf.xlu0
        %2060 = vxpose.xlu0.b32.start [1/16] %v1964, 128
        %2061 = vxpose.xlu0.b32.cont [2/16] %v1966, 128
        %2062 = vxpose.xlu0.b32.cont [3/16] %v1968, 128
        %2063 = vxpose.xlu0.b32.cont [4/16] %v1970, 128
        %2064 = vxpose.xlu0.b32.cont [5/16] %v1972, 128
        %2065 = vxpose.xlu0.b32.cont [6/16] %v1974, 128
        %2066 = vxpose.xlu0.b32.cont [7/16] %v1976, 128
        %2067 = vxpose.xlu0.b32.cont [8/16] %v1978, 128
        %2068 = vxpose.xlu0.b32.cont [9/16] %v1980, 128
        %2069 = vxpose.xlu0.b32.cont [10/16] %v1982, 128
        %2070 = vxpose.xlu0.b32.cont [11/16] %v1984, 128
        %2071 = vxpose.xlu0.b32.cont [12/16] %v1986, 128
        %2072 = vxpose.xlu0.b32.cont [13/16] %v1988, 128
        %2073 = vxpose.xlu0.b32.cont [14/16] %v1990, 128
        %2074 = vxpose.xlu0.b32.cont [15/16] %v1992, 128
        %2075 = vxpose.xlu0.b32.end [16/16] %v1994, 128
        %v2076 = vpop.trf.xlu0
        %v2077 = vpop.trf.xlu0
        %v2078 = vpop.trf.xlu0
        %v2079 = vpop.trf.xlu0
        %v2080 = vpop.trf.xlu0
        %v2081 = vpop.trf.xlu0
        %v2082 = vpop.trf.xlu0
        %v2083 = vpop.trf.xlu0
        %v2084 = vpop.trf.xlu0
        %v2085 = vpop.trf.xlu0
        %v2086 = vpop.trf.xlu0
        %v2087 = vpop.trf.xlu0
        %v2088 = vpop.trf.xlu0
        %v2089 = vpop.trf.xlu0
        %v2090 = vpop.trf.xlu0
        %v2091 = vpop.trf.xlu0
        %2092 = vxpose.xlu0.b32.start [1/16] %v1965, 128
        %2093 = vxpose.xlu0.b32.cont [2/16] %v1967, 128
        %2094 = vxpose.xlu0.b32.cont [3/16] %v1969, 128
        %2095 = vxpose.xlu0.b32.cont [4/16] %v1971, 128
        %2096 = vxpose.xlu0.b32.cont [5/16] %v1973, 128
        %2097 = vxpose.xlu0.b32.cont [6/16] %v1975, 128
        %2098 = vxpose.xlu0.b32.cont [7/16] %v1977, 128
        %2099 = vxpose.xlu0.b32.cont [8/16] %v1979, 128
        %2100 = vxpose.xlu0.b32.cont [9/16] %v1981, 128
        %2101 = vxpose.xlu0.b32.cont [10/16] %v1983, 128
        %2102 = vxpose.xlu0.b32.cont [11/16] %v1985, 128
        %2103 = vxpose.xlu0.b32.cont [12/16] %v1987, 128
        %2104 = vxpose.xlu0.b32.cont [13/16] %v1989, 128
        %2105 = vxpose.xlu0.b32.cont [14/16] %v1991, 128
        %2106 = vxpose.xlu0.b32.cont [15/16] %v1993, 128
        %2107 = vxpose.xlu0.b32.end [16/16] %v1995, 128
        %v2108 = vpop.trf.xlu0
        %v2109 = vpop.trf.xlu0
        %v2110 = vpop.trf.xlu0
        %v2111 = vpop.trf.xlu0
        %v2112 = vpop.trf.xlu0
        %v2113 = vpop.trf.xlu0
        %v2114 = vpop.trf.xlu0
        %v2115 = vpop.trf.xlu0
        %v2116 = vpop.trf.xlu0
        %v2117 = vpop.trf.xlu0
        %v2118 = vpop.trf.xlu0
        %v2119 = vpop.trf.xlu0
        %v2120 = vpop.trf.xlu0
        %v2121 = vpop.trf.xlu0
        %v2122 = vpop.trf.xlu0
        %v2123 = vpop.trf.xlu0
        %v2124 = vadd.f32 %v1932, %v2012
        %v2125 = vadd.f32 %v1933, %v2076
        %v2126 = vadd.f32 %v1934, %v2013
        %v2127 = vadd.f32 %v1935, %v2077
        %v2128 = vadd.f32 %v1936, %v2014
        %v2129 = vadd.f32 %v1937, %v2078
        %v2130 = vadd.f32 %v1938, %v2015
        %v2131 = vadd.f32 %v1939, %v2079
        %v2132 = vadd.f32 %v1940, %v2016
        %v2133 = vadd.f32 %v1941, %v2080
        %v2134 = vadd.f32 %v1942, %v2017
        %v2135 = vadd.f32 %v1943, %v2081
        %v2136 = vadd.f32 %v1944, %v2018
        %v2137 = vadd.f32 %v1945, %v2082
        %v2138 = vadd.f32 %v1946, %v2019
        %v2139 = vadd.f32 %v1947, %v2083
        %v2140 = vadd.f32 %v1948, %v2020
        %v2141 = vadd.f32 %v1949, %v2084
        %v2142 = vadd.f32 %v1950, %v2021
        %v2143 = vadd.f32 %v1951, %v2085
        %v2144 = vadd.f32 %v1952, %v2022
        %v2145 = vadd.f32 %v1953, %v2086
        %v2146 = vadd.f32 %v1954, %v2023
        %v2147 = vadd.f32 %v1955, %v2087
        %v2148 = vadd.f32 %v1956, %v2024
        %v2149 = vadd.f32 %v1957, %v2088
        %v2150 = vadd.f32 %v1958, %v2025
        %v2151 = vadd.f32 %v1959, %v2089
        %v2152 = vadd.f32 %v1960, %v2026
        %v2153 = vadd.f32 %v1961, %v2090
        %v2154 = vadd.f32 %v1962, %v2027
        %v2155 = vadd.f32 %v1963, %v2091
        %v2156 = vadd.f32 %v1964, %v2044
        %v2157 = vadd.f32 %v1965, %v2108
        %v2158 = vadd.f32 %v1966, %v2045
        %v2159 = vadd.f32 %v1967, %v2109
        %v2160 = vadd.f32 %v1968, %v2046
        %v2161 = vadd.f32 %v1969, %v2110
        %v2162 = vadd.f32 %v1970, %v2047
        %v2163 = vadd.f32 %v1971, %v2111
        %v2164 = vadd.f32 %v1972, %v2048
        %v2165 = vadd.f32 %v1973, %v2112
        %v2166 = vadd.f32 %v1974, %v2049
        %v2167 = vadd.f32 %v1975, %v2113
        %v2168 = vadd.f32 %v1976, %v2050
        %v2169 = vadd.f32 %v1977, %v2114
        %v2170 = vadd.f32 %v1978, %v2051
        %v2171 = vadd.f32 %v1979, %v2115
        %v2172 = vadd.f32 %v1980, %v2052
        %v2173 = vadd.f32 %v1981, %v2116
        %v2174 = vadd.f32 %v1982, %v2053
        %v2175 = vadd.f32 %v1983, %v2117
        %v2176 = vadd.f32 %v1984, %v2054
        %v2177 = vadd.f32 %v1985, %v2118
        %v2178 = vadd.f32 %v1986, %v2055
        %v2179 = vadd.f32 %v1987, %v2119
        %v2180 = vadd.f32 %v1988, %v2056
        %v2181 = vadd.f32 %v1989, %v2120
        %v2182 = vadd.f32 %v1990, %v2057
        %v2183 = vadd.f32 %v1991, %v2121
        %v2184 = vadd.f32 %v1992, %v2058
        %v2185 = vadd.f32 %v1993, %v2122
        %v2186 = vadd.f32 %v1994, %v2059
        %v2187 = vadd.f32 %v1995, %v2123
        %s2188 = sld [smem:[#allocation5]]
        %v2189 = vstv %s2188
        %v2190 = vadd.f32 %v2124, %v2189
        %v2191 = vadd.f32 %v2125, %v2189
        %v2192 = vadd.f32 %v2126, %v2189
        %v2193 = vadd.f32 %v2127, %v2189
        %v2194 = vadd.f32 %v2128, %v2189
        %v2195 = vadd.f32 %v2129, %v2189
        %v2196 = vadd.f32 %v2130, %v2189
        %v2197 = vadd.f32 %v2131, %v2189
        %v2198 = vadd.f32 %v2132, %v2189
        %v2199 = vadd.f32 %v2133, %v2189
        %v2200 = vadd.f32 %v2134, %v2189
        %v2201 = vadd.f32 %v2135, %v2189
        %v2202 = vadd.f32 %v2136, %v2189
        %v2203 = vadd.f32 %v2137, %v2189
        %v2204 = vadd.f32 %v2138, %v2189
        %v2205 = vadd.f32 %v2139, %v2189
        %v2206 = vadd.f32 %v2140, %v2189
        %v2207 = vadd.f32 %v2141, %v2189
        %v2208 = vadd.f32 %v2142, %v2189
        %v2209 = vadd.f32 %v2143, %v2189
        %v2210 = vadd.f32 %v2144, %v2189
        %v2211 = vadd.f32 %v2145, %v2189
        %v2212 = vadd.f32 %v2146, %v2189
        %v2213 = vadd.f32 %v2147, %v2189
        %v2214 = vadd.f32 %v2148, %v2189
        %v2215 = vadd.f32 %v2149, %v2189
        %v2216 = vadd.f32 %v2150, %v2189
        %v2217 = vadd.f32 %v2151, %v2189
        %v2218 = vadd.f32 %v2152, %v2189
        %v2219 = vadd.f32 %v2153, %v2189
        %v2220 = vadd.f32 %v2154, %v2189
        %v2221 = vadd.f32 %v2155, %v2189
        %v2222 = vadd.f32 %v2156, %v2189
        %v2223 = vadd.f32 %v2157, %v2189
        %v2224 = vadd.f32 %v2158, %v2189
        %v2225 = vadd.f32 %v2159, %v2189
        %v2226 = vadd.f32 %v2160, %v2189
        %v2227 = vadd.f32 %v2161, %v2189
        %v2228 = vadd.f32 %v2162, %v2189
        %v2229 = vadd.f32 %v2163, %v2189
        %v2230 = vadd.f32 %v2164, %v2189
        %v2231 = vadd.f32 %v2165, %v2189
        %v2232 = vadd.f32 %v2166, %v2189
        %v2233 = vadd.f32 %v2167, %v2189
        %v2234 = vadd.f32 %v2168, %v2189
        %v2235 = vadd.f32 %v2169, %v2189
        %v2236 = vadd.f32 %v2170, %v2189
        %v2237 = vadd.f32 %v2171, %v2189
        %v2238 = vadd.f32 %v2172, %v2189
        %v2239 = vadd.f32 %v2173, %v2189
        %v2240 = vadd.f32 %v2174, %v2189
        %v2241 = vadd.f32 %v2175, %v2189
        %v2242 = vadd.f32 %v2176, %v2189
        %v2243 = vadd.f32 %v2177, %v2189
        %v2244 = vadd.f32 %v2178, %v2189
        %v2245 = vadd.f32 %v2179, %v2189
        %v2246 = vadd.f32 %v2180, %v2189
        %v2247 = vadd.f32 %v2181, %v2189
        %v2248 = vadd.f32 %v2182, %v2189
        %v2249 = vadd.f32 %v2183, %v2189
        %v2250 = vadd.f32 %v2184, %v2189
        %v2251 = vadd.f32 %v2185, %v2189
        %v2252 = vadd.f32 %v2186, %v2189
        %v2253 = vadd.f32 %v2187, %v2189
        %v2254 = vsub.f32 0.0, %v2190
        %v2255 = vsub.f32 0.0, %v2191
        %v2256 = vsub.f32 0.0, %v2192
        %v2257 = vsub.f32 0.0, %v2193
        %v2258 = vsub.f32 0.0, %v2194
        %v2259 = vsub.f32 0.0, %v2195
        %v2260 = vsub.f32 0.0, %v2196
        %v2261 = vsub.f32 0.0, %v2197
        %v2262 = vsub.f32 0.0, %v2198
        %v2263 = vsub.f32 0.0, %v2199
        %v2264 = vsub.f32 0.0, %v2200
        %v2265 = vsub.f32 0.0, %v2201
        %v2266 = vsub.f32 0.0, %v2202
        %v2267 = vsub.f32 0.0, %v2203
        %v2268 = vsub.f32 0.0, %v2204
        %v2269 = vsub.f32 0.0, %v2205
        %v2270 = vsub.f32 0.0, %v2206
        %v2271 = vsub.f32 0.0, %v2207
        %v2272 = vsub.f32 0.0, %v2208
        %v2273 = vsub.f32 0.0, %v2209
        %v2274 = vsub.f32 0.0, %v2210
        %v2275 = vsub.f32 0.0, %v2211
        %v2276 = vsub.f32 0.0, %v2212
        %v2277 = vsub.f32 0.0, %v2213
        %v2278 = vsub.f32 0.0, %v2214
        %v2279 = vsub.f32 0.0, %v2215
        %v2280 = vsub.f32 0.0, %v2216
        %v2281 = vsub.f32 0.0, %v2217
        %v2282 = vsub.f32 0.0, %v2218
        %v2283 = vsub.f32 0.0, %v2219
        %v2284 = vsub.f32 0.0, %v2220
        %v2285 = vsub.f32 0.0, %v2221
        %v2286 = vsub.f32 0.0, %v2222
        %v2287 = vsub.f32 0.0, %v2223
        %v2288 = vsub.f32 0.0, %v2224
        %v2289 = vsub.f32 0.0, %v2225
        %v2290 = vsub.f32 0.0, %v2226
        %v2291 = vsub.f32 0.0, %v2227
        %v2292 = vsub.f32 0.0, %v2228
        %v2293 = vsub.f32 0.0, %v2229
        %v2294 = vsub.f32 0.0, %v2230
        %v2295 = vsub.f32 0.0, %v2231
        %v2296 = vsub.f32 0.0, %v2232
        %v2297 = vsub.f32 0.0, %v2233
        %v2298 = vsub.f32 0.0, %v2234
        %v2299 = vsub.f32 0.0, %v2235
        %v2300 = vsub.f32 0.0, %v2236
        %v2301 = vsub.f32 0.0, %v2237
        %v2302 = vsub.f32 0.0, %v2238
        %v2303 = vsub.f32 0.0, %v2239
        %v2304 = vsub.f32 0.0, %v2240
        %v2305 = vsub.f32 0.0, %v2241
        %v2306 = vsub.f32 0.0, %v2242
        %v2307 = vsub.f32 0.0, %v2243
        %v2308 = vsub.f32 0.0, %v2244
        %v2309 = vsub.f32 0.0, %v2245
        %v2310 = vsub.f32 0.0, %v2246
        %v2311 = vsub.f32 0.0, %v2247
        %v2312 = vsub.f32 0.0, %v2248
        %v2313 = vsub.f32 0.0, %v2249
        %v2314 = vsub.f32 0.0, %v2250
        %v2315 = vsub.f32 0.0, %v2251
        %v2316 = vsub.f32 0.0, %v2252
        %v2317 = vsub.f32 0.0, %v2253
        %v2318 = vmul.f32 %v2254, 1.442695
        %v2319 = vpow.pop %v2318
        %v2320 = vmul.f32 %v2255, 1.442695
        %v2321 = vpow.pop %v2320
        %v2322 = vmul.f32 %v2256, 1.442695
        %v2323 = vpow.pop %v2322
        %v2324 = vmul.f32 %v2257, 1.442695
        %v2325 = vpow.pop %v2324
        %v2326 = vmul.f32 %v2258, 1.442695
        %v2327 = vpow.pop %v2326
        %v2328 = vmul.f32 %v2259, 1.442695
        %v2329 = vpow.pop %v2328
        %v2330 = vmul.f32 %v2260, 1.442695
        %v2331 = vpow.pop %v2330
        %v2332 = vmul.f32 %v2261, 1.442695
        %v2333 = vpow.pop %v2332
        %v2334 = vmul.f32 %v2262, 1.442695
        %v2335 = vpow.pop %v2334
        %v2336 = vmul.f32 %v2263, 1.442695
        %v2337 = vpow.pop %v2336
        %v2338 = vmul.f32 %v2264, 1.442695
        %v2339 = vpow.pop %v2338
        %v2340 = vmul.f32 %v2265, 1.442695
        %v2341 = vpow.pop %v2340
        %v2342 = vmul.f32 %v2266, 1.442695
        %v2343 = vpow.pop %v2342
        %v2344 = vmul.f32 %v2267, 1.442695
        %v2345 = vpow.pop %v2344
        %v2346 = vmul.f32 %v2268, 1.442695
        %v2347 = vpow.pop %v2346
        %v2348 = vmul.f32 %v2269, 1.442695
        %v2349 = vpow.pop %v2348
        %v2350 = vmul.f32 %v2270, 1.442695
        %v2351 = vpow.pop %v2350
        %v2352 = vmul.f32 %v2271, 1.442695
        %v2353 = vpow.pop %v2352
        %v2354 = vmul.f32 %v2272, 1.442695
        %v2355 = vpow.pop %v2354
        %v2356 = vmul.f32 %v2273, 1.442695
        %v2357 = vpow.pop %v2356
        %v2358 = vmul.f32 %v2274, 1.442695
        %v2359 = vpow.pop %v2358
        %v2360 = vmul.f32 %v2275, 1.442695
        %v2361 = vpow.pop %v2360
        %v2362 = vmul.f32 %v2276, 1.442695
        %v2363 = vpow.pop %v2362
        %v2364 = vmul.f32 %v2277, 1.442695
        %v2365 = vpow.pop %v2364
        %v2366 = vmul.f32 %v2278, 1.442695
        %v2367 = vpow.pop %v2366
        %v2368 = vmul.f32 %v2279, 1.442695
        %v2369 = vpow.pop %v2368
        %v2370 = vmul.f32 %v2280, 1.442695
        %v2371 = vpow.pop %v2370
        %v2372 = vmul.f32 %v2281, 1.442695
        %v2373 = vpow.pop %v2372
        %v2374 = vmul.f32 %v2282, 1.442695
        %v2375 = vpow.pop %v2374
        %v2376 = vmul.f32 %v2283, 1.442695
        %v2377 = vpow.pop %v2376
        %v2378 = vmul.f32 %v2284, 1.442695
        %v2379 = vpow.pop %v2378
        %v2380 = vmul.f32 %v2285, 1.442695
        %v2381 = vpow.pop %v2380
        %v2382 = vmul.f32 %v2286, 1.442695
        %v2383 = vpow.pop %v2382
        %v2384 = vmul.f32 %v2287, 1.442695
        %v2385 = vpow.pop %v2384
        %v2386 = vmul.f32 %v2288, 1.442695
        %v2387 = vpow.pop %v2386
        %v2388 = vmul.f32 %v2289, 1.442695
        %v2389 = vpow.pop %v2388
        %v2390 = vmul.f32 %v2290, 1.442695
        %v2391 = vpow.pop %v2390
        %v2392 = vmul.f32 %v2291, 1.442695
        %v2393 = vpow.pop %v2392
        %v2394 = vmul.f32 %v2292, 1.442695
        %v2395 = vpow.pop %v2394
        %v2396 = vmul.f32 %v2293, 1.442695
        %v2397 = vpow.pop %v2396
        %v2398 = vmul.f32 %v2294, 1.442695
        %v2399 = vpow.pop %v2398
        %v2400 = vmul.f32 %v2295, 1.442695
        %v2401 = vpow.pop %v2400
        %v2402 = vmul.f32 %v2296, 1.442695
        %v2403 = vpow.pop %v2402
        %v2404 = vmul.f32 %v2297, 1.442695
        %v2405 = vpow.pop %v2404
        %v2406 = vmul.f32 %v2298, 1.442695
        %v2407 = vpow.pop %v2406
        %v2408 = vmul.f32 %v2299, 1.442695
        %v2409 = vpow.pop %v2408
        %v2410 = vmul.f32 %v2300, 1.442695
        %v2411 = vpow.pop %v2410
        %v2412 = vmul.f32 %v2301, 1.442695
        %v2413 = vpow.pop %v2412
        %v2414 = vmul.f32 %v2302, 1.442695
        %v2415 = vpow.pop %v2414
        %v2416 = vmul.f32 %v2303, 1.442695
        %v2417 = vpow.pop %v2416
        %v2418 = vmul.f32 %v2304, 1.442695
        %v2419 = vpow.pop %v2418
        %v2420 = vmul.f32 %v2305, 1.442695
        %v2421 = vpow.pop %v2420
        %v2422 = vmul.f32 %v2306, 1.442695
        %v2423 = vpow.pop %v2422
        %v2424 = vmul.f32 %v2307, 1.442695
        %v2425 = vpow.pop %v2424
        %v2426 = vmul.f32 %v2308, 1.442695
        %v2427 = vpow.pop %v2426
        %v2428 = vmul.f32 %v2309, 1.442695
        %v2429 = vpow.pop %v2428
        %v2430 = vmul.f32 %v2310, 1.442695
        %v2431 = vpow.pop %v2430
        %v2432 = vmul.f32 %v2311, 1.442695
        %v2433 = vpow.pop %v2432
        %v2434 = vmul.f32 %v2312, 1.442695
        %v2435 = vpow.pop %v2434
        %v2436 = vmul.f32 %v2313, 1.442695
        %v2437 = vpow.pop %v2436
        %v2438 = vmul.f32 %v2314, 1.442695
        %v2439 = vpow.pop %v2438
        %v2440 = vmul.f32 %v2315, 1.442695
        %v2441 = vpow.pop %v2440
        %v2442 = vmul.f32 %v2316, 1.442695
        %v2443 = vpow.pop %v2442
        %v2444 = vmul.f32 %v2317, 1.442695
        %v2445 = vpow.pop %v2444
        %v2446 = vadd.f32 %v2319, 1.0
        %v2447 = vadd.f32 %v2321, 1.0
        %v2448 = vadd.f32 %v2323, 1.0
        %v2449 = vadd.f32 %v2325, 1.0
        %v2450 = vadd.f32 %v2327, 1.0
        %v2451 = vadd.f32 %v2329, 1.0
        %v2452 = vadd.f32 %v2331, 1.0
        %v2453 = vadd.f32 %v2333, 1.0
        %v2454 = vadd.f32 %v2335, 1.0
        %v2455 = vadd.f32 %v2337, 1.0
        %v2456 = vadd.f32 %v2339, 1.0
        %v2457 = vadd.f32 %v2341, 1.0
        %v2458 = vadd.f32 %v2343, 1.0
        %v2459 = vadd.f32 %v2345, 1.0
        %v2460 = vadd.f32 %v2347, 1.0
        %v2461 = vadd.f32 %v2349, 1.0
        %v2462 = vadd.f32 %v2351, 1.0
        %v2463 = vadd.f32 %v2353, 1.0
        %v2464 = vadd.f32 %v2355, 1.0
        %v2465 = vadd.f32 %v2357, 1.0
        %v2466 = vadd.f32 %v2359, 1.0
        %v2467 = vadd.f32 %v2361, 1.0
        %v2468 = vadd.f32 %v2363, 1.0
        %v2469 = vadd.f32 %v2365, 1.0
        %v2470 = vadd.f32 %v2367, 1.0
        %v2471 = vadd.f32 %v2369, 1.0
        %v2472 = vadd.f32 %v2371, 1.0
        %v2473 = vadd.f32 %v2373, 1.0
        %v2474 = vadd.f32 %v2375, 1.0
        %v2475 = vadd.f32 %v2377, 1.0
        %v2476 = vadd.f32 %v2379, 1.0
        %v2477 = vadd.f32 %v2381, 1.0
        %v2478 = vadd.f32 %v2383, 1.0
        %v2479 = vadd.f32 %v2385, 1.0
        %v2480 = vadd.f32 %v2387, 1.0
        %v2481 = vadd.f32 %v2389, 1.0
        %v2482 = vadd.f32 %v2391, 1.0
        %v2483 = vadd.f32 %v2393, 1.0
        %v2484 = vadd.f32 %v2395, 1.0
        %v2485 = vadd.f32 %v2397, 1.0
        %v2486 = vadd.f32 %v2399, 1.0
        %v2487 = vadd.f32 %v2401, 1.0
        %v2488 = vadd.f32 %v2403, 1.0
        %v2489 = vadd.f32 %v2405, 1.0
        %v2490 = vadd.f32 %v2407, 1.0
        %v2491 = vadd.f32 %v2409, 1.0
        %v2492 = vadd.f32 %v2411, 1.0
        %v2493 = vadd.f32 %v2413, 1.0
        %v2494 = vadd.f32 %v2415, 1.0
        %v2495 = vadd.f32 %v2417, 1.0
        %v2496 = vadd.f32 %v2419, 1.0
        %v2497 = vadd.f32 %v2421, 1.0
        %v2498 = vadd.f32 %v2423, 1.0
        %v2499 = vadd.f32 %v2425, 1.0
        %v2500 = vadd.f32 %v2427, 1.0
        %v2501 = vadd.f32 %v2429, 1.0
        %v2502 = vadd.f32 %v2431, 1.0
        %v2503 = vadd.f32 %v2433, 1.0
        %v2504 = vadd.f32 %v2435, 1.0
        %v2505 = vadd.f32 %v2437, 1.0
        %v2506 = vadd.f32 %v2439, 1.0
        %v2507 = vadd.f32 %v2441, 1.0
        %v2508 = vadd.f32 %v2443, 1.0
        %v2509 = vadd.f32 %v2445, 1.0
        %v2510 = vrcp.pop %v2446
        %v2511 = vrcp.pop %v2447
        %v2512 = vrcp.pop %v2448
        %v2513 = vrcp.pop %v2449
        %v2514 = vrcp.pop %v2450
        %v2515 = vrcp.pop %v2451
        %v2516 = vrcp.pop %v2452
        %v2517 = vrcp.pop %v2453
        %v2518 = vrcp.pop %v2454
        %v2519 = vrcp.pop %v2455
        %v2520 = vrcp.pop %v2456
        %v2521 = vrcp.pop %v2457
        %v2522 = vrcp.pop %v2458
        %v2523 = vrcp.pop %v2459
        %v2524 = vrcp.pop %v2460
        %v2525 = vrcp.pop %v2461
        %v2526 = vrcp.pop %v2462
        %v2527 = vrcp.pop %v2463
        %v2528 = vrcp.pop %v2464
        %v2529 = vrcp.pop %v2465
        %v2530 = vrcp.pop %v2466
        %v2531 = vrcp.pop %v2467
        %v2532 = vrcp.pop %v2468
        %v2533 = vrcp.pop %v2469
        %v2534 = vrcp.pop %v2470
        %v2535 = vrcp.pop %v2471
        %v2536 = vrcp.pop %v2472
        %v2537 = vrcp.pop %v2473
        %v2538 = vrcp.pop %v2474
        %v2539 = vrcp.pop %v2475
        %v2540 = vrcp.pop %v2476
        %v2541 = vrcp.pop %v2477
        %v2542 = vrcp.pop %v2478
        %v2543 = vrcp.pop %v2479
        %v2544 = vrcp.pop %v2480
        %v2545 = vrcp.pop %v2481
        %v2546 = vrcp.pop %v2482
        %v2547 = vrcp.pop %v2483
        %v2548 = vrcp.pop %v2484
        %v2549 = vrcp.pop %v2485
        %v2550 = vrcp.pop %v2486
        %v2551 = vrcp.pop %v2487
        %v2552 = vrcp.pop %v2488
        %v2553 = vrcp.pop %v2489
        %v2554 = vrcp.pop %v2490
        %v2555 = vrcp.pop %v2491
        %v2556 = vrcp.pop %v2492
        %v2557 = vrcp.pop %v2493
        %v2558 = vrcp.pop %v2494
        %v2559 = vrcp.pop %v2495
        %v2560 = vrcp.pop %v2496
        %v2561 = vrcp.pop %v2497
        %v2562 = vrcp.pop %v2498
        %v2563 = vrcp.pop %v2499
        %v2564 = vrcp.pop %v2500
        %v2565 = vrcp.pop %v2501
        %v2566 = vrcp.pop %v2502
        %v2567 = vrcp.pop %v2503
        %v2568 = vrcp.pop %v2504
        %v2569 = vrcp.pop %v2505
        %v2570 = vrcp.pop %v2506
        %v2571 = vrcp.pop %v2507
        %v2572 = vrcp.pop %v2508
        %v2573 = vrcp.pop %v2509
        %2574 = vst [vmem:[%s996] sm:$0xff] %v2510
        %2575 = vst [vmem:[%s996 + $0x8] sm:$0xff] %v2511
        %2576 = vst [vmem:[%s996 + $0x10] sm:$0xff] %v2512
        %2577 = vst [vmem:[%s996 + $0x18] sm:$0xff] %v2513
        %2578 = vst [vmem:[%s996 + $0x20] sm:$0xff] %v2514
        %2579 = vst [vmem:[%s996 + $0x28] sm:$0xff] %v2515
        %2580 = vst [vmem:[%s996 + $0x30] sm:$0xff] %v2516
        %2581 = vst [vmem:[%s996 + $0x38] sm:$0xff] %v2517
        %2582 = vst [vmem:[%s996 + $0x40] sm:$0xff] %v2518
        %2583 = vst [vmem:[%s996 + $0x48] sm:$0xff] %v2519
        %2584 = vst [vmem:[%s996 + $0x50] sm:$0xff] %v2520
        %2585 = vst [vmem:[%s996 + $0x58] sm:$0xff] %v2521
        %2586 = vst [vmem:[%s996 + $0x60] sm:$0xff] %v2522
        %2587 = vst [vmem:[%s996 + $0x68] sm:$0xff] %v2523
        %2588 = vst [vmem:[%s996 + $0x70] sm:$0xff] %v2524
        %2589 = vst [vmem:[%s996 + $0x78] sm:$0xff] %v2525
        %2590 = vst [vmem:[%s996 + $0x80] sm:$0xff] %v2526
        %2591 = vst [vmem:[%s996 + $0x88] sm:$0xff] %v2527
        %2592 = vst [vmem:[%s996 + $0x90] sm:$0xff] %v2528
        %2593 = vst [vmem:[%s996 + $0x98] sm:$0xff] %v2529
        %2594 = vst [vmem:[%s996 + $0xa0] sm:$0xff] %v2530
        %2595 = vst [vmem:[%s996 + $0xa8] sm:$0xff] %v2531
        %2596 = vst [vmem:[%s996 + $0xb0] sm:$0xff] %v2532
        %2597 = vst [vmem:[%s996 + $0xb8] sm:$0xff] %v2533
        %2598 = vst [vmem:[%s996 + $0xc0] sm:$0xff] %v2534
        %2599 = vst [vmem:[%s996 + $0xc8] sm:$0xff] %v2535
        %2600 = vst [vmem:[%s996 + $0xd0] sm:$0xff] %v2536
        %2601 = vst [vmem:[%s996 + $0xd8] sm:$0xff] %v2537
        %2602 = vst [vmem:[%s996 + $0xe0] sm:$0xff] %v2538
        %2603 = vst [vmem:[%s996 + $0xe8] sm:$0xff] %v2539
        %2604 = vst [vmem:[%s996 + $0xf0] sm:$0xff] %v2540
        %2605 = vst [vmem:[%s996 + $0xf8] sm:$0xff] %v2541
        %2606 = vst [vmem:[%s996 + $0x100] sm:$0xff] %v2542
        %2607 = vst [vmem:[%s996 + $0x108] sm:$0xff] %v2543
        %2608 = vst [vmem:[%s996 + $0x110] sm:$0xff] %v2544
        %2609 = vst [vmem:[%s996 + $0x118] sm:$0xff] %v2545
        %2610 = vst [vmem:[%s996 + $0x120] sm:$0xff] %v2546
        %2611 = vst [vmem:[%s996 + $0x128] sm:$0xff] %v2547
        %2612 = vst [vmem:[%s996 + $0x130] sm:$0xff] %v2548
        %2613 = vst [vmem:[%s996 + $0x138] sm:$0xff] %v2549
        %2614 = vst [vmem:[%s996 + $0x140] sm:$0xff] %v2550
        %2615 = vst [vmem:[%s996 + $0x148] sm:$0xff] %v2551
        %2616 = vst [vmem:[%s996 + $0x150] sm:$0xff] %v2552
        %2617 = vst [vmem:[%s996 + $0x158] sm:$0xff] %v2553
        %2618 = vst [vmem:[%s996 + $0x160] sm:$0xff] %v2554
        %2619 = vst [vmem:[%s996 + $0x168] sm:$0xff] %v2555
        %2620 = vst [vmem:[%s996 + $0x170] sm:$0xff] %v2556
        %2621 = vst [vmem:[%s996 + $0x178] sm:$0xff] %v2557
        %2622 = vst [vmem:[%s996 + $0x180] sm:$0xff] %v2558
        %2623 = vst [vmem:[%s996 + $0x188] sm:$0xff] %v2559
        %2624 = vst [vmem:[%s996 + $0x190] sm:$0xff] %v2560
        %2625 = vst [vmem:[%s996 + $0x198] sm:$0xff] %v2561
        %2626 = vst [vmem:[%s996 + $0x1a0] sm:$0xff] %v2562
        %2627 = vst [vmem:[%s996 + $0x1a8] sm:$0xff] %v2563
        %2628 = vst [vmem:[%s996 + $0x1b0] sm:$0xff] %v2564
        %2629 = vst [vmem:[%s996 + $0x1b8] sm:$0xff] %v2565
        %2630 = vst [vmem:[%s996 + $0x1c0] sm:$0xff] %v2566
        %2631 = vst [vmem:[%s996 + $0x1c8] sm:$0xff] %v2567
        %2632 = vst [vmem:[%s996 + $0x1d0] sm:$0xff] %v2568
        %2633 = vst [vmem:[%s996 + $0x1d8] sm:$0xff] %v2569
        %2634 = vst [vmem:[%s996 + $0x1e0] sm:$0xff] %v2570
        %2635 = vst [vmem:[%s996 + $0x1e8] sm:$0xff] %v2571
        %2636 = vst [vmem:[%s996 + $0x1f0] sm:$0xff] %v2572
        %2637 = vst [vmem:[%s996 + $0x1f8] sm:$0xff] %v2573
        %v2638 = vld [vmem:[%s1051] sm:$0xf]
        %v2639 = vld [vmem:[%s1051 + $0x4] sm:$0xf]
        %v2640 = vld [vmem:[%s1051 + $0x8] sm:$0xf]
        %v2641 = vld [vmem:[%s1051 + $0xc] sm:$0xf]
        %v2642 = vld [vmem:[%s1051 + $0x10] sm:$0xf]
        %v2643 = vld [vmem:[%s1051 + $0x14] sm:$0xf]
        %v2644 = vld [vmem:[%s1051 + $0x18] sm:$0xf]
        %v2645 = vld [vmem:[%s1051 + $0x1c] sm:$0xf]
        %v2646 = vunpack.c.l.bf16 %v2638
        %v2647 = vunpack.c.l.bf16 %v2639
        %v2648 = vunpack.c.l.bf16 %v2640
        %v2649 = vunpack.c.l.bf16 %v2641
        %v2650 = vunpack.c.l.bf16 %v2642
        %v2651 = vunpack.c.l.bf16 %v2643
        %v2652 = vunpack.c.l.bf16 %v2644
        %v2653 = vunpack.c.l.bf16 %v2645
        %v2654 = vld [vmem:[%s1056] sm:$0xf]
        %v2655 = vld [vmem:[%s1056 + $0x4] sm:$0xf]
        %v2656 = vld [vmem:[%s1056 + $0x8] sm:$0xf]
        %v2657 = vld [vmem:[%s1056 + $0xc] sm:$0xf]
        %v2658 = vld [vmem:[%s1056 + $0x10] sm:$0xf]
        %v2659 = vld [vmem:[%s1056 + $0x14] sm:$0xf]
        %v2660 = vld [vmem:[%s1056 + $0x18] sm:$0xf]
        %v2661 = vld [vmem:[%s1056 + $0x1c] sm:$0xf]
        %v2662 = vunpack.c.l.bf16 %v2654
        %v2663 = vunpack.c.l.bf16 %v2655
        %v2664 = vunpack.c.l.bf16 %v2656
        %v2665 = vunpack.c.l.bf16 %v2657
        %v2666 = vunpack.c.l.bf16 %v2658
        %v2667 = vunpack.c.l.bf16 %v2659
        %v2668 = vunpack.c.l.bf16 %v2660
        %v2669 = vunpack.c.l.bf16 %v2661
        %v2670 = vadd.f32 %v2646, %v2662
        %v2671 = vadd.f32 %v2647, %v2663
        %v2672 = vadd.f32 %v2648, %v2664
        %v2673 = vadd.f32 %v2649, %v2665
        %v2674 = vadd.f32 %v2650, %v2666
        %v2675 = vadd.f32 %v2651, %v2667
        %v2676 = vadd.f32 %v2652, %v2668
        %v2677 = vadd.f32 %v2653, %v2669
        %s2678 = sld [smem:[#allocation2 + $0x1]]
        %v2679 = vstv %s2678
        %v2680 = vmul.f32 %v2670, %v2679
        %v2681 = vmul.f32 %v2671, %v2679
        %v2682 = vmul.f32 %v2672, %v2679
        %v2683 = vmul.f32 %v2673, %v2679
        %v2684 = vmul.f32 %v2674, %v2679
        %v2685 = vmul.f32 %v2675, %v2679
        %v2686 = vmul.f32 %v2676, %v2679
        %v2687 = vmul.f32 %v2677, %v2679
        %s2688 = scalar_lea.vmem %s1051, 32
        %v2689 = vld [vmem:[%s2688] sm:$0xf]
        %v2690 = vld [vmem:[%s2688 + $0x4] sm:$0xf]
        %v2691 = vld [vmem:[%s2688 + $0x8] sm:$0xf]
        %v2692 = vld [vmem:[%s2688 + $0xc] sm:$0xf]
        %v2693 = vld [vmem:[%s2688 + $0x10] sm:$0xf]
        %v2694 = vld [vmem:[%s2688 + $0x14] sm:$0xf]
        %v2695 = vld [vmem:[%s2688 + $0x18] sm:$0xf]
        %v2696 = vld [vmem:[%s2688 + $0x1c] sm:$0xf]
        %v2697 = vunpack.c.l.bf16 %v2689
        %v2698 = vunpack.c.l.bf16 %v2690
        %v2699 = vunpack.c.l.bf16 %v2691
        %v2700 = vunpack.c.l.bf16 %v2692
        %v2701 = vunpack.c.l.bf16 %v2693
        %v2702 = vunpack.c.l.bf16 %v2694
        %v2703 = vunpack.c.l.bf16 %v2695
        %v2704 = vunpack.c.l.bf16 %v2696
        %s2705 = scalar_lea.vmem %s1056, 32
        %v2706 = vld [vmem:[%s2705] sm:$0xf]
        %v2707 = vld [vmem:[%s2705 + $0x4] sm:$0xf]
        %v2708 = vld [vmem:[%s2705 + $0x8] sm:$0xf]
        %v2709 = vld [vmem:[%s2705 + $0xc] sm:$0xf]
        %v2710 = vld [vmem:[%s2705 + $0x10] sm:$0xf]
        %v2711 = vld [vmem:[%s2705 + $0x14] sm:$0xf]
        %v2712 = vld [vmem:[%s2705 + $0x18] sm:$0xf]
        %v2713 = vld [vmem:[%s2705 + $0x1c] sm:$0xf]
        %v2714 = vunpack.c.l.bf16 %v2706
        %v2715 = vunpack.c.l.bf16 %v2707
        %v2716 = vunpack.c.l.bf16 %v2708
        %v2717 = vunpack.c.l.bf16 %v2709
        %v2718 = vunpack.c.l.bf16 %v2710
        %v2719 = vunpack.c.l.bf16 %v2711
        %v2720 = vunpack.c.l.bf16 %v2712
        %v2721 = vunpack.c.l.bf16 %v2713
        %v2722 = vadd.f32 %v2697, %v2714
        %v2723 = vadd.f32 %v2698, %v2715
        %v2724 = vadd.f32 %v2699, %v2716
        %v2725 = vadd.f32 %v2700, %v2717
        %v2726 = vadd.f32 %v2701, %v2718
        %v2727 = vadd.f32 %v2702, %v2719
        %v2728 = vadd.f32 %v2703, %v2720
        %v2729 = vadd.f32 %v2704, %v2721
        %s2730 = sld [smem:[#allocation2 + $0x2]]
        %v2731 = vstv %s2730
        %v2732 = vmul.f32 %v2722, %v2731
        %v2733 = vmul.f32 %v2723, %v2731
        %v2734 = vmul.f32 %v2724, %v2731
        %v2735 = vmul.f32 %v2725, %v2731
        %v2736 = vmul.f32 %v2726, %v2731
        %v2737 = vmul.f32 %v2727, %v2731
        %v2738 = vmul.f32 %v2728, %v2731
        %v2739 = vmul.f32 %v2729, %v2731
        %v2740 = vadd.f32 %v2680, %v2732
        %v2741 = vadd.f32 %v2681, %v2733
        %v2742 = vadd.f32 %v2682, %v2734
        %v2743 = vadd.f32 %v2683, %v2735
        %v2744 = vadd.f32 %v2684, %v2736
        %v2745 = vadd.f32 %v2685, %v2737
        %v2746 = vadd.f32 %v2686, %v2738
        %v2747 = vadd.f32 %v2687, %v2739
        %2748 = vxpose.xlu0.b32.start [1/16] %v2740, 128
        %2749 = vxpose.xlu0.b32.cont [2/16] %v2741, 128
        %2750 = vxpose.xlu0.b32.cont [3/16] %v2742, 128
        %2751 = vxpose.xlu0.b32.cont [4/16] %v2743, 128
        %2752 = vxpose.xlu0.b32.cont [5/16] %v2744, 128
        %2753 = vxpose.xlu0.b32.cont [6/16] %v2745, 128
        %2754 = vxpose.xlu0.b32.cont [7/16] %v2746, 128
        %2755 = vxpose.xlu0.b32.cont [8/16] %v2747, 128
        %2756 = vxpose.xlu0.b32.cont [9/16] 0.0, 128
        %2757 = vxpose.xlu0.b32.cont [10/16] 0.0, 128
        %2758 = vxpose.xlu0.b32.cont [11/16] 0.0, 128
        %2759 = vxpose.xlu0.b32.cont [12/16] 0.0, 128
        %2760 = vxpose.xlu0.b32.cont [13/16] 0.0, 128
        %2761 = vxpose.xlu0.b32.cont [14/16] 0.0, 128
        %2762 = vxpose.xlu0.b32.cont [15/16] 0.0, 128
        %2763 = vxpose.xlu0.b32.end [16/16] 0.0, 128
        %v2764 = vpop.trf.xlu0
        %v2765 = vpop.trf.xlu0
        %v2766 = vpop.trf.xlu0
        %v2767 = vpop.trf.xlu0
        %v2768 = vpop.trf.xlu0
        %v2769 = vpop.trf.xlu0
        %v2770 = vpop.trf.xlu0
        %v2771 = vpop.trf.xlu0
        %v2772 = vpop.trf.xlu0
        %v2773 = vpop.trf.xlu0
        %v2774 = vpop.trf.xlu0
        %v2775 = vpop.trf.xlu0
        %v2776 = vpop.trf.xlu0
        %v2777 = vpop.trf.xlu0
        %v2778 = vpop.trf.xlu0
        %v2779 = vpop.trf.xlu0
        %v2780 = vadd.f32 %v2740, %v2764
        %v2781 = vadd.f32 %v2741, %v2765
        %v2782 = vadd.f32 %v2742, %v2766
        %v2783 = vadd.f32 %v2743, %v2767
        %v2784 = vadd.f32 %v2744, %v2768
        %v2785 = vadd.f32 %v2745, %v2769
        %v2786 = vadd.f32 %v2746, %v2770
        %v2787 = vadd.f32 %v2747, %v2771
        %s2788 = sld [smem:[#allocation5 + $0x1]]
        %v2789 = vstv %s2788
        %v2790 = vadd.f32 %v2780, %v2789
        %v2791 = vadd.f32 %v2781, %v2789
        %v2792 = vadd.f32 %v2782, %v2789
        %v2793 = vadd.f32 %v2783, %v2789
        %v2794 = vadd.f32 %v2784, %v2789
        %v2795 = vadd.f32 %v2785, %v2789
        %v2796 = vadd.f32 %v2786, %v2789
        %v2797 = vadd.f32 %v2787, %v2789
        %v2798 = vsub.f32 0.0, %v2790
        %v2799 = vsub.f32 0.0, %v2791
        %v2800 = vsub.f32 0.0, %v2792
        %v2801 = vsub.f32 0.0, %v2793
        %v2802 = vsub.f32 0.0, %v2794
        %v2803 = vsub.f32 0.0, %v2795
        %v2804 = vsub.f32 0.0, %v2796
        %v2805 = vsub.f32 0.0, %v2797
        %v2806 = vmul.f32 %v2798, 1.442695
        %v2807 = vpow.pop %v2806
        %v2808 = vmul.f32 %v2799, 1.442695
        %v2809 = vpow.pop %v2808
        %v2810 = vmul.f32 %v2800, 1.442695
        %v2811 = vpow.pop %v2810
        %v2812 = vmul.f32 %v2801, 1.442695
        %v2813 = vpow.pop %v2812
        %v2814 = vmul.f32 %v2802, 1.442695
        %v2815 = vpow.pop %v2814
        %v2816 = vmul.f32 %v2803, 1.442695
        %v2817 = vpow.pop %v2816
        %v2818 = vmul.f32 %v2804, 1.442695
        %v2819 = vpow.pop %v2818
        %v2820 = vmul.f32 %v2805, 1.442695
        %v2821 = vpow.pop %v2820
        %v2822 = vadd.f32 %v2807, 1.0
        %v2823 = vadd.f32 %v2809, 1.0
        %v2824 = vadd.f32 %v2811, 1.0
        %v2825 = vadd.f32 %v2813, 1.0
        %v2826 = vadd.f32 %v2815, 1.0
        %v2827 = vadd.f32 %v2817, 1.0
        %v2828 = vadd.f32 %v2819, 1.0
        %v2829 = vadd.f32 %v2821, 1.0
        %v2830 = vrcp.pop %v2822
        %v2831 = vrcp.pop %v2823
        %v2832 = vrcp.pop %v2824
        %v2833 = vrcp.pop %v2825
        %v2834 = vrcp.pop %v2826
        %v2835 = vrcp.pop %v2827
        %v2836 = vrcp.pop %v2828
        %v2837 = vrcp.pop %v2829
        %2838 = vst.msk [vmem:[%s1003] sm:$0xff] %vm1599, %v2830
        %2839 = vst.msk [vmem:[%s1003 + $0x8] sm:$0xff] %vm1599, %v2831
        %2840 = vst.msk [vmem:[%s1003 + $0x10] sm:$0xff] %vm1599, %v2832
        %2841 = vst.msk [vmem:[%s1003 + $0x18] sm:$0xff] %vm1599, %v2833
        %2842 = vst.msk [vmem:[%s1003 + $0x20] sm:$0xff] %vm1599, %v2834
        %2843 = vst.msk [vmem:[%s1003 + $0x28] sm:$0xff] %vm1599, %v2835
        %2844 = vst.msk [vmem:[%s1003 + $0x30] sm:$0xff] %vm1599, %v2836
        %2845 = vst.msk [vmem:[%s1003 + $0x38] sm:$0xff] %vm1599, %v2837
        %v2846 = vld [vmem:[%s1061] sm:$0xf]
        %v2847 = vld [vmem:[%s1061 + $0x4] sm:$0xf]
        %v2848 = vunpack.c.l.bf16 %v2846
        %v2849 = vunpack.c.l.bf16 %v2847
        %v2850 = vld [vmem:[%s1066] sm:$0xf]
        %v2851 = vld [vmem:[%s1066 + $0x4] sm:$0xf]
        %v2852 = vunpack.c.l.bf16 %v2850
        %v2853 = vunpack.c.l.bf16 %v2851
        %v2854 = vadd.f32 %v2848, %v2852
        %v2855 = vadd.f32 %v2849, %v2853
        %s2856 = sld [smem:[#allocation2 + $0x3]]
        %v2857 = vstv %s2856
        %v2858 = vmul.f32 %v2854, %v2857
        %v2859 = vmul.f32 %v2855, %v2857
        %s2860 = scalar_lea.vmem %s1061, 8
        %v2861 = vld [vmem:[%s2860] sm:$0xf]
        %v2862 = vld [vmem:[%s2860 + $0x4] sm:$0xf]
        %v2863 = vunpack.c.l.bf16 %v2861
        %v2864 = vunpack.c.l.bf16 %v2862
        %s2865 = scalar_lea.vmem %s1066, 8
        %v2866 = vld [vmem:[%s2865] sm:$0xf]
        %v2867 = vld [vmem:[%s2865 + $0x4] sm:$0xf]
        %v2868 = vunpack.c.l.bf16 %v2866
        %v2869 = vunpack.c.l.bf16 %v2867
        %v2870 = vadd.f32 %v2863, %v2868
        %v2871 = vadd.f32 %v2864, %v2869
        %s2872 = sld [smem:[#allocation2 + $0x4]]
        %v2873 = vstv %s2872
        %v2874 = vmul.f32 %v2870, %v2873
        %v2875 = vmul.f32 %v2871, %v2873
        %v2876 = vadd.f32 %v2858, %v2874
        %v2877 = vadd.f32 %v2859, %v2875
        %s2878 = scalar_lea.vmem %s1061, 16
        %v2879 = vld [vmem:[%s2878] sm:$0xf]
        %v2880 = vld [vmem:[%s2878 + $0x4] sm:$0xf]
        %v2881 = vunpack.c.l.bf16 %v2879
        %v2882 = vunpack.c.l.bf16 %v2880
        %s2883 = scalar_lea.vmem %s1066, 16
        %v2884 = vld [vmem:[%s2883] sm:$0xf]
        %v2885 = vld [vmem:[%s2883 + $0x4] sm:$0xf]
        %v2886 = vunpack.c.l.bf16 %v2884
        %v2887 = vunpack.c.l.bf16 %v2885
        %v2888 = vadd.f32 %v2881, %v2886
        %v2889 = vadd.f32 %v2882, %v2887
        %s2890 = sld [smem:[#allocation2 + $0x5]]
        %v2891 = vstv %s2890
        %v2892 = vmul.f32 %v2888, %v2891
        %v2893 = vmul.f32 %v2889, %v2891
        %v2894 = vadd.f32 %v2876, %v2892
        %v2895 = vadd.f32 %v2877, %v2893
        %s2896 = scalar_lea.vmem %s1061, 24
        %v2897 = vld [vmem:[%s2896] sm:$0xf]
        %v2898 = vld [vmem:[%s2896 + $0x4] sm:$0xf]
        %v2899 = vunpack.c.l.bf16 %v2897
        %v2900 = vunpack.c.l.bf16 %v2898
        %s2901 = scalar_lea.vmem %s1066, 24
        %v2902 = vld [vmem:[%s2901] sm:$0xf]
        %v2903 = vld [vmem:[%s2901 + $0x4] sm:$0xf]
        %v2904 = vunpack.c.l.bf16 %v2902
        %v2905 = vunpack.c.l.bf16 %v2903
        %v2906 = vadd.f32 %v2899, %v2904
        %v2907 = vadd.f32 %v2900, %v2905
        %s2908 = sld [smem:[#allocation2 + $0x6]]
        %v2909 = vstv %s2908
        %v2910 = vmul.f32 %v2906, %v2909
        %v2911 = vmul.f32 %v2907, %v2909
        %v2912 = vadd.f32 %v2894, %v2910
        %v2913 = vadd.f32 %v2895, %v2911
        %s2914 = scalar_lea.vmem %s1061, 32
        %v2915 = vld [vmem:[%s2914] sm:$0xf]
        %v2916 = vld [vmem:[%s2914 + $0x4] sm:$0xf]
        %v2917 = vunpack.c.l.bf16 %v2915
        %v2918 = vunpack.c.l.bf16 %v2916
        %s2919 = scalar_lea.vmem %s1066, 32
        %v2920 = vld [vmem:[%s2919] sm:$0xf]
        %v2921 = vld [vmem:[%s2919 + $0x4] sm:$0xf]
        %v2922 = vunpack.c.l.bf16 %v2920
        %v2923 = vunpack.c.l.bf16 %v2921
        %v2924 = vadd.f32 %v2917, %v2922
        %v2925 = vadd.f32 %v2918, %v2923
        %s2926 = sld [smem:[#allocation2 + $0x7]]
        %v2927 = vstv %s2926
        %v2928 = vmul.f32 %v2924, %v2927
        %v2929 = vmul.f32 %v2925, %v2927
        %v2930 = vadd.f32 %v2912, %v2928
        %v2931 = vadd.f32 %v2913, %v2929
        %2932 = vxpose.xlu0.b32.start [1/16] %v2930, 128
        %2933 = vxpose.xlu0.b32.cont [2/16] %v2931, 128
        %2934 = vxpose.xlu0.b32.cont [3/16] 0.0, 128
        %2935 = vxpose.xlu0.b32.cont [4/16] 0.0, 128
        %2936 = vxpose.xlu0.b32.cont [5/16] 0.0, 128
        %2937 = vxpose.xlu0.b32.cont [6/16] 0.0, 128
        %2938 = vxpose.xlu0.b32.cont [7/16] 0.0, 128
        %2939 = vxpose.xlu0.b32.cont [8/16] 0.0, 128
        %2940 = vxpose.xlu0.b32.cont [9/16] 0.0, 128
        %2941 = vxpose.xlu0.b32.cont [10/16] 0.0, 128
        %2942 = vxpose.xlu0.b32.cont [11/16] 0.0, 128
        %2943 = vxpose.xlu0.b32.cont [12/16] 0.0, 128
        %2944 = vxpose.xlu0.b32.cont [13/16] 0.0, 128
        %2945 = vxpose.xlu0.b32.cont [14/16] 0.0, 128
        %2946 = vxpose.xlu0.b32.cont [15/16] 0.0, 128
        %2947 = vxpose.xlu0.b32.end [16/16] 0.0, 128
        %v2948 = vpop.trf.xlu0
        %v2949 = vpop.trf.xlu0
        %v2950 = vpop.trf.xlu0
        %v2951 = vpop.trf.xlu0
        %v2952 = vpop.trf.xlu0
        %v2953 = vpop.trf.xlu0
        %v2954 = vpop.trf.xlu0
        %v2955 = vpop.trf.xlu0
        %v2956 = vpop.trf.xlu0
        %v2957 = vpop.trf.xlu0
        %v2958 = vpop.trf.xlu0
        %v2959 = vpop.trf.xlu0
        %v2960 = vpop.trf.xlu0
        %v2961 = vpop.trf.xlu0
        %v2962 = vpop.trf.xlu0
        %v2963 = vpop.trf.xlu0
        %v2964 = vadd.f32 %v2930, %v2948
        %v2965 = vadd.f32 %v2931, %v2949
        %s2966 = sld [smem:[#allocation5 + $0x2]]
        %v2967 = vstv %s2966
        %v2968 = vadd.f32 %v2964, %v2967
        %v2969 = vadd.f32 %v2965, %v2967
        %v2970 = vsub.f32 0.0, %v2968
        %v2971 = vsub.f32 0.0, %v2969
        %v2972 = vmul.f32 %v2970, 1.442695
        %v2973 = vpow.pop %v2972
        %v2974 = vmul.f32 %v2971, 1.442695
        %v2975 = vpow.pop %v2974
        %v2976 = vadd.f32 %v2973, 1.0
        %v2977 = vadd.f32 %v2975, 1.0
        %v2978 = vrcp.pop %v2976
        %v2979 = vrcp.pop %v2977
        %2980 = vst.msk [vmem:[%s1010] sm:$0xff] %vm1268, %v2978
        %2981 = vst.msk [vmem:[%s1010 + $0x8] sm:$0xff] %vm1268, %v2979
        %v2982 = vld [vmem:[%s1071] sm:$0x3]
        %v2983 = vunpack.c.l.bf16 %v2982
        %v2984 = vld [vmem:[%s1076] sm:$0x3]
        %v2985 = vunpack.c.l.bf16 %v2984
        %v2986 = vadd.f32 %v2983, %v2985
        %s2987 = sld [smem:[#allocation2 + $0x8]]
        %v2988 = vstv %s2987
        %v2989 = vmul.f32 %v2986, %v2988
        %s2990 = scalar_lea.vmem %s1071, 2
        %v2991 = vld [vmem:[%s2990] sm:$0x3]
        %v2992 = vunpack.c.l.bf16 %v2991
        %s2993 = scalar_lea.vmem %s1076, 2
        %v2994 = vld [vmem:[%s2993] sm:$0x3]
        %v2995 = vunpack.c.l.bf16 %v2994
        %v2996 = vadd.f32 %v2992, %v2995
        %s2997 = sld [smem:[#allocation2 + $0x9]]
        %v2998 = vstv %s2997
        %v2999 = vmul.f32 %v2996, %v2998
        %v3000 = vadd.f32 %v2989, %v2999
        %s3001 = scalar_lea.vmem %s1071, 4
        %v3002 = vld [vmem:[%s3001] sm:$0x3]
        %v3003 = vunpack.c.l.bf16 %v3002
        %s3004 = scalar_lea.vmem %s1076, 4
        %v3005 = vld [vmem:[%s3004] sm:$0x3]
        %v3006 = vunpack.c.l.bf16 %v3005
        %v3007 = vadd.f32 %v3003, %v3006
        %s3008 = sld [smem:[#allocation2 + $0xa]]
        %v3009 = vstv %s3008
        %v3010 = vmul.f32 %v3007, %v3009
        %v3011 = vadd.f32 %v3000, %v3010
        %s3012 = scalar_lea.vmem %s1071, 6
        %v3013 = vld [vmem:[%s3012] sm:$0x3]
        %v3014 = vunpack.c.l.bf16 %v3013
        %s3015 = scalar_lea.vmem %s1076, 6
        %v3016 = vld [vmem:[%s3015] sm:$0x3]
        %v3017 = vunpack.c.l.bf16 %v3016
        %v3018 = vadd.f32 %v3014, %v3017
        %s3019 = sld [smem:[#allocation2 + $0xb]]
        %v3020 = vstv %s3019
        %v3021 = vmul.f32 %v3018, %v3020
        %v3022 = vadd.f32 %v3011, %v3021
        %s3023 = scalar_lea.vmem %s1071, 8
        %v3024 = vld [vmem:[%s3023] sm:$0x3]
        %v3025 = vunpack.c.l.bf16 %v3024
        %s3026 = scalar_lea.vmem %s1076, 8
        %v3027 = vld [vmem:[%s3026] sm:$0x3]
        %v3028 = vunpack.c.l.bf16 %v3027
        %v3029 = vadd.f32 %v3025, %v3028
        %s3030 = sld [smem:[#allocation2 + $0xc]]
        %v3031 = vstv %s3030
        %v3032 = vmul.f32 %v3029, %v3031
        %v3033 = vadd.f32 %v3022, %v3032
        %s3034 = scalar_lea.vmem %s1071, 10
        %v3035 = vld [vmem:[%s3034] sm:$0x3]
        %v3036 = vunpack.c.l.bf16 %v3035
        %s3037 = scalar_lea.vmem %s1076, 10
        %v3038 = vld [vmem:[%s3037] sm:$0x3]
        %v3039 = vunpack.c.l.bf16 %v3038
        %v3040 = vadd.f32 %v3036, %v3039
        %s3041 = sld [smem:[#allocation2 + $0xd]]
        %v3042 = vstv %s3041
        %v3043 = vmul.f32 %v3040, %v3042
        %v3044 = vadd.f32 %v3033, %v3043
        %s3045 = scalar_lea.vmem %s1071, 12
        %v3046 = vld [vmem:[%s3045] sm:$0x3]
        %v3047 = vunpack.c.l.bf16 %v3046
        %s3048 = scalar_lea.vmem %s1076, 12
        %v3049 = vld [vmem:[%s3048] sm:$0x3]
        %v3050 = vunpack.c.l.bf16 %v3049
        %v3051 = vadd.f32 %v3047, %v3050
        %s3052 = sld [smem:[#allocation2 + $0xe]]
        %v3053 = vstv %s3052
        %v3054 = vmul.f32 %v3051, %v3053
        %v3055 = vadd.f32 %v3044, %v3054
        %s3056 = scalar_lea.vmem %s1071, 14
        %v3057 = vld [vmem:[%s3056] sm:$0x3]
        %v3058 = vunpack.c.l.bf16 %v3057
        %s3059 = scalar_lea.vmem %s1076, 14
        %v3060 = vld [vmem:[%s3059] sm:$0x3]
        %v3061 = vunpack.c.l.bf16 %v3060
        %v3062 = vadd.f32 %v3058, %v3061
        %s3063 = sld [smem:[#allocation2 + $0xf]]
        %v3064 = vstv %s3063
        %v3065 = vmul.f32 %v3062, %v3064
        %v3066 = vadd.f32 %v3055, %v3065
        %3067 = vxpose.xlu0.b32.start [1/16] %v3066, 128
        %3068 = vxpose.xlu0.b32.cont [2/16] 0.0, 128
        %3069 = vxpose.xlu0.b32.cont [3/16] 0.0, 128
        %3070 = vxpose.xlu0.b32.cont [4/16] 0.0, 128
        %3071 = vxpose.xlu0.b32.cont [5/16] 0.0, 128
        %3072 = vxpose.xlu0.b32.cont [6/16] 0.0, 128
        %3073 = vxpose.xlu0.b32.cont [7/16] 0.0, 128
        %3074 = vxpose.xlu0.b32.cont [8/16] 0.0, 128
        %3075 = vxpose.xlu0.b32.cont [9/16] 0.0, 128
        %3076 = vxpose.xlu0.b32.cont [10/16] 0.0, 128
        %3077 = vxpose.xlu0.b32.cont [11/16] 0.0, 128
        %3078 = vxpose.xlu0.b32.cont [12/16] 0.0, 128
        %3079 = vxpose.xlu0.b32.cont [13/16] 0.0, 128
        %3080 = vxpose.xlu0.b32.cont [14/16] 0.0, 128
        %3081 = vxpose.xlu0.b32.cont [15/16] 0.0, 128
        %3082 = vxpose.xlu0.b32.end [16/16] 0.0, 128
        %v3083 = vpop.trf.xlu0
        %v3084 = vpop.trf.xlu0
        %v3085 = vpop.trf.xlu0
        %v3086 = vpop.trf.xlu0
        %v3087 = vpop.trf.xlu0
        %v3088 = vpop.trf.xlu0
        %v3089 = vpop.trf.xlu0
        %v3090 = vpop.trf.xlu0
        %v3091 = vpop.trf.xlu0
        %v3092 = vpop.trf.xlu0
        %v3093 = vpop.trf.xlu0
        %v3094 = vpop.trf.xlu0
        %v3095 = vpop.trf.xlu0
        %v3096 = vpop.trf.xlu0
        %v3097 = vpop.trf.xlu0
        %v3098 = vpop.trf.xlu0
        %v3099 = vadd.f32 %v3066, %v3083
        %s3100 = sld [smem:[#allocation5 + $0x3]]
        %v3101 = vstv %s3100
        %v3102 = vadd.f32 %v3099, %v3101
        %v3103 = vsub.f32 0.0, %v3102
        %v3104 = vmul.f32 %v3103, 1.442695
        %v3105 = vpow.pop %v3104
        %v3106 = vadd.f32 %v3105, 1.0
        %v3107 = vrcp.pop %v3106
        %vm3108 = vcmask 27648
        %3109 = vst.msk [vmem:[%s1017] sm:$0xf] %vm3108, %v3107
        %s3110 = sand.u32 %s561, 1
        %s3111 = scalar_lea.sflag [#allocation3], %s3110
        %s3112 = sand.u32 %s561, 1
        %s3113 = scalar_lea.vmem [#allocation7], %s3112
        %s3114 = sand.u32 %s52, 1
        %s3115 = scalar_lea.sflag [#allocation9], %s3114
        %s3116 = sand.u32 %s587, 1
        %s3117 = scalar_lea.vmem [#allocation8], %s3116
        %s3118 = sand.u32 %s52, 1
        %s3119 = scalar_lea.sflag [#allocation9], %s3118
        %s3120 = sand.u32 %s613, 1
        %s3121 = smul.addr %s3120, 512
        %s3122 = scalar_lea.vmem [#allocation10], %s3121
        %s3123 = sand.u32 %s52, 1
        %s3124 = scalar_lea.sflag [#allocation12], %s3123
        %s3125 = sand.u32 %s639, 1
        %s3126 = smul.addr %s3125, 64
        %s3127 = scalar_lea.vmem [#allocation11], %s3126
        %s3128 = sand.u32 %s52, 1
        %s3129 = scalar_lea.sflag [#allocation12], %s3128
        %s3130 = sand.u32 %s665, 1
        %s3131 = smul.addr %s3130, 16
        %s3132 = scalar_lea.vmem [#allocation13], %s3131
        %s3133 = sand.u32 %s691, 1
        %s3134 = scalar_lea.sflag [#allocation15], %s3133
        %s3135 = sand.u32 %s691, 1
        %s3136 = smul.addr %s3135, 4
        %s3137 = scalar_lea.vmem [#allocation14], %s3136
        // Predicated region
        $region113: #{tscd_forward.1} parent=103 // pred_check
          %p3138 = pneg %p571
        $region114: #{tscd_forward.1} parent=103 // pred_check_branch
          %3140 = sbr.rel (%p3138) target = $region116
        $region115: #{tscd_forward.1} parent=103 // pred_region
          %s3142 = ssub.s32 16, 16
          %3143 = vsyncadd %s3111, %s3142
          %s3144 = smul.addr %s52, 16
          %s3145 = scalar_lea.hbm %s21, %s3144
          %s3147 = sshll.u32 %s3113, 4
          %s3148 = int_to_ptr.vmem [resolvable:$true] %s3147
          %3150 = dma.vmem_to_hbm [thread:$0]  %s3148, 16, %s3145, %s3111
        $region116: #{tscd_forward.1} parent=103 // pred_fallthru
          _
        // Predicated region
        $region117: #{tscd_forward.1} parent=103 // pred_check
          %p3151 = pneg %p597
        $region118: #{tscd_forward.1} parent=103 // pred_check_branch
          %3153 = sbr.rel (%p3151) target = $region120
        $region119: #{tscd_forward.1} parent=103 // pred_region
          %s3155 = ssub.s32 16, 16
          %3156 = vsyncadd %s3115, %s3155
          %s3157 = smul.addr %s52, 16
          %s3158 = scalar_lea.hbm %s22, %s3157
          %s3160 = sshll.u32 %s3117, 4
          %s3161 = int_to_ptr.vmem [resolvable:$true] %s3160
          %3163 = dma.vmem_to_hbm [thread:$0]  %s3161, 16, %s3158, %s3115
        $region120: #{tscd_forward.1} parent=103 // pred_fallthru
          _
        // Predicated region
        $region121: #{tscd_forward.1} parent=103 // pred_check
          %p3164 = pneg %p623
        $region122: #{tscd_forward.1} parent=103 // pred_check_branch
          %3166 = sbr.rel (%p3164) target = $region124
        $region123: #{tscd_forward.1} parent=103 // pred_region
          %s3168 = ssub.s32 8192, 8192
          %3169 = vsyncadd %s3119, %s3168
          %s3170 = smul.addr %s52, 64
          %s3171 = smul.addr %s3170, 128
          %s3172 = scalar_lea.hbm %s23, %s3171
          %s3173 = sshll.u32 %s3122, 4
          %s3174 = int_to_ptr.vmem [resolvable:$true] %s3173
          %3179 = dma.vmem_to_hbm [thread:$0]  %s3174, 8192, %s3172, %s3119, 256, 256, 16
        $region124: #{tscd_forward.1} parent=103 // pred_fallthru
          _
        // Predicated region
        $region125: #{tscd_forward.1} parent=103 // pred_check
          %p3180 = pneg %p649
        $region126: #{tscd_forward.1} parent=103 // pred_check_branch
          %3182 = sbr.rel (%p3180) target = $region128
        $region127: #{tscd_forward.1} parent=103 // pred_region
          %s3184 = ssub.s32 1024, 1024
          %3185 = vsyncadd %s3124, %s3184
          %s3186 = smul.addr %s52, 8
          %s3187 = smul.addr %s3186, 128
          %s3188 = scalar_lea.hbm %s24, %s3187
          %s3189 = sshll.u32 %s3127, 4
          %s3190 = int_to_ptr.vmem [resolvable:$true] %s3189
          %3195 = dma.vmem_to_hbm [thread:$0]  %s3190, 1024, %s3188, %s3124, 128, 128, 8
        $region128: #{tscd_forward.1} parent=103 // pred_fallthru
          _
        // Predicated region
        $region129: #{tscd_forward.1} parent=103 // pred_check
          %p3196 = pneg %p675
        $region130: #{tscd_forward.1} parent=103 // pred_check_branch
          %3198 = sbr.rel (%p3196) target = $region132
        $region131: #{tscd_forward.1} parent=103 // pred_region
          %s3200 = ssub.s32 256, 256
          %3201 = vsyncadd %s3129, %s3200
          %s3202 = smul.addr %s52, 2
          %s3203 = smul.addr %s3202, 128
          %s3204 = scalar_lea.hbm %s25, %s3203
          %s3205 = sshll.u32 %s3132, 4
          %s3206 = int_to_ptr.vmem [resolvable:$true] %s3205
          %3211 = dma.vmem_to_hbm [thread:$0]  %s3206, 256, %s3204, %s3129, 128, 128, 8
        $region132: #{tscd_forward.1} parent=103 // pred_fallthru
          _
        // Predicated region
        $region133: #{tscd_forward.1} parent=103 // pred_check
          %p3212 = pneg %p701
        $region134: #{tscd_forward.1} parent=103 // pred_check_branch
          %3214 = sbr.rel (%p3212) target = $region136
        $region135: #{tscd_forward.1} parent=103 // pred_region
          %s3216 = ssub.s32 64, 64
          %3217 = vsyncadd %s3134, %s3216
          %s3218 = smul.addr %s52, 64
          %s3219 = scalar_lea.hbm %s26, %s3218
          %s3221 = sshll.u32 %s3137, 4
          %s3222 = int_to_ptr.vmem [resolvable:$true] %s3221
          %3224 = dma.vmem_to_hbm [thread:$0]  %s3222, 64, %s3219, %s3134
        $region136: #{tscd_forward.1} parent=103 // pred_fallthru
          _
      $region104: #{tscd_forward.1} parent=5 // pred_fallthru
        _
      %p3225 = scmp.le.s32.totalorder 2, %s47
      // Predicated region
      $region137: #{tscd_forward.1} parent=5 // pred_check
        %p3226 = pneg %p3225
      $region138: #{tscd_forward.1} parent=5 // pred_check_branch
        %3228 = sbr.rel (%p3226) target = $region140
      $region139: #{tscd_forward.1} parent=5 // pred_region
        %s3229 = ssub.s32 %s47, 2
        // Predicated region
        $region141: #{tscd_forward.1} parent=139 // pred_check
          %p3230 = pneg %p577
        $region142: #{tscd_forward.1} parent=139 // pred_check_branch
          %3232 = sbr.rel (%p3230) target = $region144
        $region143: #{tscd_forward.1} parent=139 // pred_region
          %s3233 = sand.u32 %s562, 1
          %s3234 = scalar_lea.sflag [#allocation3], %s3233
          %s3235 = sand.u32 %s562, 1
          %s3236 = scalar_lea.vmem [#allocation7], %s3235
          %3237 = dma.done %s3234, 16
        $region144: #{tscd_forward.1} parent=139 // pred_fallthru
          _
        // Predicated region
        $region145: #{tscd_forward.1} parent=139 // pred_check
          %p3238 = pneg %p603
        $region146: #{tscd_forward.1} parent=139 // pred_check_branch
          %3240 = sbr.rel (%p3238) target = $region148
        $region147: #{tscd_forward.1} parent=139 // pred_region
          %s3241 = sand.u32 %s53, 1
          %s3242 = scalar_lea.sflag [#allocation9], %s3241
          %s3243 = sand.u32 %s588, 1
          %s3244 = scalar_lea.vmem [#allocation8], %s3243
          %3245 = dma.done %s3242, 16
        $region148: #{tscd_forward.1} parent=139 // pred_fallthru
          _
        // Predicated region
        $region149: #{tscd_forward.1} parent=139 // pred_check
          %p3246 = pneg %p629
        $region150: #{tscd_forward.1} parent=139 // pred_check_branch
          %3248 = sbr.rel (%p3246) target = $region152
        $region151: #{tscd_forward.1} parent=139 // pred_region
          %s3249 = sand.u32 %s53, 1
          %s3250 = scalar_lea.sflag [#allocation9], %s3249
          %s3251 = sand.u32 %s614, 1
          %s3252 = smul.addr %s3251, 512
          %s3253 = scalar_lea.vmem [#allocation10], %s3252
          %3254 = dma.done %s3250, 8192
        $region152: #{tscd_forward.1} parent=139 // pred_fallthru
          _
        // Predicated region
        $region153: #{tscd_forward.1} parent=139 // pred_check
          %p3255 = pneg %p655
        $region154: #{tscd_forward.1} parent=139 // pred_check_branch
          %3257 = sbr.rel (%p3255) target = $region156
        $region155: #{tscd_forward.1} parent=139 // pred_region
          %s3258 = sand.u32 %s53, 1
          %s3259 = scalar_lea.sflag [#allocation12], %s3258
          %s3260 = sand.u32 %s640, 1
          %s3261 = smul.addr %s3260, 64
          %s3262 = scalar_lea.vmem [#allocation11], %s3261
          %3263 = dma.done %s3259, 1024
        $region156: #{tscd_forward.1} parent=139 // pred_fallthru
          _
        // Predicated region
        $region157: #{tscd_forward.1} parent=139 // pred_check
          %p3264 = pneg %p681
        $region158: #{tscd_forward.1} parent=139 // pred_check_branch
          %3266 = sbr.rel (%p3264) target = $region160
        $region159: #{tscd_forward.1} parent=139 // pred_region
          %s3267 = sand.u32 %s53, 1
          %s3268 = scalar_lea.sflag [#allocation12], %s3267
          %s3269 = sand.u32 %s666, 1
          %s3270 = smul.addr %s3269, 16
          %s3271 = scalar_lea.vmem [#allocation13], %s3270
          %3272 = dma.done %s3268, 256
        $region160: #{tscd_forward.1} parent=139 // pred_fallthru
          _
        // Predicated region
        $region161: #{tscd_forward.1} parent=139 // pred_check
          %p3273 = pneg %p707
        $region162: #{tscd_forward.1} parent=139 // pred_check_branch
          %3275 = sbr.rel (%p3273) target = $region164
        $region163: #{tscd_forward.1} parent=139 // pred_region
          %s3276 = sand.u32 %s692, 1
          %s3277 = scalar_lea.sflag [#allocation15], %s3276
          %s3278 = sand.u32 %s692, 1
          %s3279 = smul.addr %s3278, 4
          %s3280 = scalar_lea.vmem [#allocation14], %s3279
          %3281 = dma.done %s3277, 64
        $region164: #{tscd_forward.1} parent=139 // pred_fallthru
          _
      $region140: #{tscd_forward.1} parent=5 // pred_fallthru
        _
    $region6: #{tscd_forward.1} parent=1 // loop_footer
      %s51 = sadd.s32 1, %s47
    $region7: #{tscd_forward.1} parent=1 // loop_footer_branch
      %46 = sbr.rel target = $region3
    $region8: #{tscd_forward.1} parent=1 // loop_exit
      _
    %3282 = vsyncpa [#allocation3], 1
    %s3283 = scalar_lea.sflag [#allocation3], 1
    %3284 = vsyncpa %s3283, 1
    %3285 = vsyncpa [#allocation9], 1
    %s3286 = scalar_lea.sflag [#allocation9], 1
    %3287 = vsyncpa %s3286, 1
    %3288 = vsyncpa [#allocation12], 1
    %s3289 = scalar_lea.sflag [#allocation12], 1
    %3290 = vsyncpa %s3289, 1
    %3291 = vsyncpa [#allocation15], 1
    %s3292 = scalar_lea.sflag [#allocation15], 1
    %3293 = vsyncpa %s3292, 1
    %3294 = vsyncpa [#allocation4], 1
    %s3295 = scalar_lea.sflag [#allocation4], 1
    %3296 = vsyncpa %s3295, 1
    %3297 = vsyncpa [#allocation6], 1

</llo_original>
